<compile_context>
chip_gen: v6e
topology: v6e:2x2x1
jax: 0.10.0
libtpu: 0.0.40
codegen_flags: <defaults>
</compile_context>

<pallas_src>
import numpy as np
import jax
import jax.numpy as jnp
from jax.experimental import pallas as pl
from jax.experimental.pallas import tpu as pltpu

# ---------------- configuration (small synthetic shapes) -------------------
N, H, W, C = 2, 16, 16, 3           # batch, height, width, channels
HID = 32                            # hidden channels of the detection head
KH = KW = 3                         # 3x3 conv
KK = KH * KW                        # 9 taps
CP = 8                              # per-tap contraction, channel-padded 3 -> 8
HP, WP = H + 2, W + 2               # SAME-padded spatial dims (pad = 1)
MP = N * HP * WP                    # flattened padded pixels = 648
MT = ((MP + 127) // 128) * 128      # lane-dense output width = 768
LIN = MT + 128                      # input lane width = 896 (>= MT + 2*WP + 2)
assert LIN >= MT + 2 * WP + 2

MEAN = (0.798, 0.785, 0.772)        # doctr db_resnet defaults
STD = (0.264, 0.2749, 0.287)
BIN_THRESH = 0.3                    # doctr DBPostProcessor bin_thresh


# ---------------------------- Pallas kernel ---------------------------------
def _det_head_kernel(x_ref, w1_ref, b1_ref, w2_ref, b2_ref, prob_ref, bin_ref):
    # x:  (CP, LIN)     channel-major image slab, flattened padded pixels on
    #                   lanes; border/filler pixels hold 255*mean (-> 0 after
    #                   the folded affine), padded channels hold 0.
    # w1: (KK, HID, CP) normalization-folded conv weights, one (HID, CP) per tap
    # b1: (HID, 1)      normalization-folded bias
    # w2: (HID, 1)      second-layer weights
    # b2: (1, 1)        second-layer bias (SMEM scalar)
    # prob, bin: (1, MT) lane-dense outputs; output lane q == conv centered at
    #                    padded pixel q + WP + 1.
    x = x_ref[...]                                        # (CP, LIN), one load
    acc = jnp.zeros((HID, MT), jnp.float32)
    for k in range(KK):                                   # static unroll: 9 taps
        s = (k // KW) * WP + (k % KW)                     # static lane shift
        shifted = x if s == 0 else pltpu.roll(x, (LIN - s) % LIN, axis=1)
        # TODO(synk): at real sizes cast `shifted`/w1 to bfloat16 for the
        # v6e/v7x MXU (keep f32 accumulation); negligible at this toy size.
        acc = acc + jnp.dot(w1_ref[k], shifted[:, :MT],
                            preferred_element_type=jnp.float32)
    h = jnp.maximum(acc + b1_ref[...], 0.0)               # (HID, MT), ReLU
    # HID -> 1 projection: VPU multiply + sublane reduce (no 1-wide MXU matmul).
    logits = jnp.sum(h * w2_ref[...], axis=0, keepdims=True) + b2_ref[0, 0]
    prob = jax.nn.sigmoid(logits)                         # (1, MT)
    prob_ref[...] = prob
    bin_ref[...] = (prob >= BIN_THRESH).astype(jnp.float32)


def _det_head_pallas(x_t, w1_t, b1_col, w2_col, b2):
    return pl.pallas_call(
        _det_head_kernel,
        out_shape=(jax.ShapeDtypeStruct((1, MT), jnp.float32),
                   jax.ShapeDtypeStruct((1, MT), jnp.float32)),
        grid=(1,),    # whole problem (< 0.3 MiB incl. accumulators) fits VMEM
        in_specs=[
            pl.BlockSpec((CP, LIN), lambda i: (0, 0)),
            pl.BlockSpec((KK, HID, CP), lambda i: (0, 0, 0)),
            pl.BlockSpec((HID, 1), lambda i: (0, 0)),
            pl.BlockSpec((HID, 1), lambda i: (0, 0)),
            pl.BlockSpec(memory_space=pltpu.MemorySpace.SMEM),   # b2 scalar
        ],
        out_specs=(pl.BlockSpec((1, MT), lambda i: (0, 0)),
                   pl.BlockSpec((1, MT), lambda i: (0, 0))),
        # NOTE: at real doctr resolutions, tile the lane axis (grid over MT
        # chunks marked "parallel") so v7x's 2 TensorCores split the work and
        # the working set stays under scoped VMEM (v7x: 64 MiB physical).
        compiler_params=pltpu.CompilerParams(
            dimension_semantics=("arbitrary",)),
    )(x_t, w1_t, b1_col, w2_col, b2)


# ---------------------- parameters & normalization fold ---------------------
def init_params():
    # Deterministic synthetic init (no checkpoint load).
    k1, k2, k3, k4 = jax.random.split(jax.random.PRNGKey(0), 4)
    w1 = jax.random.normal(k1, (KK, C, HID), jnp.float32) * (1.0 / np.sqrt(KK * C))
    b1 = jax.random.normal(k2, (HID,), jnp.float32) * 0.01
    w2 = jax.random.normal(k3, (HID,), jnp.float32) * (1.0 / np.sqrt(HID))
    b2 = jax.random.normal(k4, (), jnp.float32) * 0.01
    return w1, b1, w2, b2


def fold_params(params):
    """Fold x/255 and per-channel (mean, std) normalization into conv1."""
    w1, b1, w2, b2 = params
    mean = jnp.asarray(MEAN, jnp.float32)
    std = jnp.asarray(STD, jnp.float32)
    scale = 1.0 / (255.0 * std)                    # x_norm = scale * x + shift
    shift = -mean / std
    w1_t = jnp.transpose(w1, (0, 2, 1)) * scale[None, None, :]       # (KK,HID,C)
    w1_t = jnp.concatenate(
        [w1_t, jnp.zeros((KK, HID, CP - C), jnp.float32)], axis=-1)  # channel pad
    b1_eff = b1 + jnp.einsum("kch,c->h", w1, shift)
    return w1_t, b1_eff.reshape(HID, 1), w2.reshape(HID, 1), b2.reshape(1, 1)


# --------------------------- model (JAX glue + kernel) -----------------------
def _build_image_slab(batch_raw):
    """(N,H,W,C) raw [0,255] -> (CP, LIN) channel-major, pixel-on-lanes slab.

    Border/filler pixels are set to 255*mean so the folded normalization maps
    them to exactly 0 (== zero-padding the normalized image, as in doctr).
    """
    pad_val = 255.0 * jnp.asarray(MEAN, jnp.float32)                 # (C,)
    canvas = jnp.zeros((N, HP, WP, C), jnp.float32) + pad_val
    canvas = canvas.at[:, 1:H + 1, 1:W + 1, :].set(batch_raw)
    rows = canvas.reshape(MP, C)                                     # (648, 3)
    x_t = jnp.zeros((CP, LIN), jnp.float32) + jnp.pad(pad_val, (0, CP - C))[:, None]
    x_t = x_t.at[:C, :MP].set(rows.T)
    return x_t


@jax.jit
def _detection_model_jit(batch_raw, w1_t, b1_col, w2_col, b2):
    x_t = _build_image_slab(batch_raw)
    prob_flat, bin_flat = _det_head_pallas(x_t, w1_t, b1_col, w2_col, b2)
    # output lane q <-> padded pixel q + WP + 1, so output (n, y, x) lives at
    # lane n*HP*WP + y*WP + x ; crop the padded frame / alignment filler.
    prob = prob_flat.reshape(MT)[:MP].reshape(N, HP, WP)[:, :H, :W]
    binm = bin_flat.reshape(MT)[:MP].reshape(N, HP, WP)[:, :H, :W]
    return prob, binm


def detection_model(batch_raw_nhwc, folded_params):
    """Synthetic DB-style head; returns (NCHW prob map, NHWC binary map)."""
    prob, binm = _detection_model_jit(batch_raw_nhwc, *folded_params)
    # Single channel: NHW -> NCHW / NHWC are pure reshapes (no transpose DMA).
    return prob[:, None, :, :], binm[..., None]


# ------------------------- predictor (module semantics) ----------------------
def pre_processor(pages):
    # Stack pages into one batch.  The /255 scaling and (mean, std) normalization
    # are folded into the model's first conv (fold_params), so no separate
    # normalization pass / pallas_call / HBM round-trip is needed here.
    batch = jnp.stack([jnp.asarray(p, jnp.float32) for p in pages], axis=0)
    return [batch]


def postprocessor(bin_map_nhwc):
    # TODO(synk): doctr's DBPostProcessor does contour extraction / polygon
    # fitting (OpenCV) with no Pallas equivalent; the in-kernel thresholded
    # binary map is returned as the per-page payload instead.
    return [(bin_map_nhwc[i],) for i in range(bin_map_nhwc.shape[0])]


def detection_predictor_forward(pages, folded_params, return_model_output=False):
    # Mirrors DetectionPredictor.forward semantics.
    if any(np.asarray(p).ndim != 3 for p in pages):
        raise ValueError("incorrect input shape: all pages are expected to be "
                         "multi-channel 2D images.")
    processed_batches = pre_processor(pages)
    predicted = []
    for batch in processed_batches:
        pred_map, bin_map = detection_model(batch, folded_params)  # NCHW, NHWC
        if return_model_output:
            return np.asarray(jax.block_until_ready(pred_map)).astype(np.float32)
        bin_map = np.asarray(jax.block_until_ready(bin_map))
        predicted += [pred[0] for pred in postprocessor(bin_map)]
    return predicted


# ------------------------------ reference ------------------------------------
def _reference_forward(pages, params):
    """Plain-JAX reference: normalize -> 3x3 conv -> ReLU -> 1x1 conv -> sigmoid."""
    w1, b1, w2, b2 = params
    mean = jnp.asarray(MEAN, jnp.float32)
    std = jnp.asarray(STD, jnp.float32)
    batch = jnp.stack([jnp.asarray(p, jnp.float32) for p in pages]) / 255.0
    xn = (batch - mean) / std
    xp = jnp.pad(xn, ((0, 0), (1, 1), (1, 1), (0, 0)))
    cols = [xp[:, dy:dy + H, dx:dx + W, :] for dy in range(KH) for dx in range(KW)]
    patches = jnp.concatenate(cols, axis=-1).reshape(N * H * W, KK * C)
    hi = jnp.maximum(
        jnp.dot(patches, w1.reshape(KK * C, HID),
                precision=jax.lax.Precision.HIGHEST) + b1, 0.0)
    logits = jnp.dot(hi, w2.reshape(HID, 1),
                     precision=jax.lax.Precision.HIGHEST) + b2
    return jax.nn.sigmoid(logits).reshape(N, H, W)


# -------------------------------- main ---------------------------------------
if __name__ == "__main__":
    key = jax.random.PRNGKey(0)
    # Pages as HWC "images" in [0, 255]
    pages = [
        jax.random.uniform(k, (H, W, C), jnp.float32, 0.0, 255.0)
        for k in jax.random.split(key, N)
    ]
    params = init_params()
    folded = fold_params(params)

    # Model-output path (raw NCHW prob map, like the PyTorch detection model).
    pred_map = detection_predictor_forward(pages, folded, return_model_output=True)
    assert pred_map.shape == (N, 1, H, W) and pred_map.dtype == np.float32
    assert np.all(pred_map >= 0.0) and np.all(pred_map <= 1.0)

    # Full predictor path (per-page postprocessed binary maps).
    preds = detection_predictor_forward(pages, folded, return_model_output=False)
    assert len(preds) == N and preds[0].shape == (H, W, 1)
    assert set(np.unique(np.stack(preds)).tolist()).issubset({0.0, 1.0})

    # Reference check against plain JAX (un-folded weights, explicit normalize).
    ref = np.asarray(_reference_forward(pages, params))            # (N, H, W)
    np.testing.assert_allclose(pred_map[:, 0], ref, rtol=1e-3, atol=1e-4)

    # Binary map agrees with thresholding the reference, except within fp
    # tolerance of the threshold itself.
    got_bin = np.stack(preds)[..., 0]
    ref_bin = (ref >= BIN_THRESH).astype(np.float32)
    assert np.all((got_bin == ref_bin) | (np.abs(ref - BIN_THRESH) < 1e-3))

    print("KERNEL_OK")
</pallas_src>

<mosaic_0001>
module attributes {stable_mosaic.version = 11 : i64} {
  func.func @_det_head_kernel(%arg0: i32, %arg1: memref<8x896xf32, #tpu.memory_space<vmem>>, %arg2: memref<9x32x8xf32, #tpu.memory_space<vmem>>, %arg3: memref<32x1xf32, #tpu.memory_space<vmem>>, %arg4: memref<32x1xf32, #tpu.memory_space<vmem>>, %arg5: memref<1x1xf32, #tpu.memory_space<smem>>, %arg6: memref<1x768xf32, #tpu.memory_space<vmem>>, %arg7: memref<1x768xf32, #tpu.memory_space<vmem>>) attributes {dimension_semantics = [#tpu.dimension_semantics<arbitrary>], iteration_bounds = array<i64: 1>, scalar_prefetch = 0 : i64, scratch_operands = 0 : i64, tpu.core_type = #tpu.core_type<tc>, window_params = [{pipeline_mode = #tpu.pipeline_mode<synchronous>, transform_indices = @transform_0, window_bounds = array<i64: 8, 896>}, {pipeline_mode = #tpu.pipeline_mode<synchronous>, transform_indices = @transform_1, window_bounds = array<i64: 9, 32, 8>}, {pipeline_mode = #tpu.pipeline_mode<synchronous>, transform_indices = @transform_2, window_bounds = array<i64: 32, 1>}, {pipeline_mode = #tpu.pipeline_mode<synchronous>, transform_indices = @transform_3, window_bounds = array<i64: 32, 1>}, {transform_indices = @transform_4, window_bounds = array<i64: 1, 1>}, {pipeline_mode = #tpu.pipeline_mode<synchronous>, transform_indices = @transform_5, window_bounds = array<i64: 1, 768>}, {pipeline_mode = #tpu.pipeline_mode<synchronous>, transform_indices = @transform_6, window_bounds = array<i64: 1, 768>}]} {
    %c0 = arith.constant 0 : index
    %c0_0 = arith.constant 0 : index
    %0 = vector.load %arg1[%c0, %c0_0] : memref<8x896xf32, #tpu.memory_space<vmem>>, vector<8x896xf32>
    %cst = arith.constant 0.000000e+00 : f32
    %1 = vector.broadcast %cst : f32 to vector<32x768xf32>
    %c0_1 = arith.constant 0 : index
    %c0_2 = arith.constant 0 : index
    %c0_3 = arith.constant 0 : index
    %2 = vector.load %arg2[%c0_1, %c0_2, %c0_3] : memref<9x32x8xf32, #tpu.memory_space<vmem>>, vector<1x32x8xf32>
    %3 = vector.shape_cast %2 : vector<1x32x8xf32> to vector<32x8xf32>
    %4 = vector.extract_strided_slice %0 {offsets = [0, 0], sizes = [8, 768], strides = [1, 1]} : vector<8x896xf32> to vector<8x768xf32>
    %cst_4 = arith.constant dense<0.000000e+00> : vector<32x768xf32>
    %5 = tpu.matmul %3, %4, %cst_4 {dimension_numbers = #tpu.dot_dimension_numbers<[1], [0], [0], [1], [0, 0, 1, 1], [], []>} : vector<32x8xf32>, vector<8x768xf32>, vector<32x768xf32> -> vector<32x768xf32>
    %6 = arith.addf %1, %5 : vector<32x768xf32>
    %c895_i32 = arith.constant 895 : i32
    %7 = tpu.dynamic_rotate %0 by %c895_i32 dim 1 : vector<8x896xf32>, i32 -> vector<8x896xf32>
    %c1 = arith.constant 1 : index
    %c0_5 = arith.constant 0 : index
    %c0_6 = arith.constant 0 : index
    %8 = vector.load %arg2[%c1, %c0_5, %c0_6] : memref<9x32x8xf32, #tpu.memory_space<vmem>>, vector<1x32x8xf32>
    %9 = vector.shape_cast %8 : vector<1x32x8xf32> to vector<32x8xf32>
    %10 = vector.extract_strided_slice %7 {offsets = [0, 0], sizes = [8, 768], strides = [1, 1]} : vector<8x896xf32> to vector<8x768xf32>
    %cst_7 = arith.constant dense<0.000000e+00> : vector<32x768xf32>
    %11 = tpu.matmul %9, %10, %cst_7 {dimension_numbers = #tpu.dot_dimension_numbers<[1], [0], [0], [1], [0, 0, 1, 1], [], []>} : vector<32x8xf32>, vector<8x768xf32>, vector<32x768xf32> -> vector<32x768xf32>
    %12 = arith.addf %6, %11 : vector<32x768xf32>
    %c894_i32 = arith.constant 894 : i32
    %13 = tpu.dynamic_rotate %0 by %c894_i32 dim 1 : vector<8x896xf32>, i32 -> vector<8x896xf32>
    %c2 = arith.constant 2 : index
    %c0_8 = arith.constant 0 : index
    %c0_9 = arith.constant 0 : index
    %14 = vector.load %arg2[%c2, %c0_8, %c0_9] : memref<9x32x8xf32, #tpu.memory_space<vmem>>, vector<1x32x8xf32>
    %15 = vector.shape_cast %14 : vector<1x32x8xf32> to vector<32x8xf32>
    %16 = vector.extract_strided_slice %13 {offsets = [0, 0], sizes = [8, 768], strides = [1, 1]} : vector<8x896xf32> to vector<8x768xf32>
    %cst_10 = arith.constant dense<0.000000e+00> : vector<32x768xf32>
    %17 = tpu.matmul %15, %16, %cst_10 {dimension_numbers = #tpu.dot_dimension_numbers<[1], [0], [0], [1], [0, 0, 1, 1], [], []>} : vector<32x8xf32>, vector<8x768xf32>, vector<32x768xf32> -> vector<32x768xf32>
    %18 = arith.addf %12, %17 : vector<32x768xf32>
    %c878_i32 = arith.constant 878 : i32
    %19 = tpu.dynamic_rotate %0 by %c878_i32 dim 1 : vector<8x896xf32>, i32 -> vector<8x896xf32>
    %c3 = arith.constant 3 : index
    %c0_11 = arith.constant 0 : index
    %c0_12 = arith.constant 0 : index
    %20 = vector.load %arg2[%c3, %c0_11, %c0_12] : memref<9x32x8xf32, #tpu.memory_space<vmem>>, vector<1x32x8xf32>
    %21 = vector.shape_cast %20 : vector<1x32x8xf32> to vector<32x8xf32>
    %22 = vector.extract_strided_slice %19 {offsets = [0, 0], sizes = [8, 768], strides = [1, 1]} : vector<8x896xf32> to vector<8x768xf32>
    %cst_13 = arith.constant dense<0.000000e+00> : vector<32x768xf32>
    %23 = tpu.matmul %21, %22, %cst_13 {dimension_numbers = #tpu.dot_dimension_numbers<[1], [0], [0], [1], [0, 0, 1, 1], [], []>} : vector<32x8xf32>, vector<8x768xf32>, vector<32x768xf32> -> vector<32x768xf32>
    %24 = arith.addf %18, %23 : vector<32x768xf32>
    %c877_i32 = arith.constant 877 : i32
    %25 = tpu.dynamic_rotate %0 by %c877_i32 dim 1 : vector<8x896xf32>, i32 -> vector<8x896xf32>
    %c4 = arith.constant 4 : index
    %c0_14 = arith.constant 0 : index
    %c0_15 = arith.constant 0 : index
    %26 = vector.load %arg2[%c4, %c0_14, %c0_15] : memref<9x32x8xf32, #tpu.memory_space<vmem>>, vector<1x32x8xf32>
    %27 = vector.shape_cast %26 : vector<1x32x8xf32> to vector<32x8xf32>
    %28 = vector.extract_strided_slice %25 {offsets = [0, 0], sizes = [8, 768], strides = [1, 1]} : vector<8x896xf32> to vector<8x768xf32>
    %cst_16 = arith.constant dense<0.000000e+00> : vector<32x768xf32>
    %29 = tpu.matmul %27, %28, %cst_16 {dimension_numbers = #tpu.dot_dimension_numbers<[1], [0], [0], [1], [0, 0, 1, 1], [], []>} : vector<32x8xf32>, vector<8x768xf32>, vector<32x768xf32> -> vector<32x768xf32>
    %30 = arith.addf %24, %29 : vector<32x768xf32>
    %c876_i32 = arith.constant 876 : i32
    %31 = tpu.dynamic_rotate %0 by %c876_i32 dim 1 : vector<8x896xf32>, i32 -> vector<8x896xf32>
    %c5 = arith.constant 5 : index
    %c0_17 = arith.constant 0 : index
    %c0_18 = arith.constant 0 : index
    %32 = vector.load %arg2[%c5, %c0_17, %c0_18] : memref<9x32x8xf32, #tpu.memory_space<vmem>>, vector<1x32x8xf32>
    %33 = vector.shape_cast %32 : vector<1x32x8xf32> to vector<32x8xf32>
    %34 = vector.extract_strided_slice %31 {offsets = [0, 0], sizes = [8, 768], strides = [1, 1]} : vector<8x896xf32> to vector<8x768xf32>
    %cst_19 = arith.constant dense<0.000000e+00> : vector<32x768xf32>
    %35 = tpu.matmul %33, %34, %cst_19 {dimension_numbers = #tpu.dot_dimension_numbers<[1], [0], [0], [1], [0, 0, 1, 1], [], []>} : vector<32x8xf32>, vector<8x768xf32>, vector<32x768xf32> -> vector<32x768xf32>
    %36 = arith.addf %30, %35 : vector<32x768xf32>
    %c860_i32 = arith.constant 860 : i32
    %37 = tpu.dynamic_rotate %0 by %c860_i32 dim 1 : vector<8x896xf32>, i32 -> vector<8x896xf32>
    %c6 = arith.constant 6 : index
    %c0_20 = arith.constant 0 : index
    %c0_21 = arith.constant 0 : index
    %38 = vector.load %arg2[%c6, %c0_20, %c0_21] : memref<9x32x8xf32, #tpu.memory_space<vmem>>, vector<1x32x8xf32>
    %39 = vector.shape_cast %38 : vector<1x32x8xf32> to vector<32x8xf32>
    %40 = vector.extract_strided_slice %37 {offsets = [0, 0], sizes = [8, 768], strides = [1, 1]} : vector<8x896xf32> to vector<8x768xf32>
    %cst_22 = arith.constant dense<0.000000e+00> : vector<32x768xf32>
    %41 = tpu.matmul %39, %40, %cst_22 {dimension_numbers = #tpu.dot_dimension_numbers<[1], [0], [0], [1], [0, 0, 1, 1], [], []>} : vector<32x8xf32>, vector<8x768xf32>, vector<32x768xf32> -> vector<32x768xf32>
    %42 = arith.addf %36, %41 : vector<32x768xf32>
    %c859_i32 = arith.constant 859 : i32
    %43 = tpu.dynamic_rotate %0 by %c859_i32 dim 1 : vector<8x896xf32>, i32 -> vector<8x896xf32>
    %c7 = arith.constant 7 : index
    %c0_23 = arith.constant 0 : index
    %c0_24 = arith.constant 0 : index
    %44 = vector.load %arg2[%c7, %c0_23, %c0_24] : memref<9x32x8xf32, #tpu.memory_space<vmem>>, vector<1x32x8xf32>
    %45 = vector.shape_cast %44 : vector<1x32x8xf32> to vector<32x8xf32>
    %46 = vector.extract_strided_slice %43 {offsets = [0, 0], sizes = [8, 768], strides = [1, 1]} : vector<8x896xf32> to vector<8x768xf32>
    %cst_25 = arith.constant dense<0.000000e+00> : vector<32x768xf32>
    %47 = tpu.matmul %45, %46, %cst_25 {dimension_numbers = #tpu.dot_dimension_numbers<[1], [0], [0], [1], [0, 0, 1, 1], [], []>} : vector<32x8xf32>, vector<8x768xf32>, vector<32x768xf32> -> vector<32x768xf32>
    %48 = arith.addf %42, %47 : vector<32x768xf32>
    %c858_i32 = arith.constant 858 : i32
    %49 = tpu.dynamic_rotate %0 by %c858_i32 dim 1 : vector<8x896xf32>, i32 -> vector<8x896xf32>
    %c8 = arith.constant 8 : index
    %c0_26 = arith.constant 0 : index
    %c0_27 = arith.constant 0 : index
    %50 = vector.load %arg2[%c8, %c0_26, %c0_27] : memref<9x32x8xf32, #tpu.memory_space<vmem>>, vector<1x32x8xf32>
    %51 = vector.shape_cast %50 : vector<1x32x8xf32> to vector<32x8xf32>
    %52 = vector.extract_strided_slice %49 {offsets = [0, 0], sizes = [8, 768], strides = [1, 1]} : vector<8x896xf32> to vector<8x768xf32>
    %cst_28 = arith.constant dense<0.000000e+00> : vector<32x768xf32>
    %53 = tpu.matmul %51, %52, %cst_28 {dimension_numbers = #tpu.dot_dimension_numbers<[1], [0], [0], [1], [0, 0, 1, 1], [], []>} : vector<32x8xf32>, vector<8x768xf32>, vector<32x768xf32> -> vector<32x768xf32>
    %54 = arith.addf %48, %53 : vector<32x768xf32>
    %c0_29 = arith.constant 0 : index
    %c0_30 = arith.constant 0 : index
    %55 = vector.load %arg3[%c0_29, %c0_30] : memref<32x1xf32, #tpu.memory_space<vmem>>, vector<32x1xf32>
    %56 = vector.broadcast %55 : vector<32x1xf32> to vector<32x768xf32>
    %57 = arith.addf %54, %56 : vector<32x768xf32>
    %cst_31 = arith.constant 0.000000e+00 : f32
    %58 = vector.broadcast %cst_31 : f32 to vector<32x768xf32>
    %59 = arith.maximumf %57, %58 : vector<32x768xf32>
    %c0_32 = arith.constant 0 : index
    %c0_33 = arith.constant 0 : index
    %60 = vector.load %arg4[%c0_32, %c0_33] : memref<32x1xf32, #tpu.memory_space<vmem>>, vector<32x1xf32>
    %61 = vector.broadcast %60 : vector<32x1xf32> to vector<32x768xf32>
    %62 = arith.mulf %59, %61 : vector<32x768xf32>
    %cst_34 = arith.constant dense<0.000000e+00> : vector<768xf32>
    %63 = vector.multi_reduction <add>, %62, %cst_34 [0] : vector<32x768xf32> to vector<768xf32>
    %64 = vector.shape_cast %63 : vector<768xf32> to vector<1x768xf32>
    %c0_35 = arith.constant 0 : index
    %c0_36 = arith.constant 0 : index
    %65 = memref.load %arg5[%c0_35, %c0_36] : memref<1x1xf32, #tpu.memory_space<smem>>
    %66 = vector.broadcast %65 : f32 to vector<1x768xf32>
    %67 = arith.addf %64, %66 : vector<1x768xf32>
    %68 = arith.negf %67 : vector<1x768xf32>
    %69 = math.exp %68 : vector<1x768xf32>
    %cst_37 = arith.constant 1.000000e+00 : f32
    %70 = vector.broadcast %cst_37 : f32 to vector<1x768xf32>
    %71 = arith.addf %70, %69 : vector<1x768xf32>
    %72 = arith.divf %70, %71 : vector<1x768xf32>
    %c0_38 = arith.constant 0 : index
    %c0_39 = arith.constant 0 : index
    %73 = vector.load %arg6[%c0_38, %c0_39] : memref<1x768xf32, #tpu.memory_space<vmem>>, vector<1x768xf32>
    tpu.vector_store %arg6[%c0_38, %c0_39], %72 {strides = array<i32>} : memref<1x768xf32, #tpu.memory_space<vmem>>, vector<1x768xf32>,
    %cst_40 = arith.constant 3.000000e-01 : f32
    %74 = vector.broadcast %cst_40 : f32 to vector<1x768xf32>
    %75 = arith.cmpf oge, %72, %74 : vector<1x768xf32>
    %76 = arith.extui %75 : vector<1x768xi1> to vector<1x768xi32>
    %77 = arith.sitofp %76 : vector<1x768xi32> to vector<1x768xf32>
    %c0_41 = arith.constant 0 : index
    %c0_42 = arith.constant 0 : index
    %78 = vector.load %arg7[%c0_41, %c0_42] : memref<1x768xf32, #tpu.memory_space<vmem>>, vector<1x768xf32>
    tpu.vector_store %arg7[%c0_41, %c0_42], %77 {strides = array<i32>} : memref<1x768xf32, #tpu.memory_space<vmem>>, vector<1x768xf32>,
    return
  }
  func.func @transform_0(%arg0: i32) -> (i32, i32) {
    %c0_i32 = arith.constant 0 : i32
    %c0_i32_0 = arith.constant 0 : i32
    %c0_i32_1 = arith.constant 0 : i32
    return %c0_i32, %c0_i32_0 : i32, i32
  }
  func.func @transform_1(%arg0: i32) -> (i32, i32, i32) {
    %c0_i32 = arith.constant 0 : i32
    %c0_i32_0 = arith.constant 0 : i32
    %c0_i32_1 = arith.constant 0 : i32
    %c0_i32_2 = arith.constant 0 : i32
    return %c0_i32, %c0_i32_0, %c0_i32_1 : i32, i32, i32
  }
  func.func @transform_2(%arg0: i32) -> (i32, i32) {
    %c0_i32 = arith.constant 0 : i32
    %c0_i32_0 = arith.constant 0 : i32
    %c0_i32_1 = arith.constant 0 : i32
    return %c0_i32, %c0_i32_0 : i32, i32
  }
  func.func @transform_3(%arg0: i32) -> (i32, i32) {
    %c0_i32 = arith.constant 0 : i32
    %c0_i32_0 = arith.constant 0 : i32
    %c0_i32_1 = arith.constant 0 : i32
    return %c0_i32, %c0_i32_0 : i32, i32
  }
  func.func @transform_4(%arg0: i32) -> (i32, i32) {
    %c0_i32 = arith.constant 0 : i32
    %c0_i32_0 = arith.constant 0 : i32
    %c0_i32_1 = arith.constant 0 : i32
    return %c0_i32, %c0_i32_0 : i32, i32
  }
  func.func @transform_5(%arg0: i32) -> (i32, i32) {
    %c0_i32 = arith.constant 0 : i32
    %c0_i32_0 = arith.constant 0 : i32
    %c0_i32_1 = arith.constant 0 : i32
    return %c0_i32, %c0_i32_0 : i32, i32
  }
  func.func @transform_6(%arg0: i32) -> (i32, i32) {
    %c0_i32 = arith.constant 0 : i32
    %c0_i32_0 = arith.constant 0 : i32
    %c0_i32_1 = arith.constant 0 : i32
    return %c0_i32, %c0_i32_0 : i32, i32
  }
}

</mosaic_0001>

<llo_original>
// kernel: _detection_model_jit.1
$region0: #{_detection_model_jit.1}
  #allocation0 [shape = 'u32[]', space=smem, size = 0x4, offset = 0x4, fixed_abs, tag = 'smem constant byte address 0x4 - core index']
  #allocation1 [shape = 'u32[144,128]{1,0:T(1,128)}', space=vmem, size = 0x12000, scoped, tag = 'internal scratch']
  #allocation2 [shape = 'f32[1,1]{1,0:T(1,128)S(6)}', space=smem, size = 0x200, scoped, tag = 'scoped memory for _detection_model_jit.1']
  %s0 = inlined_call_operand.vmem [shape: f32[8,896], index: 0, kind: input, shape index: {}]
  %s1 = inlined_call_operand.vmem [shape: f32[9,32,8], index: 1, kind: input, shape index: {}]
  %s2 = inlined_call_operand.vmem [shape: f32[32,1], index: 2, kind: input, shape index: {}]
  %s3 = inlined_call_operand.vmem [shape: f32[32,1], index: 3, kind: input, shape index: {}]
  %s4 = inlined_call_operand.<no memory space> [shape: f32[1,1], index: 4, kind: input, shape index: {}]
  %s5 = inlined_call_operand.vmem [shape: f32[1,768], index: 5, kind: output, shape index: {0}]
  %s6 = inlined_call_operand.vmem [shape: f32[1,768], index: 6, kind: output, shape index: {1}]
  %7 = xla_tuple %s5, %s6
  %s8 = sld [smem:[#allocation0]]
  $region38: #{_detection_model_jit.1} parent=0
    _
  %s10 = ssub.s32 1, %s8
  %s11 = scalar_select 0, %s10, %s8
  %12 = sst [smem:[#allocation2]] %s4
  // Predicated region
  $region2: #{_detection_model_jit.1} parent=0 // pred_check
    _
  $region3: #{_detection_model_jit.1} parent=0 // pred_check_branch
    %14 = sbr.rel (0) target = $region5
  $region4: #{_detection_model_jit.1} parent=0 // pred_region
    _
  $region5: #{_detection_model_jit.1} parent=0 // pred_fallthru
    _
  // Predicated region
  $region6: #{_detection_model_jit.1} parent=0 // pred_check
    _
  $region7: #{_detection_model_jit.1} parent=0 // pred_check_branch
    %16 = sbr.rel (0) target = $region9
  $region8: #{_detection_model_jit.1} parent=0 // pred_region
    _
  $region9: #{_detection_model_jit.1} parent=0 // pred_fallthru
    _
  // Predicated region
  $region10: #{_detection_model_jit.1} parent=0 // pred_check
    _
  $region11: #{_detection_model_jit.1} parent=0 // pred_check_branch
    %18 = sbr.rel (0) target = $region13
  $region12: #{_detection_model_jit.1} parent=0 // pred_region
    _
  $region13: #{_detection_model_jit.1} parent=0 // pred_fallthru
    _
  // Predicated region
  $region14: #{_detection_model_jit.1} parent=0 // pred_check
    _
  $region15: #{_detection_model_jit.1} parent=0 // pred_check_branch
    %20 = sbr.rel (0) target = $region17
  $region16: #{_detection_model_jit.1} parent=0 // pred_region
    _
  $region17: #{_detection_model_jit.1} parent=0 // pred_fallthru
    _
  // Predicated region
  $region18: #{_detection_model_jit.1} parent=0 // pred_check
    _
  $region19: #{_detection_model_jit.1} parent=0 // pred_check_branch
    %22 = sbr.rel (0) target = $region21
  $region20: #{_detection_model_jit.1} parent=0 // pred_region
    _
  $region21: #{_detection_model_jit.1} parent=0 // pred_fallthru
    _
  %v23 = vld [vmem:[%s0] sm:$0xff]
  %v24 = vld [vmem:[%s0 + $0x8] sm:$0xff]
  %v25 = vld [vmem:[%s0 + $0x10] sm:$0xff]
  %v26 = vld [vmem:[%s0 + $0x18] sm:$0xff]
  %v27 = vld [vmem:[%s0 + $0x20] sm:$0xff]
  %v28 = vld [vmem:[%s0 + $0x28] sm:$0xff]
  %v29 = vld [vmem:[%s0 + $0x30] sm:$0xff]
  %v30 = vld [vmem:[%s1] sm:$0xff]
  %v31 = vld [vmem:[%s1 + $0x8] sm:$0xff]
  %v32 = vld [vmem:[%s1 + $0x10] sm:$0xff]
  %v33 = vld [vmem:[%s1 + $0x18] sm:$0xff]
  %34 = vrot.lane.b32.xlu0 %v23, 127
  %v35 = vpop.permute.xlu0 %34
  %36 = vrot.lane.b32.xlu0 %v24, 127
  %v37 = vpop.permute.xlu0 %36
  %38 = vrot.lane.b32.xlu0 %v25, 127
  %v39 = vpop.permute.xlu0 %38
  %40 = vrot.lane.b32.xlu0 %v26, 127
  %v41 = vpop.permute.xlu0 %40
  %42 = vrot.lane.b32.xlu0 %v27, 127
  %v43 = vpop.permute.xlu0 %42
  %44 = vrot.lane.b32.xlu0 %v28, 127
  %v45 = vpop.permute.xlu0 %44
  %46 = vrot.lane.b32.xlu0 %v29, 127
  %v47 = vpop.permute.xlu0 %46
  %v48 = vlaneseq
  %v49 = vand.u32 %v48, 127
  %vm50 = vcmp.lt.s32.totalorder %v49, 127
  %v51 = vsel %vm50, %v45, %v47
  %v52 = vsel %vm50, %v43, %v45
  %v53 = vsel %vm50, %v41, %v43
  %v54 = vsel %vm50, %v39, %v41
  %v55 = vsel %vm50, %v37, %v39
  %v56 = vsel %vm50, %v35, %v37
  %s57 = scalar_lea.vmem %s1, 32
  %v58 = vld [vmem:[%s57] sm:$0xff]
  %v59 = vld [vmem:[%s57 + $0x8] sm:$0xff]
  %v60 = vld [vmem:[%s57 + $0x10] sm:$0xff]
  %v61 = vld [vmem:[%s57 + $0x18] sm:$0xff]
  %vm62 = vcmask 64512
  %v64 = vsel %vm62, %v58, 0
  %v67 = vsel %vm62, %v59, 0
  %v70 = vsel %vm62, %v60, 0
  %v73 = vsel %vm62, %v61, 0
  %75 = vmatprep.subr.mxu0 0.0
  %76 = vmatpush1.msra.mxu0 0.0
  %77 = vmatprep.subr.mxu0 0.0
  %78 = vmatpush1.msra.mxu0 0.0
  %79 = vmatprep.subr.mxu0 0.0
  %80 = vmatpush1.msra.mxu0 0.0
  %81 = vmatprep.subr.mxu0 0.0
  %82 = vmatpush1.msra.mxu0 0.0
  %83 = vmatprep.subr.mxu0 0.0
  %84 = vmatpush1.msra.mxu0 0.0
  %85 = vmatprep.subr.mxu0 0.0
  %86 = vmatpush1.msra.mxu0 0.0
  %87 = vmatprep.subr.mxu0 0.0
  %88 = vmatpush1.msra.mxu0 0.0
  %89 = vmatprep.subr.mxu0 0.0
  %90 = vmatpush1.msra.mxu0 0.0
  %91 = vmatprep.subr.mxu0 0.0
  %92 = vmatpush1.msra.mxu0 0.0
  %93 = vmatprep.subr.mxu0 0.0
  %94 = vmatpush1.msra.mxu0 0.0
  %95 = vmatprep.subr.mxu0 0.0
  %96 = vmatpush1.msra.mxu0 0.0
  %97 = vmatprep.subr.mxu0 0.0
  %98 = vmatpush1.msra.mxu0 0.0
  %99 = vmatprep.subr.mxu0 0.0
  %100 = vmatpush1.msra.mxu0 0.0
  %101 = vmatprep.subr.mxu0 0.0
  %102 = vmatpush1.msra.mxu0 0.0
  %103 = vmatprep.subr.mxu0 0.0
  %104 = vmatpush1.msra.mxu0 0.0
  %105 = vmatprep.subr.mxu0 %v55
  %106 = vmatpush1.msra.mxu0 %v56
  %107 = vmatprep.subr.mxu0 0.0
  %108 = vmatpush2.msra.mxu0 0.0
  %109 = vmatprep.subr.mxu0 0.0
  %110 = vmatpush2.msra.mxu0 0.0
  %111 = vmatprep.subr.mxu0 0.0
  %112 = vmatpush2.msra.mxu0 0.0
  %113 = vmatprep.subr.mxu0 0.0
  %114 = vmatpush2.msra.mxu0 0.0
  %115 = vmatprep.subr.mxu0 0.0
  %116 = vmatpush2.msra.mxu0 0.0
  %117 = vmatprep.subr.mxu0 0.0
  %118 = vmatpush2.msra.mxu0 0.0
  %119 = vmatprep.subr.mxu0 0.0
  %120 = vmatpush2.msra.mxu0 0.0
  %121 = vmatprep.subr.mxu0 0.0
  %122 = vmatpush2.msra.mxu0 0.0
  %123 = vmatprep.subr.mxu0 0.0
  %124 = vmatpush2.msra.mxu0 0.0
  %125 = vmatprep.subr.mxu0 0.0
  %126 = vmatpush2.msra.mxu0 0.0
  %127 = vmatprep.subr.mxu0 0.0
  %128 = vmatpush2.msra.mxu0 0.0
  %129 = vmatprep.subr.mxu0 0.0
  %130 = vmatpush2.msra.mxu0 0.0
  %131 = vmatprep.subr.mxu0 0.0
  %132 = vmatpush2.msra.mxu0 0.0
  %133 = vmatprep.subr.mxu0 0.0
  %134 = vmatpush2.msra.mxu0 0.0
  %135 = vmatprep.subr.mxu0 0.0
  %136 = vmatpush2.msra.mxu0 0.0
  %137 = vmatprep.subr.mxu0 0.0
  %138 = vmatpush2.msra.mxu0 0.0
  %139 = vmatprep.mubr.f32.mxu0 0.0
  %140 = vmatmul.mubr.f32.gmra.mxu0 %v64
  %v141 = vpop.f32.mrf.mxu0
  %v142 = vadd.f32 0.0, %v141
  %v143 = vpop.f32.mrf.mxu0
  %v144 = vadd.f32 0.0, %v143
  %145 = vmatprep.mubr.f32.mxu0 0.0
  %146 = vmatmul.mubr.f32.gmra.mxu0 %v67
  %v147 = vpop.f32.mrf.mxu0
  %v148 = vadd.f32 0.0, %v147
  %v149 = vpop.f32.mrf.mxu0
  %v150 = vadd.f32 0.0, %v149
  %151 = vmatprep.mubr.f32.mxu0 0.0
  %152 = vmatmul.mubr.f32.gmra.mxu0 %v70
  %v153 = vpop.f32.mrf.mxu0
  %v154 = vadd.f32 0.0, %v153
  %v155 = vpop.f32.mrf.mxu0
  %v156 = vadd.f32 0.0, %v155
  %157 = vmatprep.mubr.f32.mxu0 0.0
  %158 = vmatmul.mubr.f32.gmra.mxu0 %v73
  %v159 = vpop.f32.mrf.mxu0
  %v160 = vadd.f32 0.0, %v159
  %v161 = vpop.f32.mrf.mxu0
  %v162 = vadd.f32 0.0, %v161
  %163 = vdwg.mxu0
  %164 = vmatprep.subr.mxu0 0.0
  %165 = vmatpush1.msra.mxu0 0.0
  %166 = vmatprep.subr.mxu0 0.0
  %167 = vmatpush1.msra.mxu0 0.0
  %168 = vmatprep.subr.mxu0 0.0
  %169 = vmatpush1.msra.mxu0 0.0
  %170 = vmatprep.subr.mxu0 0.0
  %171 = vmatpush1.msra.mxu0 0.0
  %172 = vmatprep.subr.mxu0 0.0
  %173 = vmatpush1.msra.mxu0 0.0
  %174 = vmatprep.subr.mxu0 0.0
  %175 = vmatpush1.msra.mxu0 0.0
  %176 = vmatprep.subr.mxu0 0.0
  %177 = vmatpush1.msra.mxu0 0.0
  %178 = vmatprep.subr.mxu0 0.0
  %179 = vmatpush1.msra.mxu0 0.0
  %180 = vmatprep.subr.mxu0 0.0
  %181 = vmatpush1.msra.mxu0 0.0
  %182 = vmatprep.subr.mxu0 0.0
  %183 = vmatpush1.msra.mxu0 0.0
  %184 = vmatprep.subr.mxu0 0.0
  %185 = vmatpush1.msra.mxu0 0.0
  %186 = vmatprep.subr.mxu0 0.0
  %187 = vmatpush1.msra.mxu0 0.0
  %188 = vmatprep.subr.mxu0 0.0
  %189 = vmatpush1.msra.mxu0 0.0
  %190 = vmatprep.subr.mxu0 0.0
  %191 = vmatpush1.msra.mxu0 0.0
  %192 = vmatprep.subr.mxu0 0.0
  %193 = vmatpush1.msra.mxu0 0.0
  %194 = vmatprep.subr.mxu0 %v53
  %195 = vmatpush1.msra.mxu0 %v54
  %196 = vmatprep.subr.mxu0 0.0
  %197 = vmatpush2.msra.mxu0 0.0
  %198 = vmatprep.subr.mxu0 0.0
  %199 = vmatpush2.msra.mxu0 0.0
  %200 = vmatprep.subr.mxu0 0.0
  %201 = vmatpush2.msra.mxu0 0.0
  %202 = vmatprep.subr.mxu0 0.0
  %203 = vmatpush2.msra.mxu0 0.0
  %204 = vmatprep.subr.mxu0 0.0
  %205 = vmatpush2.msra.mxu0 0.0
  %206 = vmatprep.subr.mxu0 0.0
  %207 = vmatpush2.msra.mxu0 0.0
  %208 = vmatprep.subr.mxu0 0.0
  %209 = vmatpush2.msra.mxu0 0.0
  %210 = vmatprep.subr.mxu0 0.0
  %211 = vmatpush2.msra.mxu0 0.0
  %212 = vmatprep.subr.mxu0 0.0
  %213 = vmatpush2.msra.mxu0 0.0
  %214 = vmatprep.subr.mxu0 0.0
  %215 = vmatpush2.msra.mxu0 0.0
  %216 = vmatprep.subr.mxu0 0.0
  %217 = vmatpush2.msra.mxu0 0.0
  %218 = vmatprep.subr.mxu0 0.0
  %219 = vmatpush2.msra.mxu0 0.0
  %220 = vmatprep.subr.mxu0 0.0
  %221 = vmatpush2.msra.mxu0 0.0
  %222 = vmatprep.subr.mxu0 0.0
  %223 = vmatpush2.msra.mxu0 0.0
  %224 = vmatprep.subr.mxu0 0.0
  %225 = vmatpush2.msra.mxu0 0.0
  %226 = vmatprep.subr.mxu0 0.0
  %227 = vmatpush2.msra.mxu0 0.0
  %228 = vmatprep.mubr.f32.mxu0 0.0
  %229 = vmatmul.mubr.f32.gmra.mxu0 %v64
  %v230 = vpop.f32.mrf.mxu0
  %v231 = vadd.f32 0.0, %v230
  %v232 = vpop.f32.mrf.mxu0
  %v233 = vadd.f32 0.0, %v232
  %234 = vmatprep.mubr.f32.mxu0 0.0
  %235 = vmatmul.mubr.f32.gmra.mxu0 %v67
  %v236 = vpop.f32.mrf.mxu0
  %v237 = vadd.f32 0.0, %v236
  %v238 = vpop.f32.mrf.mxu0
  %v239 = vadd.f32 0.0, %v238
  %240 = vmatprep.mubr.f32.mxu0 0.0
  %241 = vmatmul.mubr.f32.gmra.mxu0 %v70
  %v242 = vpop.f32.mrf.mxu0
  %v243 = vadd.f32 0.0, %v242
  %v244 = vpop.f32.mrf.mxu0
  %v245 = vadd.f32 0.0, %v244
  %246 = vmatprep.mubr.f32.mxu0 0.0
  %247 = vmatmul.mubr.f32.gmra.mxu0 %v73
  %v248 = vpop.f32.mrf.mxu0
  %v249 = vadd.f32 0.0, %v248
  %v250 = vpop.f32.mrf.mxu0
  %v251 = vadd.f32 0.0, %v250
  %252 = vdwg.mxu0
  %253 = vmatprep.subr.mxu0 0.0
  %254 = vmatpush1.msra.mxu0 0.0
  %255 = vmatprep.subr.mxu0 0.0
  %256 = vmatpush1.msra.mxu0 0.0
  %257 = vmatprep.subr.mxu0 0.0
  %258 = vmatpush1.msra.mxu0 0.0
  %259 = vmatprep.subr.mxu0 0.0
  %260 = vmatpush1.msra.mxu0 0.0
  %261 = vmatprep.subr.mxu0 0.0
  %262 = vmatpush1.msra.mxu0 0.0
  %263 = vmatprep.subr.mxu0 0.0
  %264 = vmatpush1.msra.mxu0 0.0
  %265 = vmatprep.subr.mxu0 0.0
  %266 = vmatpush1.msra.mxu0 0.0
  %267 = vmatprep.subr.mxu0 0.0
  %268 = vmatpush1.msra.mxu0 0.0
  %269 = vmatprep.subr.mxu0 0.0
  %270 = vmatpush1.msra.mxu0 0.0
  %271 = vmatprep.subr.mxu0 0.0
  %272 = vmatpush1.msra.mxu0 0.0
  %273 = vmatprep.subr.mxu0 0.0
  %274 = vmatpush1.msra.mxu0 0.0
  %275 = vmatprep.subr.mxu0 0.0
  %276 = vmatpush1.msra.mxu0 0.0
  %277 = vmatprep.subr.mxu0 0.0
  %278 = vmatpush1.msra.mxu0 0.0
  %279 = vmatprep.subr.mxu0 0.0
  %280 = vmatpush1.msra.mxu0 0.0
  %281 = vmatprep.subr.mxu0 0.0
  %282 = vmatpush1.msra.mxu0 0.0
  %283 = vmatprep.subr.mxu0 %v51
  %284 = vmatpush1.msra.mxu0 %v52
  %285 = vmatprep.subr.mxu0 0.0
  %286 = vmatpush2.msra.mxu0 0.0
  %287 = vmatprep.subr.mxu0 0.0
  %288 = vmatpush2.msra.mxu0 0.0
  %289 = vmatprep.subr.mxu0 0.0
  %290 = vmatpush2.msra.mxu0 0.0
  %291 = vmatprep.subr.mxu0 0.0
  %292 = vmatpush2.msra.mxu0 0.0
  %293 = vmatprep.subr.mxu0 0.0
  %294 = vmatpush2.msra.mxu0 0.0
  %295 = vmatprep.subr.mxu0 0.0
  %296 = vmatpush2.msra.mxu0 0.0
  %297 = vmatprep.subr.mxu0 0.0
  %298 = vmatpush2.msra.mxu0 0.0
  %299 = vmatprep.subr.mxu0 0.0
  %300 = vmatpush2.msra.mxu0 0.0
  %301 = vmatprep.subr.mxu0 0.0
  %302 = vmatpush2.msra.mxu0 0.0
  %303 = vmatprep.subr.mxu0 0.0
  %304 = vmatpush2.msra.mxu0 0.0
  %305 = vmatprep.subr.mxu0 0.0
  %306 = vmatpush2.msra.mxu0 0.0
  %307 = vmatprep.subr.mxu0 0.0
  %308 = vmatpush2.msra.mxu0 0.0
  %309 = vmatprep.subr.mxu0 0.0
  %310 = vmatpush2.msra.mxu0 0.0
  %311 = vmatprep.subr.mxu0 0.0
  %312 = vmatpush2.msra.mxu0 0.0
  %313 = vmatprep.subr.mxu0 0.0
  %314 = vmatpush2.msra.mxu0 0.0
  %315 = vmatprep.subr.mxu0 0.0
  %316 = vmatpush2.msra.mxu0 0.0
  %317 = vmatprep.mubr.f32.mxu0 0.0
  %318 = vmatmul.mubr.f32.gmra.mxu0 %v64
  %v319 = vpop.f32.mrf.mxu0
  %v320 = vadd.f32 0.0, %v319
  %v321 = vpop.f32.mrf.mxu0
  %v322 = vadd.f32 0.0, %v321
  %323 = vmatprep.mubr.f32.mxu0 0.0
  %324 = vmatmul.mubr.f32.gmra.mxu0 %v67
  %v325 = vpop.f32.mrf.mxu0
  %v326 = vadd.f32 0.0, %v325
  %v327 = vpop.f32.mrf.mxu0
  %v328 = vadd.f32 0.0, %v327
  %329 = vmatprep.mubr.f32.mxu0 0.0
  %330 = vmatmul.mubr.f32.gmra.mxu0 %v70
  %v331 = vpop.f32.mrf.mxu0
  %v332 = vadd.f32 0.0, %v331
  %v333 = vpop.f32.mrf.mxu0
  %v334 = vadd.f32 0.0, %v333
  %335 = vmatprep.mubr.f32.mxu0 0.0
  %336 = vmatmul.mubr.f32.gmra.mxu0 %v73
  %v337 = vpop.f32.mrf.mxu0
  %v338 = vadd.f32 0.0, %v337
  %v339 = vpop.f32.mrf.mxu0
  %v340 = vadd.f32 0.0, %v339
  %341 = vdwg.mxu0
  %v343 = vsel %vm62, %v30, 0
  %v346 = vsel %vm62, %v31, 0
  %v349 = vsel %vm62, %v32, 0
  %v352 = vsel %vm62, %v33, 0
  %354 = vmatprep.subr.mxu0 0.0
  %355 = vmatpush1.msra.mxu0 0.0
  %356 = vmatprep.subr.mxu0 0.0
  %357 = vmatpush1.msra.mxu0 0.0
  %358 = vmatprep.subr.mxu0 0.0
  %359 = vmatpush1.msra.mxu0 0.0
  %360 = vmatprep.subr.mxu0 0.0
  %361 = vmatpush1.msra.mxu0 0.0
  %362 = vmatprep.subr.mxu0 0.0
  %363 = vmatpush1.msra.mxu0 0.0
  %364 = vmatprep.subr.mxu0 0.0
  %365 = vmatpush1.msra.mxu0 0.0
  %366 = vmatprep.subr.mxu0 0.0
  %367 = vmatpush1.msra.mxu0 0.0
  %368 = vmatprep.subr.mxu0 0.0
  %369 = vmatpush1.msra.mxu0 0.0
  %370 = vmatprep.subr.mxu0 0.0
  %371 = vmatpush1.msra.mxu0 0.0
  %372 = vmatprep.subr.mxu0 0.0
  %373 = vmatpush1.msra.mxu0 0.0
  %374 = vmatprep.subr.mxu0 0.0
  %375 = vmatpush1.msra.mxu0 0.0
  %376 = vmatprep.subr.mxu0 0.0
  %377 = vmatpush1.msra.mxu0 0.0
  %378 = vmatprep.subr.mxu0 0.0
  %379 = vmatpush1.msra.mxu0 0.0
  %380 = vmatprep.subr.mxu0 0.0
  %381 = vmatpush1.msra.mxu0 0.0
  %382 = vmatprep.subr.mxu0 0.0
  %383 = vmatpush1.msra.mxu0 0.0
  %384 = vmatprep.subr.mxu0 %v24
  %385 = vmatpush1.msra.mxu0 %v23
  %386 = vmatprep.subr.mxu0 0.0
  %387 = vmatpush2.msra.mxu0 0.0
  %388 = vmatprep.subr.mxu0 0.0
  %389 = vmatpush2.msra.mxu0 0.0
  %390 = vmatprep.subr.mxu0 0.0
  %391 = vmatpush2.msra.mxu0 0.0
  %392 = vmatprep.subr.mxu0 0.0
  %393 = vmatpush2.msra.mxu0 0.0
  %394 = vmatprep.subr.mxu0 0.0
  %395 = vmatpush2.msra.mxu0 0.0
  %396 = vmatprep.subr.mxu0 0.0
  %397 = vmatpush2.msra.mxu0 0.0
  %398 = vmatprep.subr.mxu0 0.0
  %399 = vmatpush2.msra.mxu0 0.0
  %400 = vmatprep.subr.mxu0 0.0
  %401 = vmatpush2.msra.mxu0 0.0
  %402 = vmatprep.subr.mxu0 0.0
  %403 = vmatpush2.msra.mxu0 0.0
  %404 = vmatprep.subr.mxu0 0.0
  %405 = vmatpush2.msra.mxu0 0.0
  %406 = vmatprep.subr.mxu0 0.0
  %407 = vmatpush2.msra.mxu0 0.0
  %408 = vmatprep.subr.mxu0 0.0
  %409 = vmatpush2.msra.mxu0 0.0
  %410 = vmatprep.subr.mxu0 0.0
  %411 = vmatpush2.msra.mxu0 0.0
  %412 = vmatprep.subr.mxu0 0.0
  %413 = vmatpush2.msra.mxu0 0.0
  %414 = vmatprep.subr.mxu0 0.0
  %415 = vmatpush2.msra.mxu0 0.0
  %416 = vmatprep.subr.mxu0 0.0
  %417 = vmatpush2.msra.mxu0 0.0
  %418 = vmatprep.mubr.f32.mxu0 0.0
  %419 = vmatmul.mubr.f32.gmra.mxu0 %v343
  %v420 = vpop.f32.mrf.mxu0
  %v421 = vadd.f32 %v142, %v420
  %v422 = vpop.f32.mrf.mxu0
  %v423 = vadd.f32 %v144, %v422
  %424 = vmatprep.mubr.f32.mxu0 0.0
  %425 = vmatmul.mubr.f32.gmra.mxu0 %v346
  %v426 = vpop.f32.mrf.mxu0
  %v427 = vadd.f32 %v148, %v426
  %v428 = vpop.f32.mrf.mxu0
  %v429 = vadd.f32 %v150, %v428
  %430 = vmatprep.mubr.f32.mxu0 0.0
  %431 = vmatmul.mubr.f32.gmra.mxu0 %v349
  %v432 = vpop.f32.mrf.mxu0
  %v433 = vadd.f32 %v154, %v432
  %v434 = vpop.f32.mrf.mxu0
  %v435 = vadd.f32 %v156, %v434
  %436 = vmatprep.mubr.f32.mxu0 0.0
  %437 = vmatmul.mubr.f32.gmra.mxu0 %v352
  %v438 = vpop.f32.mrf.mxu0
  %v439 = vadd.f32 %v160, %v438
  %v440 = vpop.f32.mrf.mxu0
  %v441 = vadd.f32 %v162, %v440
  %442 = vdwg.mxu0
  %443 = vmatprep.subr.mxu0 0.0
  %444 = vmatpush1.msra.mxu0 0.0
  %445 = vmatprep.subr.mxu0 0.0
  %446 = vmatpush1.msra.mxu0 0.0
  %447 = vmatprep.subr.mxu0 0.0
  %448 = vmatpush1.msra.mxu0 0.0
  %449 = vmatprep.subr.mxu0 0.0
  %450 = vmatpush1.msra.mxu0 0.0
  %451 = vmatprep.subr.mxu0 0.0
  %452 = vmatpush1.msra.mxu0 0.0
  %453 = vmatprep.subr.mxu0 0.0
  %454 = vmatpush1.msra.mxu0 0.0
  %455 = vmatprep.subr.mxu0 0.0
  %456 = vmatpush1.msra.mxu0 0.0
  %457 = vmatprep.subr.mxu0 0.0
  %458 = vmatpush1.msra.mxu0 0.0
  %459 = vmatprep.subr.mxu0 0.0
  %460 = vmatpush1.msra.mxu0 0.0
  %461 = vmatprep.subr.mxu0 0.0
  %462 = vmatpush1.msra.mxu0 0.0
  %463 = vmatprep.subr.mxu0 0.0
  %464 = vmatpush1.msra.mxu0 0.0
  %465 = vmatprep.subr.mxu0 0.0
  %466 = vmatpush1.msra.mxu0 0.0
  %467 = vmatprep.subr.mxu0 0.0
  %468 = vmatpush1.msra.mxu0 0.0
  %469 = vmatprep.subr.mxu0 0.0
  %470 = vmatpush1.msra.mxu0 0.0
  %471 = vmatprep.subr.mxu0 0.0
  %472 = vmatpush1.msra.mxu0 0.0
  %473 = vmatprep.subr.mxu0 %v26
  %474 = vmatpush1.msra.mxu0 %v25
  %475 = vmatprep.subr.mxu0 0.0
  %476 = vmatpush2.msra.mxu0 0.0
  %477 = vmatprep.subr.mxu0 0.0
  %478 = vmatpush2.msra.mxu0 0.0
  %479 = vmatprep.subr.mxu0 0.0
  %480 = vmatpush2.msra.mxu0 0.0
  %481 = vmatprep.subr.mxu0 0.0
  %482 = vmatpush2.msra.mxu0 0.0
  %483 = vmatprep.subr.mxu0 0.0
  %484 = vmatpush2.msra.mxu0 0.0
  %485 = vmatprep.subr.mxu0 0.0
  %486 = vmatpush2.msra.mxu0 0.0
  %487 = vmatprep.subr.mxu0 0.0
  %488 = vmatpush2.msra.mxu0 0.0
  %489 = vmatprep.subr.mxu0 0.0
  %490 = vmatpush2.msra.mxu0 0.0
  %491 = vmatprep.subr.mxu0 0.0
  %492 = vmatpush2.msra.mxu0 0.0
  %493 = vmatprep.subr.mxu0 0.0
  %494 = vmatpush2.msra.mxu0 0.0
  %495 = vmatprep.subr.mxu0 0.0
  %496 = vmatpush2.msra.mxu0 0.0
  %497 = vmatprep.subr.mxu0 0.0
  %498 = vmatpush2.msra.mxu0 0.0
  %499 = vmatprep.subr.mxu0 0.0
  %500 = vmatpush2.msra.mxu0 0.0
  %501 = vmatprep.subr.mxu0 0.0
  %502 = vmatpush2.msra.mxu0 0.0
  %503 = vmatprep.subr.mxu0 0.0
  %504 = vmatpush2.msra.mxu0 0.0
  %505 = vmatprep.subr.mxu0 0.0
  %506 = vmatpush2.msra.mxu0 0.0
  %507 = vmatprep.mubr.f32.mxu0 0.0
  %508 = vmatmul.mubr.f32.gmra.mxu0 %v343
  %v509 = vpop.f32.mrf.mxu0
  %v510 = vadd.f32 %v231, %v509
  %v511 = vpop.f32.mrf.mxu0
  %v512 = vadd.f32 %v233, %v511
  %513 = vmatprep.mubr.f32.mxu0 0.0
  %514 = vmatmul.mubr.f32.gmra.mxu0 %v346
  %v515 = vpop.f32.mrf.mxu0
  %v516 = vadd.f32 %v237, %v515
  %v517 = vpop.f32.mrf.mxu0
  %v518 = vadd.f32 %v239, %v517
  %519 = vmatprep.mubr.f32.mxu0 0.0
  %520 = vmatmul.mubr.f32.gmra.mxu0 %v349
  %v521 = vpop.f32.mrf.mxu0
  %v522 = vadd.f32 %v243, %v521
  %v523 = vpop.f32.mrf.mxu0
  %v524 = vadd.f32 %v245, %v523
  %525 = vmatprep.mubr.f32.mxu0 0.0
  %526 = vmatmul.mubr.f32.gmra.mxu0 %v352
  %v527 = vpop.f32.mrf.mxu0
  %v528 = vadd.f32 %v249, %v527
  %v529 = vpop.f32.mrf.mxu0
  %v530 = vadd.f32 %v251, %v529
  %531 = vdwg.mxu0
  %532 = vmatprep.subr.mxu0 0.0
  %533 = vmatpush1.msra.mxu0 0.0
  %534 = vmatprep.subr.mxu0 0.0
  %535 = vmatpush1.msra.mxu0 0.0
  %536 = vmatprep.subr.mxu0 0.0
  %537 = vmatpush1.msra.mxu0 0.0
  %538 = vmatprep.subr.mxu0 0.0
  %539 = vmatpush1.msra.mxu0 0.0
  %540 = vmatprep.subr.mxu0 0.0
  %541 = vmatpush1.msra.mxu0 0.0
  %542 = vmatprep.subr.mxu0 0.0
  %543 = vmatpush1.msra.mxu0 0.0
  %544 = vmatprep.subr.mxu0 0.0
  %545 = vmatpush1.msra.mxu0 0.0
  %546 = vmatprep.subr.mxu0 0.0
  %547 = vmatpush1.msra.mxu0 0.0
  %548 = vmatprep.subr.mxu0 0.0
  %549 = vmatpush1.msra.mxu0 0.0
  %550 = vmatprep.subr.mxu0 0.0
  %551 = vmatpush1.msra.mxu0 0.0
  %552 = vmatprep.subr.mxu0 0.0
  %553 = vmatpush1.msra.mxu0 0.0
  %554 = vmatprep.subr.mxu0 0.0
  %555 = vmatpush1.msra.mxu0 0.0
  %556 = vmatprep.subr.mxu0 0.0
  %557 = vmatpush1.msra.mxu0 0.0
  %558 = vmatprep.subr.mxu0 0.0
  %559 = vmatpush1.msra.mxu0 0.0
  %560 = vmatprep.subr.mxu0 0.0
  %561 = vmatpush1.msra.mxu0 0.0
  %562 = vmatprep.subr.mxu0 %v28
  %563 = vmatpush1.msra.mxu0 %v27
  %564 = vmatprep.subr.mxu0 0.0
  %565 = vmatpush2.msra.mxu0 0.0
  %566 = vmatprep.subr.mxu0 0.0
  %567 = vmatpush2.msra.mxu0 0.0
  %568 = vmatprep.subr.mxu0 0.0
  %569 = vmatpush2.msra.mxu0 0.0
  %570 = vmatprep.subr.mxu0 0.0
  %571 = vmatpush2.msra.mxu0 0.0
  %572 = vmatprep.subr.mxu0 0.0
  %573 = vmatpush2.msra.mxu0 0.0
  %574 = vmatprep.subr.mxu0 0.0
  %575 = vmatpush2.msra.mxu0 0.0
  %576 = vmatprep.subr.mxu0 0.0
  %577 = vmatpush2.msra.mxu0 0.0
  %578 = vmatprep.subr.mxu0 0.0
  %579 = vmatpush2.msra.mxu0 0.0
  %580 = vmatprep.subr.mxu0 0.0
  %581 = vmatpush2.msra.mxu0 0.0
  %582 = vmatprep.subr.mxu0 0.0
  %583 = vmatpush2.msra.mxu0 0.0
  %584 = vmatprep.subr.mxu0 0.0
  %585 = vmatpush2.msra.mxu0 0.0
  %586 = vmatprep.subr.mxu0 0.0
  %587 = vmatpush2.msra.mxu0 0.0
  %588 = vmatprep.subr.mxu0 0.0
  %589 = vmatpush2.msra.mxu0 0.0
  %590 = vmatprep.subr.mxu0 0.0
  %591 = vmatpush2.msra.mxu0 0.0
  %592 = vmatprep.subr.mxu0 0.0
  %593 = vmatpush2.msra.mxu0 0.0
  %594 = vmatprep.subr.mxu0 0.0
  %595 = vmatpush2.msra.mxu0 0.0
  %596 = vmatprep.mubr.f32.mxu0 0.0
  %597 = vmatmul.mubr.f32.gmra.mxu0 %v343
  %v598 = vpop.f32.mrf.mxu0
  %v599 = vadd.f32 %v320, %v598
  %v600 = vpop.f32.mrf.mxu0
  %v601 = vadd.f32 %v322, %v600
  %602 = vmatprep.mubr.f32.mxu0 0.0
  %603 = vmatmul.mubr.f32.gmra.mxu0 %v346
  %v604 = vpop.f32.mrf.mxu0
  %v605 = vadd.f32 %v326, %v604
  %v606 = vpop.f32.mrf.mxu0
  %v607 = vadd.f32 %v328, %v606
  %608 = vmatprep.mubr.f32.mxu0 0.0
  %609 = vmatmul.mubr.f32.gmra.mxu0 %v349
  %v610 = vpop.f32.mrf.mxu0
  %v611 = vadd.f32 %v332, %v610
  %v612 = vpop.f32.mrf.mxu0
  %v613 = vadd.f32 %v334, %v612
  %614 = vmatprep.mubr.f32.mxu0 0.0
  %615 = vmatmul.mubr.f32.gmra.mxu0 %v352
  %v616 = vpop.f32.mrf.mxu0
  %v617 = vadd.f32 %v338, %v616
  %v618 = vpop.f32.mrf.mxu0
  %v619 = vadd.f32 %v340, %v618
  %620 = vdwg.mxu0
  %621 = vrot.lane.b32.xlu0 %v23, 126
  %v622 = vpop.permute.xlu0 %621
  %623 = vrot.lane.b32.xlu0 %v24, 126
  %v624 = vpop.permute.xlu0 %623
  %625 = vrot.lane.b32.xlu0 %v25, 126
  %v626 = vpop.permute.xlu0 %625
  %627 = vrot.lane.b32.xlu0 %v26, 126
  %v628 = vpop.permute.xlu0 %627
  %629 = vrot.lane.b32.xlu0 %v27, 126
  %v630 = vpop.permute.xlu0 %629
  %631 = vrot.lane.b32.xlu0 %v28, 126
  %v632 = vpop.permute.xlu0 %631
  %633 = vrot.lane.b32.xlu0 %v29, 126
  %v634 = vpop.permute.xlu0 %633
  %vm635 = vcmp.lt.s32.totalorder %v49, 126
  %v636 = vsel %vm635, %v632, %v634
  %v637 = vsel %vm635, %v630, %v632
  %v638 = vsel %vm635, %v628, %v630
  %v639 = vsel %vm635, %v626, %v628
  %v640 = vsel %vm635, %v624, %v626
  %v641 = vsel %vm635, %v622, %v624
  %s642 = scalar_lea.vmem %s1, 64
  %v643 = vld [vmem:[%s642] sm:$0xff]
  %v644 = vld [vmem:[%s642 + $0x8] sm:$0xff]
  %v645 = vld [vmem:[%s642 + $0x10] sm:$0xff]
  %v646 = vld [vmem:[%s642 + $0x18] sm:$0xff]
  %v648 = vsel %vm62, %v643, 0
  %v651 = vsel %vm62, %v644, 0
  %v654 = vsel %vm62, %v645, 0
  %v657 = vsel %vm62, %v646, 0
  %659 = vmatprep.subr.mxu0 0.0
  %660 = vmatpush1.msra.mxu0 0.0
  %661 = vmatprep.subr.mxu0 0.0
  %662 = vmatpush1.msra.mxu0 0.0
  %663 = vmatprep.subr.mxu0 0.0
  %664 = vmatpush1.msra.mxu0 0.0
  %665 = vmatprep.subr.mxu0 0.0
  %666 = vmatpush1.msra.mxu0 0.0
  %667 = vmatprep.subr.mxu0 0.0
  %668 = vmatpush1.msra.mxu0 0.0
  %669 = vmatprep.subr.mxu0 0.0
  %670 = vmatpush1.msra.mxu0 0.0
  %671 = vmatprep.subr.mxu0 0.0
  %672 = vmatpush1.msra.mxu0 0.0
  %673 = vmatprep.subr.mxu0 0.0
  %674 = vmatpush1.msra.mxu0 0.0
  %675 = vmatprep.subr.mxu0 0.0
  %676 = vmatpush1.msra.mxu0 0.0
  %677 = vmatprep.subr.mxu0 0.0
  %678 = vmatpush1.msra.mxu0 0.0
  %679 = vmatprep.subr.mxu0 0.0
  %680 = vmatpush1.msra.mxu0 0.0
  %681 = vmatprep.subr.mxu0 0.0
  %682 = vmatpush1.msra.mxu0 0.0
  %683 = vmatprep.subr.mxu0 0.0
  %684 = vmatpush1.msra.mxu0 0.0
  %685 = vmatprep.subr.mxu0 0.0
  %686 = vmatpush1.msra.mxu0 0.0
  %687 = vmatprep.subr.mxu0 0.0
  %688 = vmatpush1.msra.mxu0 0.0
  %689 = vmatprep.subr.mxu0 %v640
  %690 = vmatpush1.msra.mxu0 %v641
  %691 = vmatprep.subr.mxu0 0.0
  %692 = vmatpush2.msra.mxu0 0.0
  %693 = vmatprep.subr.mxu0 0.0
  %694 = vmatpush2.msra.mxu0 0.0
  %695 = vmatprep.subr.mxu0 0.0
  %696 = vmatpush2.msra.mxu0 0.0
  %697 = vmatprep.subr.mxu0 0.0
  %698 = vmatpush2.msra.mxu0 0.0
  %699 = vmatprep.subr.mxu0 0.0
  %700 = vmatpush2.msra.mxu0 0.0
  %701 = vmatprep.subr.mxu0 0.0
  %702 = vmatpush2.msra.mxu0 0.0
  %703 = vmatprep.subr.mxu0 0.0
  %704 = vmatpush2.msra.mxu0 0.0
  %705 = vmatprep.subr.mxu0 0.0
  %706 = vmatpush2.msra.mxu0 0.0
  %707 = vmatprep.subr.mxu0 0.0
  %708 = vmatpush2.msra.mxu0 0.0
  %709 = vmatprep.subr.mxu0 0.0
  %710 = vmatpush2.msra.mxu0 0.0
  %711 = vmatprep.subr.mxu0 0.0
  %712 = vmatpush2.msra.mxu0 0.0
  %713 = vmatprep.subr.mxu0 0.0
  %714 = vmatpush2.msra.mxu0 0.0
  %715 = vmatprep.subr.mxu0 0.0
  %716 = vmatpush2.msra.mxu0 0.0
  %717 = vmatprep.subr.mxu0 0.0
  %718 = vmatpush2.msra.mxu0 0.0
  %719 = vmatprep.subr.mxu0 0.0
  %720 = vmatpush2.msra.mxu0 0.0
  %721 = vmatprep.subr.mxu0 0.0
  %722 = vmatpush2.msra.mxu0 0.0
  %723 = vmatprep.mubr.f32.mxu0 0.0
  %724 = vmatmul.mubr.f32.gmra.mxu0 %v648
  %v725 = vpop.f32.mrf.mxu0
  %v726 = vadd.f32 0.0, %v725
  %v727 = vpop.f32.mrf.mxu0
  %v728 = vadd.f32 0.0, %v727
  %729 = vmatprep.mubr.f32.mxu0 0.0
  %730 = vmatmul.mubr.f32.gmra.mxu0 %v651
  %v731 = vpop.f32.mrf.mxu0
  %v732 = vadd.f32 0.0, %v731
  %v733 = vpop.f32.mrf.mxu0
  %v734 = vadd.f32 0.0, %v733
  %735 = vmatprep.mubr.f32.mxu0 0.0
  %736 = vmatmul.mubr.f32.gmra.mxu0 %v654
  %v737 = vpop.f32.mrf.mxu0
  %v738 = vadd.f32 0.0, %v737
  %v739 = vpop.f32.mrf.mxu0
  %v740 = vadd.f32 0.0, %v739
  %741 = vmatprep.mubr.f32.mxu0 0.0
  %742 = vmatmul.mubr.f32.gmra.mxu0 %v657
  %v743 = vpop.f32.mrf.mxu0
  %v744 = vadd.f32 0.0, %v743
  %v745 = vpop.f32.mrf.mxu0
  %v746 = vadd.f32 0.0, %v745
  %747 = vdwg.mxu0
  %748 = vmatprep.subr.mxu0 0.0
  %749 = vmatpush1.msra.mxu0 0.0
  %750 = vmatprep.subr.mxu0 0.0
  %751 = vmatpush1.msra.mxu0 0.0
  %752 = vmatprep.subr.mxu0 0.0
  %753 = vmatpush1.msra.mxu0 0.0
  %754 = vmatprep.subr.mxu0 0.0
  %755 = vmatpush1.msra.mxu0 0.0
  %756 = vmatprep.subr.mxu0 0.0
  %757 = vmatpush1.msra.mxu0 0.0
  %758 = vmatprep.subr.mxu0 0.0
  %759 = vmatpush1.msra.mxu0 0.0
  %760 = vmatprep.subr.mxu0 0.0
  %761 = vmatpush1.msra.mxu0 0.0
  %762 = vmatprep.subr.mxu0 0.0
  %763 = vmatpush1.msra.mxu0 0.0
  %764 = vmatprep.subr.mxu0 0.0
  %765 = vmatpush1.msra.mxu0 0.0
  %766 = vmatprep.subr.mxu0 0.0
  %767 = vmatpush1.msra.mxu0 0.0
  %768 = vmatprep.subr.mxu0 0.0
  %769 = vmatpush1.msra.mxu0 0.0
  %770 = vmatprep.subr.mxu0 0.0
  %771 = vmatpush1.msra.mxu0 0.0
  %772 = vmatprep.subr.mxu0 0.0
  %773 = vmatpush1.msra.mxu0 0.0
  %774 = vmatprep.subr.mxu0 0.0
  %775 = vmatpush1.msra.mxu0 0.0
  %776 = vmatprep.subr.mxu0 0.0
  %777 = vmatpush1.msra.mxu0 0.0
  %778 = vmatprep.subr.mxu0 %v638
  %779 = vmatpush1.msra.mxu0 %v639
  %780 = vmatprep.subr.mxu0 0.0
  %781 = vmatpush2.msra.mxu0 0.0
  %782 = vmatprep.subr.mxu0 0.0
  %783 = vmatpush2.msra.mxu0 0.0
  %784 = vmatprep.subr.mxu0 0.0
  %785 = vmatpush2.msra.mxu0 0.0
  %786 = vmatprep.subr.mxu0 0.0
  %787 = vmatpush2.msra.mxu0 0.0
  %788 = vmatprep.subr.mxu0 0.0
  %789 = vmatpush2.msra.mxu0 0.0
  %790 = vmatprep.subr.mxu0 0.0
  %791 = vmatpush2.msra.mxu0 0.0
  %792 = vmatprep.subr.mxu0 0.0
  %793 = vmatpush2.msra.mxu0 0.0
  %794 = vmatprep.subr.mxu0 0.0
  %795 = vmatpush2.msra.mxu0 0.0
  %796 = vmatprep.subr.mxu0 0.0
  %797 = vmatpush2.msra.mxu0 0.0
  %798 = vmatprep.subr.mxu0 0.0
  %799 = vmatpush2.msra.mxu0 0.0
  %800 = vmatprep.subr.mxu0 0.0
  %801 = vmatpush2.msra.mxu0 0.0
  %802 = vmatprep.subr.mxu0 0.0
  %803 = vmatpush2.msra.mxu0 0.0
  %804 = vmatprep.subr.mxu0 0.0
  %805 = vmatpush2.msra.mxu0 0.0
  %806 = vmatprep.subr.mxu0 0.0
  %807 = vmatpush2.msra.mxu0 0.0
  %808 = vmatprep.subr.mxu0 0.0
  %809 = vmatpush2.msra.mxu0 0.0
  %810 = vmatprep.subr.mxu0 0.0
  %811 = vmatpush2.msra.mxu0 0.0
  %812 = vmatprep.mubr.f32.mxu0 0.0
  %813 = vmatmul.mubr.f32.gmra.mxu0 %v648
  %v814 = vpop.f32.mrf.mxu0
  %v815 = vadd.f32 0.0, %v814
  %v816 = vpop.f32.mrf.mxu0
  %v817 = vadd.f32 0.0, %v816
  %818 = vmatprep.mubr.f32.mxu0 0.0
  %819 = vmatmul.mubr.f32.gmra.mxu0 %v651
  %v820 = vpop.f32.mrf.mxu0
  %v821 = vadd.f32 0.0, %v820
  %v822 = vpop.f32.mrf.mxu0
  %v823 = vadd.f32 0.0, %v822
  %824 = vmatprep.mubr.f32.mxu0 0.0
  %825 = vmatmul.mubr.f32.gmra.mxu0 %v654
  %v826 = vpop.f32.mrf.mxu0
  %v827 = vadd.f32 0.0, %v826
  %v828 = vpop.f32.mrf.mxu0
  %v829 = vadd.f32 0.0, %v828
  %830 = vmatprep.mubr.f32.mxu0 0.0
  %831 = vmatmul.mubr.f32.gmra.mxu0 %v657
  %v832 = vpop.f32.mrf.mxu0
  %v833 = vadd.f32 0.0, %v832
  %v834 = vpop.f32.mrf.mxu0
  %v835 = vadd.f32 0.0, %v834
  %836 = vdwg.mxu0
  %837 = vmatprep.subr.mxu0 0.0
  %838 = vmatpush1.msra.mxu0 0.0
  %839 = vmatprep.subr.mxu0 0.0
  %840 = vmatpush1.msra.mxu0 0.0
  %841 = vmatprep.subr.mxu0 0.0
  %842 = vmatpush1.msra.mxu0 0.0
  %843 = vmatprep.subr.mxu0 0.0
  %844 = vmatpush1.msra.mxu0 0.0
  %845 = vmatprep.subr.mxu0 0.0
  %846 = vmatpush1.msra.mxu0 0.0
  %847 = vmatprep.subr.mxu0 0.0
  %848 = vmatpush1.msra.mxu0 0.0
  %849 = vmatprep.subr.mxu0 0.0
  %850 = vmatpush1.msra.mxu0 0.0
  %851 = vmatprep.subr.mxu0 0.0
  %852 = vmatpush1.msra.mxu0 0.0
  %853 = vmatprep.subr.mxu0 0.0
  %854 = vmatpush1.msra.mxu0 0.0
  %855 = vmatprep.subr.mxu0 0.0
  %856 = vmatpush1.msra.mxu0 0.0
  %857 = vmatprep.subr.mxu0 0.0
  %858 = vmatpush1.msra.mxu0 0.0
  %859 = vmatprep.subr.mxu0 0.0
  %860 = vmatpush1.msra.mxu0 0.0
  %861 = vmatprep.subr.mxu0 0.0
  %862 = vmatpush1.msra.mxu0 0.0
  %863 = vmatprep.subr.mxu0 0.0
  %864 = vmatpush1.msra.mxu0 0.0
  %865 = vmatprep.subr.mxu0 0.0
  %866 = vmatpush1.msra.mxu0 0.0
  %867 = vmatprep.subr.mxu0 %v636
  %868 = vmatpush1.msra.mxu0 %v637
  %869 = vmatprep.subr.mxu0 0.0
  %870 = vmatpush2.msra.mxu0 0.0
  %871 = vmatprep.subr.mxu0 0.0
  %872 = vmatpush2.msra.mxu0 0.0
  %873 = vmatprep.subr.mxu0 0.0
  %874 = vmatpush2.msra.mxu0 0.0
  %875 = vmatprep.subr.mxu0 0.0
  %876 = vmatpush2.msra.mxu0 0.0
  %877 = vmatprep.subr.mxu0 0.0
  %878 = vmatpush2.msra.mxu0 0.0
  %879 = vmatprep.subr.mxu0 0.0
  %880 = vmatpush2.msra.mxu0 0.0
  %881 = vmatprep.subr.mxu0 0.0
  %882 = vmatpush2.msra.mxu0 0.0
  %883 = vmatprep.subr.mxu0 0.0
  %884 = vmatpush2.msra.mxu0 0.0
  %885 = vmatprep.subr.mxu0 0.0
  %886 = vmatpush2.msra.mxu0 0.0
  %887 = vmatprep.subr.mxu0 0.0
  %888 = vmatpush2.msra.mxu0 0.0
  %889 = vmatprep.subr.mxu0 0.0
  %890 = vmatpush2.msra.mxu0 0.0
  %891 = vmatprep.subr.mxu0 0.0
  %892 = vmatpush2.msra.mxu0 0.0
  %893 = vmatprep.subr.mxu0 0.0
  %894 = vmatpush2.msra.mxu0 0.0
  %895 = vmatprep.subr.mxu0 0.0
  %896 = vmatpush2.msra.mxu0 0.0
  %897 = vmatprep.subr.mxu0 0.0
  %898 = vmatpush2.msra.mxu0 0.0
  %899 = vmatprep.subr.mxu0 0.0
  %900 = vmatpush2.msra.mxu0 0.0
  %901 = vmatprep.mubr.f32.mxu0 0.0
  %902 = vmatmul.mubr.f32.gmra.mxu0 %v648
  %v903 = vpop.f32.mrf.mxu0
  %v904 = vadd.f32 0.0, %v903
  %v905 = vpop.f32.mrf.mxu0
  %v906 = vadd.f32 0.0, %v905
  %907 = vmatprep.mubr.f32.mxu0 0.0
  %908 = vmatmul.mubr.f32.gmra.mxu0 %v651
  %v909 = vpop.f32.mrf.mxu0
  %v910 = vadd.f32 0.0, %v909
  %v911 = vpop.f32.mrf.mxu0
  %v912 = vadd.f32 0.0, %v911
  %913 = vmatprep.mubr.f32.mxu0 0.0
  %914 = vmatmul.mubr.f32.gmra.mxu0 %v654
  %v915 = vpop.f32.mrf.mxu0
  %v916 = vadd.f32 0.0, %v915
  %v917 = vpop.f32.mrf.mxu0
  %v918 = vadd.f32 0.0, %v917
  %919 = vmatprep.mubr.f32.mxu0 0.0
  %920 = vmatmul.mubr.f32.gmra.mxu0 %v657
  %v921 = vpop.f32.mrf.mxu0
  %v922 = vadd.f32 0.0, %v921
  %v923 = vpop.f32.mrf.mxu0
  %v924 = vadd.f32 0.0, %v923
  %925 = vdwg.mxu0
  %v926 = vadd.f32 %v421, %v726
  %v927 = vadd.f32 %v423, %v728
  %v928 = vadd.f32 %v510, %v815
  %v929 = vadd.f32 %v512, %v817
  %v930 = vadd.f32 %v599, %v904
  %v931 = vadd.f32 %v601, %v906
  %v932 = vadd.f32 %v427, %v732
  %v933 = vadd.f32 %v429, %v734
  %v934 = vadd.f32 %v516, %v821
  %v935 = vadd.f32 %v518, %v823
  %v936 = vadd.f32 %v605, %v910
  %v937 = vadd.f32 %v607, %v912
  %v938 = vadd.f32 %v433, %v738
  %v939 = vadd.f32 %v435, %v740
  %v940 = vadd.f32 %v522, %v827
  %v941 = vadd.f32 %v524, %v829
  %v942 = vadd.f32 %v611, %v916
  %v943 = vadd.f32 %v613, %v918
  %v944 = vadd.f32 %v439, %v744
  %v945 = vadd.f32 %v441, %v746
  %v946 = vadd.f32 %v528, %v833
  %v947 = vadd.f32 %v530, %v835
  %v948 = vadd.f32 %v617, %v922
  %v949 = vadd.f32 %v619, %v924
  %950 = vrot.lane.b32.xlu0 %v23, 110
  %v951 = vpop.permute.xlu0 %950
  %952 = vrot.lane.b32.xlu0 %v24, 110
  %v953 = vpop.permute.xlu0 %952
  %954 = vrot.lane.b32.xlu0 %v25, 110
  %v955 = vpop.permute.xlu0 %954
  %956 = vrot.lane.b32.xlu0 %v26, 110
  %v957 = vpop.permute.xlu0 %956
  %958 = vrot.lane.b32.xlu0 %v27, 110
  %v959 = vpop.permute.xlu0 %958
  %960 = vrot.lane.b32.xlu0 %v28, 110
  %v961 = vpop.permute.xlu0 %960
  %962 = vrot.lane.b32.xlu0 %v29, 110
  %v963 = vpop.permute.xlu0 %962
  %vm964 = vcmp.lt.s32.totalorder %v49, 110
  %v965 = vsel %vm964, %v961, %v963
  %v966 = vsel %vm964, %v959, %v961
  %v967 = vsel %vm964, %v957, %v959
  %v968 = vsel %vm964, %v955, %v957
  %v969 = vsel %vm964, %v953, %v955
  %v970 = vsel %vm964, %v951, %v953
  %s971 = scalar_lea.vmem %s1, 96
  %v972 = vld [vmem:[%s971] sm:$0xff]
  %v973 = vld [vmem:[%s971 + $0x8] sm:$0xff]
  %v974 = vld [vmem:[%s971 + $0x10] sm:$0xff]
  %v975 = vld [vmem:[%s971 + $0x18] sm:$0xff]
  %v977 = vsel %vm62, %v972, 0
  %v980 = vsel %vm62, %v973, 0
  %v983 = vsel %vm62, %v974, 0
  %v986 = vsel %vm62, %v975, 0
  %988 = vmatprep.subr.mxu0 0.0
  %989 = vmatpush1.msra.mxu0 0.0
  %990 = vmatprep.subr.mxu0 0.0
  %991 = vmatpush1.msra.mxu0 0.0
  %992 = vmatprep.subr.mxu0 0.0
  %993 = vmatpush1.msra.mxu0 0.0
  %994 = vmatprep.subr.mxu0 0.0
  %995 = vmatpush1.msra.mxu0 0.0
  %996 = vmatprep.subr.mxu0 0.0
  %997 = vmatpush1.msra.mxu0 0.0
  %998 = vmatprep.subr.mxu0 0.0
  %999 = vmatpush1.msra.mxu0 0.0
  %1000 = vmatprep.subr.mxu0 0.0
  %1001 = vmatpush1.msra.mxu0 0.0
  %1002 = vmatprep.subr.mxu0 0.0
  %1003 = vmatpush1.msra.mxu0 0.0
  %1004 = vmatprep.subr.mxu0 0.0
  %1005 = vmatpush1.msra.mxu0 0.0
  %1006 = vmatprep.subr.mxu0 0.0
  %1007 = vmatpush1.msra.mxu0 0.0
  %1008 = vmatprep.subr.mxu0 0.0
  %1009 = vmatpush1.msra.mxu0 0.0
  %1010 = vmatprep.subr.mxu0 0.0
  %1011 = vmatpush1.msra.mxu0 0.0
  %1012 = vmatprep.subr.mxu0 0.0
  %1013 = vmatpush1.msra.mxu0 0.0
  %1014 = vmatprep.subr.mxu0 0.0
  %1015 = vmatpush1.msra.mxu0 0.0
  %1016 = vmatprep.subr.mxu0 0.0
  %1017 = vmatpush1.msra.mxu0 0.0
  %1018 = vmatprep.subr.mxu0 %v969
  %1019 = vmatpush1.msra.mxu0 %v970
  %1020 = vmatprep.subr.mxu0 0.0
  %1021 = vmatpush2.msra.mxu0 0.0
  %1022 = vmatprep.subr.mxu0 0.0
  %1023 = vmatpush2.msra.mxu0 0.0
  %1024 = vmatprep.subr.mxu0 0.0
  %1025 = vmatpush2.msra.mxu0 0.0
  %1026 = vmatprep.subr.mxu0 0.0
  %1027 = vmatpush2.msra.mxu0 0.0
  %1028 = vmatprep.subr.mxu0 0.0
  %1029 = vmatpush2.msra.mxu0 0.0
  %1030 = vmatprep.subr.mxu0 0.0
  %1031 = vmatpush2.msra.mxu0 0.0
  %1032 = vmatprep.subr.mxu0 0.0
  %1033 = vmatpush2.msra.mxu0 0.0
  %1034 = vmatprep.subr.mxu0 0.0
  %1035 = vmatpush2.msra.mxu0 0.0
  %1036 = vmatprep.subr.mxu0 0.0
  %1037 = vmatpush2.msra.mxu0 0.0
  %1038 = vmatprep.subr.mxu0 0.0
  %1039 = vmatpush2.msra.mxu0 0.0
  %1040 = vmatprep.subr.mxu0 0.0
  %1041 = vmatpush2.msra.mxu0 0.0
  %1042 = vmatprep.subr.mxu0 0.0
  %1043 = vmatpush2.msra.mxu0 0.0
  %1044 = vmatprep.subr.mxu0 0.0
  %1045 = vmatpush2.msra.mxu0 0.0
  %1046 = vmatprep.subr.mxu0 0.0
  %1047 = vmatpush2.msra.mxu0 0.0
  %1048 = vmatprep.subr.mxu0 0.0
  %1049 = vmatpush2.msra.mxu0 0.0
  %1050 = vmatprep.subr.mxu0 0.0
  %1051 = vmatpush2.msra.mxu0 0.0
  %1052 = vmatprep.mubr.f32.mxu0 0.0
  %1053 = vmatmul.mubr.f32.gmra.mxu0 %v977
  %v1054 = vpop.f32.mrf.mxu0
  %v1055 = vadd.f32 0.0, %v1054
  %v1056 = vpop.f32.mrf.mxu0
  %v1057 = vadd.f32 0.0, %v1056
  %1058 = vmatprep.mubr.f32.mxu0 0.0
  %1059 = vmatmul.mubr.f32.gmra.mxu0 %v980
  %v1060 = vpop.f32.mrf.mxu0
  %v1061 = vadd.f32 0.0, %v1060
  %v1062 = vpop.f32.mrf.mxu0
  %v1063 = vadd.f32 0.0, %v1062
  %1064 = vmatprep.mubr.f32.mxu0 0.0
  %1065 = vmatmul.mubr.f32.gmra.mxu0 %v983
  %v1066 = vpop.f32.mrf.mxu0
  %v1067 = vadd.f32 0.0, %v1066
  %v1068 = vpop.f32.mrf.mxu0
  %v1069 = vadd.f32 0.0, %v1068
  %1070 = vmatprep.mubr.f32.mxu0 0.0
  %1071 = vmatmul.mubr.f32.gmra.mxu0 %v986
  %v1072 = vpop.f32.mrf.mxu0
  %v1073 = vadd.f32 0.0, %v1072
  %v1074 = vpop.f32.mrf.mxu0
  %v1075 = vadd.f32 0.0, %v1074
  %1076 = vdwg.mxu0
  %1077 = vmatprep.subr.mxu0 0.0
  %1078 = vmatpush1.msra.mxu0 0.0
  %1079 = vmatprep.subr.mxu0 0.0
  %1080 = vmatpush1.msra.mxu0 0.0
  %1081 = vmatprep.subr.mxu0 0.0
  %1082 = vmatpush1.msra.mxu0 0.0
  %1083 = vmatprep.subr.mxu0 0.0
  %1084 = vmatpush1.msra.mxu0 0.0
  %1085 = vmatprep.subr.mxu0 0.0
  %1086 = vmatpush1.msra.mxu0 0.0
  %1087 = vmatprep.subr.mxu0 0.0
  %1088 = vmatpush1.msra.mxu0 0.0
  %1089 = vmatprep.subr.mxu0 0.0
  %1090 = vmatpush1.msra.mxu0 0.0
  %1091 = vmatprep.subr.mxu0 0.0
  %1092 = vmatpush1.msra.mxu0 0.0
  %1093 = vmatprep.subr.mxu0 0.0
  %1094 = vmatpush1.msra.mxu0 0.0
  %1095 = vmatprep.subr.mxu0 0.0
  %1096 = vmatpush1.msra.mxu0 0.0
  %1097 = vmatprep.subr.mxu0 0.0
  %1098 = vmatpush1.msra.mxu0 0.0
  %1099 = vmatprep.subr.mxu0 0.0
  %1100 = vmatpush1.msra.mxu0 0.0
  %1101 = vmatprep.subr.mxu0 0.0
  %1102 = vmatpush1.msra.mxu0 0.0
  %1103 = vmatprep.subr.mxu0 0.0
  %1104 = vmatpush1.msra.mxu0 0.0
  %1105 = vmatprep.subr.mxu0 0.0
  %1106 = vmatpush1.msra.mxu0 0.0
  %1107 = vmatprep.subr.mxu0 %v967
  %1108 = vmatpush1.msra.mxu0 %v968
  %1109 = vmatprep.subr.mxu0 0.0
  %1110 = vmatpush2.msra.mxu0 0.0
  %1111 = vmatprep.subr.mxu0 0.0
  %1112 = vmatpush2.msra.mxu0 0.0
  %1113 = vmatprep.subr.mxu0 0.0
  %1114 = vmatpush2.msra.mxu0 0.0
  %1115 = vmatprep.subr.mxu0 0.0
  %1116 = vmatpush2.msra.mxu0 0.0
  %1117 = vmatprep.subr.mxu0 0.0
  %1118 = vmatpush2.msra.mxu0 0.0
  %1119 = vmatprep.subr.mxu0 0.0
  %1120 = vmatpush2.msra.mxu0 0.0
  %1121 = vmatprep.subr.mxu0 0.0
  %1122 = vmatpush2.msra.mxu0 0.0
  %1123 = vmatprep.subr.mxu0 0.0
  %1124 = vmatpush2.msra.mxu0 0.0
  %1125 = vmatprep.subr.mxu0 0.0
  %1126 = vmatpush2.msra.mxu0 0.0
  %1127 = vmatprep.subr.mxu0 0.0
  %1128 = vmatpush2.msra.mxu0 0.0
  %1129 = vmatprep.subr.mxu0 0.0
  %1130 = vmatpush2.msra.mxu0 0.0
  %1131 = vmatprep.subr.mxu0 0.0
  %1132 = vmatpush2.msra.mxu0 0.0
  %1133 = vmatprep.subr.mxu0 0.0
  %1134 = vmatpush2.msra.mxu0 0.0
  %1135 = vmatprep.subr.mxu0 0.0
  %1136 = vmatpush2.msra.mxu0 0.0
  %1137 = vmatprep.subr.mxu0 0.0
  %1138 = vmatpush2.msra.mxu0 0.0
  %1139 = vmatprep.subr.mxu0 0.0
  %1140 = vmatpush2.msra.mxu0 0.0
  %1141 = vmatprep.mubr.f32.mxu0 0.0
  %1142 = vmatmul.mubr.f32.gmra.mxu0 %v977
  %v1143 = vpop.f32.mrf.mxu0
  %v1144 = vadd.f32 0.0, %v1143
  %v1145 = vpop.f32.mrf.mxu0
  %v1146 = vadd.f32 0.0, %v1145
  %1147 = vmatprep.mubr.f32.mxu0 0.0
  %1148 = vmatmul.mubr.f32.gmra.mxu0 %v980
  %v1149 = vpop.f32.mrf.mxu0
  %v1150 = vadd.f32 0.0, %v1149
  %v1151 = vpop.f32.mrf.mxu0
  %v1152 = vadd.f32 0.0, %v1151
  %1153 = vmatprep.mubr.f32.mxu0 0.0
  %1154 = vmatmul.mubr.f32.gmra.mxu0 %v983
  %v1155 = vpop.f32.mrf.mxu0
  %v1156 = vadd.f32 0.0, %v1155
  %v1157 = vpop.f32.mrf.mxu0
  %v1158 = vadd.f32 0.0, %v1157
  %1159 = vmatprep.mubr.f32.mxu0 0.0
  %1160 = vmatmul.mubr.f32.gmra.mxu0 %v986
  %v1161 = vpop.f32.mrf.mxu0
  %v1162 = vadd.f32 0.0, %v1161
  %v1163 = vpop.f32.mrf.mxu0
  %v1164 = vadd.f32 0.0, %v1163
  %1165 = vdwg.mxu0
  %1166 = vmatprep.subr.mxu0 0.0
  %1167 = vmatpush1.msra.mxu0 0.0
  %1168 = vmatprep.subr.mxu0 0.0
  %1169 = vmatpush1.msra.mxu0 0.0
  %1170 = vmatprep.subr.mxu0 0.0
  %1171 = vmatpush1.msra.mxu0 0.0
  %1172 = vmatprep.subr.mxu0 0.0
  %1173 = vmatpush1.msra.mxu0 0.0
  %1174 = vmatprep.subr.mxu0 0.0
  %1175 = vmatpush1.msra.mxu0 0.0
  %1176 = vmatprep.subr.mxu0 0.0
  %1177 = vmatpush1.msra.mxu0 0.0
  %1178 = vmatprep.subr.mxu0 0.0
  %1179 = vmatpush1.msra.mxu0 0.0
  %1180 = vmatprep.subr.mxu0 0.0
  %1181 = vmatpush1.msra.mxu0 0.0
  %1182 = vmatprep.subr.mxu0 0.0
  %1183 = vmatpush1.msra.mxu0 0.0
  %1184 = vmatprep.subr.mxu0 0.0
  %1185 = vmatpush1.msra.mxu0 0.0
  %1186 = vmatprep.subr.mxu0 0.0
  %1187 = vmatpush1.msra.mxu0 0.0
  %1188 = vmatprep.subr.mxu0 0.0
  %1189 = vmatpush1.msra.mxu0 0.0
  %1190 = vmatprep.subr.mxu0 0.0
  %1191 = vmatpush1.msra.mxu0 0.0
  %1192 = vmatprep.subr.mxu0 0.0
  %1193 = vmatpush1.msra.mxu0 0.0
  %1194 = vmatprep.subr.mxu0 0.0
  %1195 = vmatpush1.msra.mxu0 0.0
  %1196 = vmatprep.subr.mxu0 %v965
  %1197 = vmatpush1.msra.mxu0 %v966
  %1198 = vmatprep.subr.mxu0 0.0
  %1199 = vmatpush2.msra.mxu0 0.0
  %1200 = vmatprep.subr.mxu0 0.0
  %1201 = vmatpush2.msra.mxu0 0.0
  %1202 = vmatprep.subr.mxu0 0.0
  %1203 = vmatpush2.msra.mxu0 0.0
  %1204 = vmatprep.subr.mxu0 0.0
  %1205 = vmatpush2.msra.mxu0 0.0
  %1206 = vmatprep.subr.mxu0 0.0
  %1207 = vmatpush2.msra.mxu0 0.0
  %1208 = vmatprep.subr.mxu0 0.0
  %1209 = vmatpush2.msra.mxu0 0.0
  %1210 = vmatprep.subr.mxu0 0.0
  %1211 = vmatpush2.msra.mxu0 0.0
  %1212 = vmatprep.subr.mxu0 0.0
  %1213 = vmatpush2.msra.mxu0 0.0
  %1214 = vmatprep.subr.mxu0 0.0
  %1215 = vmatpush2.msra.mxu0 0.0
  %1216 = vmatprep.subr.mxu0 0.0
  %1217 = vmatpush2.msra.mxu0 0.0
  %1218 = vmatprep.subr.mxu0 0.0
  %1219 = vmatpush2.msra.mxu0 0.0
  %1220 = vmatprep.subr.mxu0 0.0
  %1221 = vmatpush2.msra.mxu0 0.0
  %1222 = vmatprep.subr.mxu0 0.0
  %1223 = vmatpush2.msra.mxu0 0.0
  %1224 = vmatprep.subr.mxu0 0.0
  %1225 = vmatpush2.msra.mxu0 0.0
  %1226 = vmatprep.subr.mxu0 0.0
  %1227 = vmatpush2.msra.mxu0 0.0
  %1228 = vmatprep.subr.mxu0 0.0
  %1229 = vmatpush2.msra.mxu0 0.0
  %1230 = vmatprep.mubr.f32.mxu0 0.0
  %1231 = vmatmul.mubr.f32.gmra.mxu0 %v977
  %v1232 = vpop.f32.mrf.mxu0
  %v1233 = vadd.f32 0.0, %v1232
  %v1234 = vpop.f32.mrf.mxu0
  %v1235 = vadd.f32 0.0, %v1234
  %1236 = vmatprep.mubr.f32.mxu0 0.0
  %1237 = vmatmul.mubr.f32.gmra.mxu0 %v980
  %v1238 = vpop.f32.mrf.mxu0
  %v1239 = vadd.f32 0.0, %v1238
  %v1240 = vpop.f32.mrf.mxu0
  %v1241 = vadd.f32 0.0, %v1240
  %1242 = vmatprep.mubr.f32.mxu0 0.0
  %1243 = vmatmul.mubr.f32.gmra.mxu0 %v983
  %v1244 = vpop.f32.mrf.mxu0
  %v1245 = vadd.f32 0.0, %v1244
  %v1246 = vpop.f32.mrf.mxu0
  %v1247 = vadd.f32 0.0, %v1246
  %1248 = vmatprep.mubr.f32.mxu0 0.0
  %1249 = vmatmul.mubr.f32.gmra.mxu0 %v986
  %v1250 = vpop.f32.mrf.mxu0
  %v1251 = vadd.f32 0.0, %v1250
  %v1252 = vpop.f32.mrf.mxu0
  %v1253 = vadd.f32 0.0, %v1252
  %1254 = vdwg.mxu0
  %v1255 = vadd.f32 %v926, %v1055
  %v1256 = vadd.f32 %v927, %v1057
  %v1257 = vadd.f32 %v928, %v1144
  %v1258 = vadd.f32 %v929, %v1146
  %v1259 = vadd.f32 %v930, %v1233
  %v1260 = vadd.f32 %v931, %v1235
  %v1261 = vadd.f32 %v932, %v1061
  %v1262 = vadd.f32 %v933, %v1063
  %v1263 = vadd.f32 %v934, %v1150
  %v1264 = vadd.f32 %v935, %v1152
  %v1265 = vadd.f32 %v936, %v1239
  %v1266 = vadd.f32 %v937, %v1241
  %v1267 = vadd.f32 %v938, %v1067
  %v1268 = vadd.f32 %v939, %v1069
  %v1269 = vadd.f32 %v940, %v1156
  %v1270 = vadd.f32 %v941, %v1158
  %v1271 = vadd.f32 %v942, %v1245
  %v1272 = vadd.f32 %v943, %v1247
  %v1273 = vadd.f32 %v944, %v1073
  %v1274 = vadd.f32 %v945, %v1075
  %v1275 = vadd.f32 %v946, %v1162
  %v1276 = vadd.f32 %v947, %v1164
  %v1277 = vadd.f32 %v948, %v1251
  %v1278 = vadd.f32 %v949, %v1253
  %1279 = vrot.lane.b32.xlu0 %v23, 109
  %v1280 = vpop.permute.xlu0 %1279
  %1281 = vrot.lane.b32.xlu0 %v24, 109
  %v1282 = vpop.permute.xlu0 %1281
  %1283 = vrot.lane.b32.xlu0 %v25, 109
  %v1284 = vpop.permute.xlu0 %1283
  %1285 = vrot.lane.b32.xlu0 %v26, 109
  %v1286 = vpop.permute.xlu0 %1285
  %1287 = vrot.lane.b32.xlu0 %v27, 109
  %v1288 = vpop.permute.xlu0 %1287
  %1289 = vrot.lane.b32.xlu0 %v28, 109
  %v1290 = vpop.permute.xlu0 %1289
  %1291 = vrot.lane.b32.xlu0 %v29, 109
  %v1292 = vpop.permute.xlu0 %1291
  %vm1293 = vcmp.lt.s32.totalorder %v49, 109
  %v1294 = vsel %vm1293, %v1290, %v1292
  %v1295 = vsel %vm1293, %v1288, %v1290
  %v1296 = vsel %vm1293, %v1286, %v1288
  %v1297 = vsel %vm1293, %v1284, %v1286
  %v1298 = vsel %vm1293, %v1282, %v1284
  %v1299 = vsel %vm1293, %v1280, %v1282
  %s1300 = scalar_lea.vmem %s1, 128
  %v1301 = vld [vmem:[%s1300] sm:$0xff]
  %v1302 = vld [vmem:[%s1300 + $0x8] sm:$0xff]
  %v1303 = vld [vmem:[%s1300 + $0x10] sm:$0xff]
  %v1304 = vld [vmem:[%s1300 + $0x18] sm:$0xff]
  %v1306 = vsel %vm62, %v1301, 0
  %v1309 = vsel %vm62, %v1302, 0
  %v1312 = vsel %vm62, %v1303, 0
  %v1315 = vsel %vm62, %v1304, 0
  %1317 = vmatprep.subr.mxu0 0.0
  %1318 = vmatpush1.msra.mxu0 0.0
  %1319 = vmatprep.subr.mxu0 0.0
  %1320 = vmatpush1.msra.mxu0 0.0
  %1321 = vmatprep.subr.mxu0 0.0
  %1322 = vmatpush1.msra.mxu0 0.0
  %1323 = vmatprep.subr.mxu0 0.0
  %1324 = vmatpush1.msra.mxu0 0.0
  %1325 = vmatprep.subr.mxu0 0.0
  %1326 = vmatpush1.msra.mxu0 0.0
  %1327 = vmatprep.subr.mxu0 0.0
  %1328 = vmatpush1.msra.mxu0 0.0
  %1329 = vmatprep.subr.mxu0 0.0
  %1330 = vmatpush1.msra.mxu0 0.0
  %1331 = vmatprep.subr.mxu0 0.0
  %1332 = vmatpush1.msra.mxu0 0.0
  %1333 = vmatprep.subr.mxu0 0.0
  %1334 = vmatpush1.msra.mxu0 0.0
  %1335 = vmatprep.subr.mxu0 0.0
  %1336 = vmatpush1.msra.mxu0 0.0
  %1337 = vmatprep.subr.mxu0 0.0
  %1338 = vmatpush1.msra.mxu0 0.0
  %1339 = vmatprep.subr.mxu0 0.0
  %1340 = vmatpush1.msra.mxu0 0.0
  %1341 = vmatprep.subr.mxu0 0.0
  %1342 = vmatpush1.msra.mxu0 0.0
  %1343 = vmatprep.subr.mxu0 0.0
  %1344 = vmatpush1.msra.mxu0 0.0
  %1345 = vmatprep.subr.mxu0 0.0
  %1346 = vmatpush1.msra.mxu0 0.0
  %1347 = vmatprep.subr.mxu0 %v1298
  %1348 = vmatpush1.msra.mxu0 %v1299
  %1349 = vmatprep.subr.mxu0 0.0
  %1350 = vmatpush2.msra.mxu0 0.0
  %1351 = vmatprep.subr.mxu0 0.0
  %1352 = vmatpush2.msra.mxu0 0.0
  %1353 = vmatprep.subr.mxu0 0.0
  %1354 = vmatpush2.msra.mxu0 0.0
  %1355 = vmatprep.subr.mxu0 0.0
  %1356 = vmatpush2.msra.mxu0 0.0
  %1357 = vmatprep.subr.mxu0 0.0
  %1358 = vmatpush2.msra.mxu0 0.0
  %1359 = vmatprep.subr.mxu0 0.0
  %1360 = vmatpush2.msra.mxu0 0.0
  %1361 = vmatprep.subr.mxu0 0.0
  %1362 = vmatpush2.msra.mxu0 0.0
  %1363 = vmatprep.subr.mxu0 0.0
  %1364 = vmatpush2.msra.mxu0 0.0
  %1365 = vmatprep.subr.mxu0 0.0
  %1366 = vmatpush2.msra.mxu0 0.0
  %1367 = vmatprep.subr.mxu0 0.0
  %1368 = vmatpush2.msra.mxu0 0.0
  %1369 = vmatprep.subr.mxu0 0.0
  %1370 = vmatpush2.msra.mxu0 0.0
  %1371 = vmatprep.subr.mxu0 0.0
  %1372 = vmatpush2.msra.mxu0 0.0
  %1373 = vmatprep.subr.mxu0 0.0
  %1374 = vmatpush2.msra.mxu0 0.0
  %1375 = vmatprep.subr.mxu0 0.0
  %1376 = vmatpush2.msra.mxu0 0.0
  %1377 = vmatprep.subr.mxu0 0.0
  %1378 = vmatpush2.msra.mxu0 0.0
  %1379 = vmatprep.subr.mxu0 0.0
  %1380 = vmatpush2.msra.mxu0 0.0
  %1381 = vmatprep.mubr.f32.mxu0 0.0
  %1382 = vmatmul.mubr.f32.gmra.mxu0 %v1306
  %v1383 = vpop.f32.mrf.mxu0
  %v1384 = vadd.f32 0.0, %v1383
  %v1385 = vpop.f32.mrf.mxu0
  %v1386 = vadd.f32 0.0, %v1385
  %1387 = vmatprep.mubr.f32.mxu0 0.0
  %1388 = vmatmul.mubr.f32.gmra.mxu0 %v1309
  %v1389 = vpop.f32.mrf.mxu0
  %v1390 = vadd.f32 0.0, %v1389
  %v1391 = vpop.f32.mrf.mxu0
  %v1392 = vadd.f32 0.0, %v1391
  %1393 = vmatprep.mubr.f32.mxu0 0.0
  %1394 = vmatmul.mubr.f32.gmra.mxu0 %v1312
  %v1395 = vpop.f32.mrf.mxu0
  %v1396 = vadd.f32 0.0, %v1395
  %v1397 = vpop.f32.mrf.mxu0
  %v1398 = vadd.f32 0.0, %v1397
  %1399 = vmatprep.mubr.f32.mxu0 0.0
  %1400 = vmatmul.mubr.f32.gmra.mxu0 %v1315
  %v1401 = vpop.f32.mrf.mxu0
  %v1402 = vadd.f32 0.0, %v1401
  %v1403 = vpop.f32.mrf.mxu0
  %v1404 = vadd.f32 0.0, %v1403
  %1405 = vdwg.mxu0
  %1406 = vmatprep.subr.mxu0 0.0
  %1407 = vmatpush1.msra.mxu0 0.0
  %1408 = vmatprep.subr.mxu0 0.0
  %1409 = vmatpush1.msra.mxu0 0.0
  %1410 = vmatprep.subr.mxu0 0.0
  %1411 = vmatpush1.msra.mxu0 0.0
  %1412 = vmatprep.subr.mxu0 0.0
  %1413 = vmatpush1.msra.mxu0 0.0
  %1414 = vmatprep.subr.mxu0 0.0
  %1415 = vmatpush1.msra.mxu0 0.0
  %1416 = vmatprep.subr.mxu0 0.0
  %1417 = vmatpush1.msra.mxu0 0.0
  %1418 = vmatprep.subr.mxu0 0.0
  %1419 = vmatpush1.msra.mxu0 0.0
  %1420 = vmatprep.subr.mxu0 0.0
  %1421 = vmatpush1.msra.mxu0 0.0
  %1422 = vmatprep.subr.mxu0 0.0
  %1423 = vmatpush1.msra.mxu0 0.0
  %1424 = vmatprep.subr.mxu0 0.0
  %1425 = vmatpush1.msra.mxu0 0.0
  %1426 = vmatprep.subr.mxu0 0.0
  %1427 = vmatpush1.msra.mxu0 0.0
  %1428 = vmatprep.subr.mxu0 0.0
  %1429 = vmatpush1.msra.mxu0 0.0
  %1430 = vmatprep.subr.mxu0 0.0
  %1431 = vmatpush1.msra.mxu0 0.0
  %1432 = vmatprep.subr.mxu0 0.0
  %1433 = vmatpush1.msra.mxu0 0.0
  %1434 = vmatprep.subr.mxu0 0.0
  %1435 = vmatpush1.msra.mxu0 0.0
  %1436 = vmatprep.subr.mxu0 %v1296
  %1437 = vmatpush1.msra.mxu0 %v1297
  %1438 = vmatprep.subr.mxu0 0.0
  %1439 = vmatpush2.msra.mxu0 0.0
  %1440 = vmatprep.subr.mxu0 0.0
  %1441 = vmatpush2.msra.mxu0 0.0
  %1442 = vmatprep.subr.mxu0 0.0
  %1443 = vmatpush2.msra.mxu0 0.0
  %1444 = vmatprep.subr.mxu0 0.0
  %1445 = vmatpush2.msra.mxu0 0.0
  %1446 = vmatprep.subr.mxu0 0.0
  %1447 = vmatpush2.msra.mxu0 0.0
  %1448 = vmatprep.subr.mxu0 0.0
  %1449 = vmatpush2.msra.mxu0 0.0
  %1450 = vmatprep.subr.mxu0 0.0
  %1451 = vmatpush2.msra.mxu0 0.0
  %1452 = vmatprep.subr.mxu0 0.0
  %1453 = vmatpush2.msra.mxu0 0.0
  %1454 = vmatprep.subr.mxu0 0.0
  %1455 = vmatpush2.msra.mxu0 0.0
  %1456 = vmatprep.subr.mxu0 0.0
  %1457 = vmatpush2.msra.mxu0 0.0
  %1458 = vmatprep.subr.mxu0 0.0
  %1459 = vmatpush2.msra.mxu0 0.0
  %1460 = vmatprep.subr.mxu0 0.0
  %1461 = vmatpush2.msra.mxu0 0.0
  %1462 = vmatprep.subr.mxu0 0.0
  %1463 = vmatpush2.msra.mxu0 0.0
  %1464 = vmatprep.subr.mxu0 0.0
  %1465 = vmatpush2.msra.mxu0 0.0
  %1466 = vmatprep.subr.mxu0 0.0
  %1467 = vmatpush2.msra.mxu0 0.0
  %1468 = vmatprep.subr.mxu0 0.0
  %1469 = vmatpush2.msra.mxu0 0.0
  %1470 = vmatprep.mubr.f32.mxu0 0.0
  %1471 = vmatmul.mubr.f32.gmra.mxu0 %v1306
  %v1472 = vpop.f32.mrf.mxu0
  %v1473 = vadd.f32 0.0, %v1472
  %v1474 = vpop.f32.mrf.mxu0
  %v1475 = vadd.f32 0.0, %v1474
  %1476 = vmatprep.mubr.f32.mxu0 0.0
  %1477 = vmatmul.mubr.f32.gmra.mxu0 %v1309
  %v1478 = vpop.f32.mrf.mxu0
  %v1479 = vadd.f32 0.0, %v1478
  %v1480 = vpop.f32.mrf.mxu0
  %v1481 = vadd.f32 0.0, %v1480
  %1482 = vmatprep.mubr.f32.mxu0 0.0
  %1483 = vmatmul.mubr.f32.gmra.mxu0 %v1312
  %v1484 = vpop.f32.mrf.mxu0
  %v1485 = vadd.f32 0.0, %v1484
  %v1486 = vpop.f32.mrf.mxu0
  %v1487 = vadd.f32 0.0, %v1486
  %1488 = vmatprep.mubr.f32.mxu0 0.0
  %1489 = vmatmul.mubr.f32.gmra.mxu0 %v1315
  %v1490 = vpop.f32.mrf.mxu0
  %v1491 = vadd.f32 0.0, %v1490
  %v1492 = vpop.f32.mrf.mxu0
  %v1493 = vadd.f32 0.0, %v1492
  %1494 = vdwg.mxu0
  %1495 = vmatprep.subr.mxu0 0.0
  %1496 = vmatpush1.msra.mxu0 0.0
  %1497 = vmatprep.subr.mxu0 0.0
  %1498 = vmatpush1.msra.mxu0 0.0
  %1499 = vmatprep.subr.mxu0 0.0
  %1500 = vmatpush1.msra.mxu0 0.0
  %1501 = vmatprep.subr.mxu0 0.0
  %1502 = vmatpush1.msra.mxu0 0.0
  %1503 = vmatprep.subr.mxu0 0.0
  %1504 = vmatpush1.msra.mxu0 0.0
  %1505 = vmatprep.subr.mxu0 0.0
  %1506 = vmatpush1.msra.mxu0 0.0
  %1507 = vmatprep.subr.mxu0 0.0
  %1508 = vmatpush1.msra.mxu0 0.0
  %1509 = vmatprep.subr.mxu0 0.0
  %1510 = vmatpush1.msra.mxu0 0.0
  %1511 = vmatprep.subr.mxu0 0.0
  %1512 = vmatpush1.msra.mxu0 0.0
  %1513 = vmatprep.subr.mxu0 0.0
  %1514 = vmatpush1.msra.mxu0 0.0
  %1515 = vmatprep.subr.mxu0 0.0
  %1516 = vmatpush1.msra.mxu0 0.0
  %1517 = vmatprep.subr.mxu0 0.0
  %1518 = vmatpush1.msra.mxu0 0.0
  %1519 = vmatprep.subr.mxu0 0.0
  %1520 = vmatpush1.msra.mxu0 0.0
  %1521 = vmatprep.subr.mxu0 0.0
  %1522 = vmatpush1.msra.mxu0 0.0
  %1523 = vmatprep.subr.mxu0 0.0
  %1524 = vmatpush1.msra.mxu0 0.0
  %1525 = vmatprep.subr.mxu0 %v1294
  %1526 = vmatpush1.msra.mxu0 %v1295
  %1527 = vmatprep.subr.mxu0 0.0
  %1528 = vmatpush2.msra.mxu0 0.0
  %1529 = vmatprep.subr.mxu0 0.0
  %1530 = vmatpush2.msra.mxu0 0.0
  %1531 = vmatprep.subr.mxu0 0.0
  %1532 = vmatpush2.msra.mxu0 0.0
  %1533 = vmatprep.subr.mxu0 0.0
  %1534 = vmatpush2.msra.mxu0 0.0
  %1535 = vmatprep.subr.mxu0 0.0
  %1536 = vmatpush2.msra.mxu0 0.0
  %1537 = vmatprep.subr.mxu0 0.0
  %1538 = vmatpush2.msra.mxu0 0.0
  %1539 = vmatprep.subr.mxu0 0.0
  %1540 = vmatpush2.msra.mxu0 0.0
  %1541 = vmatprep.subr.mxu0 0.0
  %1542 = vmatpush2.msra.mxu0 0.0
  %1543 = vmatprep.subr.mxu0 0.0
  %1544 = vmatpush2.msra.mxu0 0.0
  %1545 = vmatprep.subr.mxu0 0.0
  %1546 = vmatpush2.msra.mxu0 0.0
  %1547 = vmatprep.subr.mxu0 0.0
  %1548 = vmatpush2.msra.mxu0 0.0
  %1549 = vmatprep.subr.mxu0 0.0
  %1550 = vmatpush2.msra.mxu0 0.0
  %1551 = vmatprep.subr.mxu0 0.0
  %1552 = vmatpush2.msra.mxu0 0.0
  %1553 = vmatprep.subr.mxu0 0.0
  %1554 = vmatpush2.msra.mxu0 0.0
  %1555 = vmatprep.subr.mxu0 0.0
  %1556 = vmatpush2.msra.mxu0 0.0
  %1557 = vmatprep.subr.mxu0 0.0
  %1558 = vmatpush2.msra.mxu0 0.0
  %1559 = vmatprep.mubr.f32.mxu0 0.0
  %1560 = vmatmul.mubr.f32.gmra.mxu0 %v1306
  %v1561 = vpop.f32.mrf.mxu0
  %v1562 = vadd.f32 0.0, %v1561
  %v1563 = vpop.f32.mrf.mxu0
  %v1564 = vadd.f32 0.0, %v1563
  %1565 = vmatprep.mubr.f32.mxu0 0.0
  %1566 = vmatmul.mubr.f32.gmra.mxu0 %v1309
  %v1567 = vpop.f32.mrf.mxu0
  %v1568 = vadd.f32 0.0, %v1567
  %v1569 = vpop.f32.mrf.mxu0
  %v1570 = vadd.f32 0.0, %v1569
  %1571 = vmatprep.mubr.f32.mxu0 0.0
  %1572 = vmatmul.mubr.f32.gmra.mxu0 %v1312
  %v1573 = vpop.f32.mrf.mxu0
  %v1574 = vadd.f32 0.0, %v1573
  %v1575 = vpop.f32.mrf.mxu0
  %v1576 = vadd.f32 0.0, %v1575
  %1577 = vmatprep.mubr.f32.mxu0 0.0
  %1578 = vmatmul.mubr.f32.gmra.mxu0 %v1315
  %v1579 = vpop.f32.mrf.mxu0
  %v1580 = vadd.f32 0.0, %v1579
  %v1581 = vpop.f32.mrf.mxu0
  %v1582 = vadd.f32 0.0, %v1581
  %1583 = vdwg.mxu0
  %v1584 = vadd.f32 %v1255, %v1384
  %v1585 = vadd.f32 %v1256, %v1386
  %v1586 = vadd.f32 %v1257, %v1473
  %v1587 = vadd.f32 %v1258, %v1475
  %v1588 = vadd.f32 %v1259, %v1562
  %v1589 = vadd.f32 %v1260, %v1564
  %v1590 = vadd.f32 %v1261, %v1390
  %v1591 = vadd.f32 %v1262, %v1392
  %v1592 = vadd.f32 %v1263, %v1479
  %v1593 = vadd.f32 %v1264, %v1481
  %v1594 = vadd.f32 %v1265, %v1568
  %v1595 = vadd.f32 %v1266, %v1570
  %v1596 = vadd.f32 %v1267, %v1396
  %v1597 = vadd.f32 %v1268, %v1398
  %v1598 = vadd.f32 %v1269, %v1485
  %v1599 = vadd.f32 %v1270, %v1487
  %v1600 = vadd.f32 %v1271, %v1574
  %v1601 = vadd.f32 %v1272, %v1576
  %v1602 = vadd.f32 %v1273, %v1402
  %v1603 = vadd.f32 %v1274, %v1404
  %v1604 = vadd.f32 %v1275, %v1491
  %v1605 = vadd.f32 %v1276, %v1493
  %v1606 = vadd.f32 %v1277, %v1580
  %v1607 = vadd.f32 %v1278, %v1582
  %1608 = vrot.lane.b32.xlu0 %v23, 108
  %v1609 = vpop.permute.xlu0 %1608
  %1610 = vrot.lane.b32.xlu0 %v24, 108
  %v1611 = vpop.permute.xlu0 %1610
  %1612 = vrot.lane.b32.xlu0 %v25, 108
  %v1613 = vpop.permute.xlu0 %1612
  %1614 = vrot.lane.b32.xlu0 %v26, 108
  %v1615 = vpop.permute.xlu0 %1614
  %1616 = vrot.lane.b32.xlu0 %v27, 108
  %v1617 = vpop.permute.xlu0 %1616
  %1618 = vrot.lane.b32.xlu0 %v28, 108
  %v1619 = vpop.permute.xlu0 %1618
  %1620 = vrot.lane.b32.xlu0 %v29, 108
  %v1621 = vpop.permute.xlu0 %1620
  %vm1622 = vcmp.lt.s32.totalorder %v49, 108
  %v1623 = vsel %vm1622, %v1619, %v1621
  %v1624 = vsel %vm1622, %v1617, %v1619
  %v1625 = vsel %vm1622, %v1615, %v1617
  %v1626 = vsel %vm1622, %v1613, %v1615
  %v1627 = vsel %vm1622, %v1611, %v1613
  %v1628 = vsel %vm1622, %v1609, %v1611
  %s1629 = scalar_lea.vmem %s1, 160
  %v1630 = vld [vmem:[%s1629] sm:$0xff]
  %v1631 = vld [vmem:[%s1629 + $0x8] sm:$0xff]
  %v1632 = vld [vmem:[%s1629 + $0x10] sm:$0xff]
  %v1633 = vld [vmem:[%s1629 + $0x18] sm:$0xff]
  %v1635 = vsel %vm62, %v1630, 0
  %v1638 = vsel %vm62, %v1631, 0
  %v1641 = vsel %vm62, %v1632, 0
  %v1644 = vsel %vm62, %v1633, 0
  %1646 = vmatprep.subr.mxu0 0.0
  %1647 = vmatpush1.msra.mxu0 0.0
  %1648 = vmatprep.subr.mxu0 0.0
  %1649 = vmatpush1.msra.mxu0 0.0
  %1650 = vmatprep.subr.mxu0 0.0
  %1651 = vmatpush1.msra.mxu0 0.0
  %1652 = vmatprep.subr.mxu0 0.0
  %1653 = vmatpush1.msra.mxu0 0.0
  %1654 = vmatprep.subr.mxu0 0.0
  %1655 = vmatpush1.msra.mxu0 0.0
  %1656 = vmatprep.subr.mxu0 0.0
  %1657 = vmatpush1.msra.mxu0 0.0
  %1658 = vmatprep.subr.mxu0 0.0
  %1659 = vmatpush1.msra.mxu0 0.0
  %1660 = vmatprep.subr.mxu0 0.0
  %1661 = vmatpush1.msra.mxu0 0.0
  %1662 = vmatprep.subr.mxu0 0.0
  %1663 = vmatpush1.msra.mxu0 0.0
  %1664 = vmatprep.subr.mxu0 0.0
  %1665 = vmatpush1.msra.mxu0 0.0
  %1666 = vmatprep.subr.mxu0 0.0
  %1667 = vmatpush1.msra.mxu0 0.0
  %1668 = vmatprep.subr.mxu0 0.0
  %1669 = vmatpush1.msra.mxu0 0.0
  %1670 = vmatprep.subr.mxu0 0.0
  %1671 = vmatpush1.msra.mxu0 0.0
  %1672 = vmatprep.subr.mxu0 0.0
  %1673 = vmatpush1.msra.mxu0 0.0
  %1674 = vmatprep.subr.mxu0 0.0
  %1675 = vmatpush1.msra.mxu0 0.0
  %1676 = vmatprep.subr.mxu0 %v1627
  %1677 = vmatpush1.msra.mxu0 %v1628
  %1678 = vmatprep.subr.mxu0 0.0
  %1679 = vmatpush2.msra.mxu0 0.0
  %1680 = vmatprep.subr.mxu0 0.0
  %1681 = vmatpush2.msra.mxu0 0.0
  %1682 = vmatprep.subr.mxu0 0.0
  %1683 = vmatpush2.msra.mxu0 0.0
  %1684 = vmatprep.subr.mxu0 0.0
  %1685 = vmatpush2.msra.mxu0 0.0
  %1686 = vmatprep.subr.mxu0 0.0
  %1687 = vmatpush2.msra.mxu0 0.0
  %1688 = vmatprep.subr.mxu0 0.0
  %1689 = vmatpush2.msra.mxu0 0.0
  %1690 = vmatprep.subr.mxu0 0.0
  %1691 = vmatpush2.msra.mxu0 0.0
  %1692 = vmatprep.subr.mxu0 0.0
  %1693 = vmatpush2.msra.mxu0 0.0
  %1694 = vmatprep.subr.mxu0 0.0
  %1695 = vmatpush2.msra.mxu0 0.0
  %1696 = vmatprep.subr.mxu0 0.0
  %1697 = vmatpush2.msra.mxu0 0.0
  %1698 = vmatprep.subr.mxu0 0.0
  %1699 = vmatpush2.msra.mxu0 0.0
  %1700 = vmatprep.subr.mxu0 0.0
  %1701 = vmatpush2.msra.mxu0 0.0
  %1702 = vmatprep.subr.mxu0 0.0
  %1703 = vmatpush2.msra.mxu0 0.0
  %1704 = vmatprep.subr.mxu0 0.0
  %1705 = vmatpush2.msra.mxu0 0.0
  %1706 = vmatprep.subr.mxu0 0.0
  %1707 = vmatpush2.msra.mxu0 0.0
  %1708 = vmatprep.subr.mxu0 0.0
  %1709 = vmatpush2.msra.mxu0 0.0
  %1710 = vmatprep.mubr.f32.mxu0 0.0
  %1711 = vmatmul.mubr.f32.gmra.mxu0 %v1635
  %v1712 = vpop.f32.mrf.mxu0
  %v1713 = vadd.f32 0.0, %v1712
  %v1714 = vpop.f32.mrf.mxu0
  %v1715 = vadd.f32 0.0, %v1714
  %1716 = vmatprep.mubr.f32.mxu0 0.0
  %1717 = vmatmul.mubr.f32.gmra.mxu0 %v1638
  %v1718 = vpop.f32.mrf.mxu0
  %v1719 = vadd.f32 0.0, %v1718
  %v1720 = vpop.f32.mrf.mxu0
  %v1721 = vadd.f32 0.0, %v1720
  %1722 = vmatprep.mubr.f32.mxu0 0.0
  %1723 = vmatmul.mubr.f32.gmra.mxu0 %v1641
  %v1724 = vpop.f32.mrf.mxu0
  %v1725 = vadd.f32 0.0, %v1724
  %v1726 = vpop.f32.mrf.mxu0
  %v1727 = vadd.f32 0.0, %v1726
  %1728 = vmatprep.mubr.f32.mxu0 0.0
  %1729 = vmatmul.mubr.f32.gmra.mxu0 %v1644
  %v1730 = vpop.f32.mrf.mxu0
  %v1731 = vadd.f32 0.0, %v1730
  %v1732 = vpop.f32.mrf.mxu0
  %v1733 = vadd.f32 0.0, %v1732
  %1734 = vdwg.mxu0
  %1735 = vmatprep.subr.mxu0 0.0
  %1736 = vmatpush1.msra.mxu0 0.0
  %1737 = vmatprep.subr.mxu0 0.0
  %1738 = vmatpush1.msra.mxu0 0.0
  %1739 = vmatprep.subr.mxu0 0.0
  %1740 = vmatpush1.msra.mxu0 0.0
  %1741 = vmatprep.subr.mxu0 0.0
  %1742 = vmatpush1.msra.mxu0 0.0
  %1743 = vmatprep.subr.mxu0 0.0
  %1744 = vmatpush1.msra.mxu0 0.0
  %1745 = vmatprep.subr.mxu0 0.0
  %1746 = vmatpush1.msra.mxu0 0.0
  %1747 = vmatprep.subr.mxu0 0.0
  %1748 = vmatpush1.msra.mxu0 0.0
  %1749 = vmatprep.subr.mxu0 0.0
  %1750 = vmatpush1.msra.mxu0 0.0
  %1751 = vmatprep.subr.mxu0 0.0
  %1752 = vmatpush1.msra.mxu0 0.0
  %1753 = vmatprep.subr.mxu0 0.0
  %1754 = vmatpush1.msra.mxu0 0.0
  %1755 = vmatprep.subr.mxu0 0.0
  %1756 = vmatpush1.msra.mxu0 0.0
  %1757 = vmatprep.subr.mxu0 0.0
  %1758 = vmatpush1.msra.mxu0 0.0
  %1759 = vmatprep.subr.mxu0 0.0
  %1760 = vmatpush1.msra.mxu0 0.0
  %1761 = vmatprep.subr.mxu0 0.0
  %1762 = vmatpush1.msra.mxu0 0.0
  %1763 = vmatprep.subr.mxu0 0.0
  %1764 = vmatpush1.msra.mxu0 0.0
  %1765 = vmatprep.subr.mxu0 %v1625
  %1766 = vmatpush1.msra.mxu0 %v1626
  %1767 = vmatprep.subr.mxu0 0.0
  %1768 = vmatpush2.msra.mxu0 0.0
  %1769 = vmatprep.subr.mxu0 0.0
  %1770 = vmatpush2.msra.mxu0 0.0
  %1771 = vmatprep.subr.mxu0 0.0
  %1772 = vmatpush2.msra.mxu0 0.0
  %1773 = vmatprep.subr.mxu0 0.0
  %1774 = vmatpush2.msra.mxu0 0.0
  %1775 = vmatprep.subr.mxu0 0.0
  %1776 = vmatpush2.msra.mxu0 0.0
  %1777 = vmatprep.subr.mxu0 0.0
  %1778 = vmatpush2.msra.mxu0 0.0
  %1779 = vmatprep.subr.mxu0 0.0
  %1780 = vmatpush2.msra.mxu0 0.0
  %1781 = vmatprep.subr.mxu0 0.0
  %1782 = vmatpush2.msra.mxu0 0.0
  %1783 = vmatprep.subr.mxu0 0.0
  %1784 = vmatpush2.msra.mxu0 0.0
  %1785 = vmatprep.subr.mxu0 0.0
  %1786 = vmatpush2.msra.mxu0 0.0
  %1787 = vmatprep.subr.mxu0 0.0
  %1788 = vmatpush2.msra.mxu0 0.0
  %1789 = vmatprep.subr.mxu0 0.0
  %1790 = vmatpush2.msra.mxu0 0.0
  %1791 = vmatprep.subr.mxu0 0.0
  %1792 = vmatpush2.msra.mxu0 0.0
  %1793 = vmatprep.subr.mxu0 0.0
  %1794 = vmatpush2.msra.mxu0 0.0
  %1795 = vmatprep.subr.mxu0 0.0
  %1796 = vmatpush2.msra.mxu0 0.0
  %1797 = vmatprep.subr.mxu0 0.0
  %1798 = vmatpush2.msra.mxu0 0.0
  %1799 = vmatprep.mubr.f32.mxu0 0.0
  %1800 = vmatmul.mubr.f32.gmra.mxu0 %v1635
  %v1801 = vpop.f32.mrf.mxu0
  %v1802 = vadd.f32 0.0, %v1801
  %v1803 = vpop.f32.mrf.mxu0
  %v1804 = vadd.f32 0.0, %v1803
  %1805 = vmatprep.mubr.f32.mxu0 0.0
  %1806 = vmatmul.mubr.f32.gmra.mxu0 %v1638
  %v1807 = vpop.f32.mrf.mxu0
  %v1808 = vadd.f32 0.0, %v1807
  %v1809 = vpop.f32.mrf.mxu0
  %v1810 = vadd.f32 0.0, %v1809
  %1811 = vmatprep.mubr.f32.mxu0 0.0
  %1812 = vmatmul.mubr.f32.gmra.mxu0 %v1641
  %v1813 = vpop.f32.mrf.mxu0
  %v1814 = vadd.f32 0.0, %v1813
  %v1815 = vpop.f32.mrf.mxu0
  %v1816 = vadd.f32 0.0, %v1815
  %1817 = vmatprep.mubr.f32.mxu0 0.0
  %1818 = vmatmul.mubr.f32.gmra.mxu0 %v1644
  %v1819 = vpop.f32.mrf.mxu0
  %v1820 = vadd.f32 0.0, %v1819
  %v1821 = vpop.f32.mrf.mxu0
  %v1822 = vadd.f32 0.0, %v1821
  %1823 = vdwg.mxu0
  %1824 = vmatprep.subr.mxu0 0.0
  %1825 = vmatpush1.msra.mxu0 0.0
  %1826 = vmatprep.subr.mxu0 0.0
  %1827 = vmatpush1.msra.mxu0 0.0
  %1828 = vmatprep.subr.mxu0 0.0
  %1829 = vmatpush1.msra.mxu0 0.0
  %1830 = vmatprep.subr.mxu0 0.0
  %1831 = vmatpush1.msra.mxu0 0.0
  %1832 = vmatprep.subr.mxu0 0.0
  %1833 = vmatpush1.msra.mxu0 0.0
  %1834 = vmatprep.subr.mxu0 0.0
  %1835 = vmatpush1.msra.mxu0 0.0
  %1836 = vmatprep.subr.mxu0 0.0
  %1837 = vmatpush1.msra.mxu0 0.0
  %1838 = vmatprep.subr.mxu0 0.0
  %1839 = vmatpush1.msra.mxu0 0.0
  %1840 = vmatprep.subr.mxu0 0.0
  %1841 = vmatpush1.msra.mxu0 0.0
  %1842 = vmatprep.subr.mxu0 0.0
  %1843 = vmatpush1.msra.mxu0 0.0
  %1844 = vmatprep.subr.mxu0 0.0
  %1845 = vmatpush1.msra.mxu0 0.0
  %1846 = vmatprep.subr.mxu0 0.0
  %1847 = vmatpush1.msra.mxu0 0.0
  %1848 = vmatprep.subr.mxu0 0.0
  %1849 = vmatpush1.msra.mxu0 0.0
  %1850 = vmatprep.subr.mxu0 0.0
  %1851 = vmatpush1.msra.mxu0 0.0
  %1852 = vmatprep.subr.mxu0 0.0
  %1853 = vmatpush1.msra.mxu0 0.0
  %1854 = vmatprep.subr.mxu0 %v1623
  %1855 = vmatpush1.msra.mxu0 %v1624
  %1856 = vmatprep.subr.mxu0 0.0
  %1857 = vmatpush2.msra.mxu0 0.0
  %1858 = vmatprep.subr.mxu0 0.0
  %1859 = vmatpush2.msra.mxu0 0.0
  %1860 = vmatprep.subr.mxu0 0.0
  %1861 = vmatpush2.msra.mxu0 0.0
  %1862 = vmatprep.subr.mxu0 0.0
  %1863 = vmatpush2.msra.mxu0 0.0
  %1864 = vmatprep.subr.mxu0 0.0
  %1865 = vmatpush2.msra.mxu0 0.0
  %1866 = vmatprep.subr.mxu0 0.0
  %1867 = vmatpush2.msra.mxu0 0.0
  %1868 = vmatprep.subr.mxu0 0.0
  %1869 = vmatpush2.msra.mxu0 0.0
  %1870 = vmatprep.subr.mxu0 0.0
  %1871 = vmatpush2.msra.mxu0 0.0
  %1872 = vmatprep.subr.mxu0 0.0
  %1873 = vmatpush2.msra.mxu0 0.0
  %1874 = vmatprep.subr.mxu0 0.0
  %1875 = vmatpush2.msra.mxu0 0.0
  %1876 = vmatprep.subr.mxu0 0.0
  %1877 = vmatpush2.msra.mxu0 0.0
  %1878 = vmatprep.subr.mxu0 0.0
  %1879 = vmatpush2.msra.mxu0 0.0
  %1880 = vmatprep.subr.mxu0 0.0
  %1881 = vmatpush2.msra.mxu0 0.0
  %1882 = vmatprep.subr.mxu0 0.0
  %1883 = vmatpush2.msra.mxu0 0.0
  %1884 = vmatprep.subr.mxu0 0.0
  %1885 = vmatpush2.msra.mxu0 0.0
  %1886 = vmatprep.subr.mxu0 0.0
  %1887 = vmatpush2.msra.mxu0 0.0
  %1888 = vmatprep.mubr.f32.mxu0 0.0
  %1889 = vmatmul.mubr.f32.gmra.mxu0 %v1635
  %v1890 = vpop.f32.mrf.mxu0
  %v1891 = vadd.f32 0.0, %v1890
  %v1892 = vpop.f32.mrf.mxu0
  %v1893 = vadd.f32 0.0, %v1892
  %1894 = vmatprep.mubr.f32.mxu0 0.0
  %1895 = vmatmul.mubr.f32.gmra.mxu0 %v1638
  %v1896 = vpop.f32.mrf.mxu0
  %v1897 = vadd.f32 0.0, %v1896
  %v1898 = vpop.f32.mrf.mxu0
  %v1899 = vadd.f32 0.0, %v1898
  %1900 = vmatprep.mubr.f32.mxu0 0.0
  %1901 = vmatmul.mubr.f32.gmra.mxu0 %v1641
  %v1902 = vpop.f32.mrf.mxu0
  %v1903 = vadd.f32 0.0, %v1902
  %v1904 = vpop.f32.mrf.mxu0
  %v1905 = vadd.f32 0.0, %v1904
  %1906 = vmatprep.mubr.f32.mxu0 0.0
  %1907 = vmatmul.mubr.f32.gmra.mxu0 %v1644
  %v1908 = vpop.f32.mrf.mxu0
  %v1909 = vadd.f32 0.0, %v1908
  %v1910 = vpop.f32.mrf.mxu0
  %v1911 = vadd.f32 0.0, %v1910
  %1912 = vdwg.mxu0
  %v1913 = vadd.f32 %v1584, %v1713
  %v1914 = vadd.f32 %v1585, %v1715
  %v1915 = vadd.f32 %v1586, %v1802
  %v1916 = vadd.f32 %v1587, %v1804
  %v1917 = vadd.f32 %v1588, %v1891
  %v1918 = vadd.f32 %v1589, %v1893
  %v1919 = vadd.f32 %v1590, %v1719
  %v1920 = vadd.f32 %v1591, %v1721
  %v1921 = vadd.f32 %v1592, %v1808
  %v1922 = vadd.f32 %v1593, %v1810
  %v1923 = vadd.f32 %v1594, %v1897
  %v1924 = vadd.f32 %v1595, %v1899
  %v1925 = vadd.f32 %v1596, %v1725
  %v1926 = vadd.f32 %v1597, %v1727
  %v1927 = vadd.f32 %v1598, %v1814
  %v1928 = vadd.f32 %v1599, %v1816
  %v1929 = vadd.f32 %v1600, %v1903
  %v1930 = vadd.f32 %v1601, %v1905
  %v1931 = vadd.f32 %v1602, %v1731
  %v1932 = vadd.f32 %v1603, %v1733
  %v1933 = vadd.f32 %v1604, %v1820
  %v1934 = vadd.f32 %v1605, %v1822
  %v1935 = vadd.f32 %v1606, %v1909
  %v1936 = vadd.f32 %v1607, %v1911
  %1937 = vrot.lane.b32.xlu0 %v23, 92
  %v1938 = vpop.permute.xlu0 %1937
  %1939 = vrot.lane.b32.xlu0 %v24, 92
  %v1940 = vpop.permute.xlu0 %1939
  %1941 = vrot.lane.b32.xlu0 %v25, 92
  %v1942 = vpop.permute.xlu0 %1941
  %1943 = vrot.lane.b32.xlu0 %v26, 92
  %v1944 = vpop.permute.xlu0 %1943
  %1945 = vrot.lane.b32.xlu0 %v27, 92
  %v1946 = vpop.permute.xlu0 %1945
  %1947 = vrot.lane.b32.xlu0 %v28, 92
  %v1948 = vpop.permute.xlu0 %1947
  %1949 = vrot.lane.b32.xlu0 %v29, 92
  %v1950 = vpop.permute.xlu0 %1949
  %vm1951 = vcmp.lt.s32.totalorder %v49, 92
  %v1952 = vsel %vm1951, %v1948, %v1950
  %v1953 = vsel %vm1951, %v1946, %v1948
  %v1954 = vsel %vm1951, %v1944, %v1946
  %v1955 = vsel %vm1951, %v1942, %v1944
  %v1956 = vsel %vm1951, %v1940, %v1942
  %v1957 = vsel %vm1951, %v1938, %v1940
  %s1958 = scalar_lea.vmem %s1, 192
  %v1959 = vld [vmem:[%s1958] sm:$0xff]
  %v1960 = vld [vmem:[%s1958 + $0x8] sm:$0xff]
  %v1961 = vld [vmem:[%s1958 + $0x10] sm:$0xff]
  %v1962 = vld [vmem:[%s1958 + $0x18] sm:$0xff]
  %v1964 = vsel %vm62, %v1959, 0
  %v1967 = vsel %vm62, %v1960, 0
  %v1970 = vsel %vm62, %v1961, 0
  %v1973 = vsel %vm62, %v1962, 0
  %1975 = vmatprep.subr.mxu0 0.0
  %1976 = vmatpush1.msra.mxu0 0.0
  %1977 = vmatprep.subr.mxu0 0.0
  %1978 = vmatpush1.msra.mxu0 0.0
  %1979 = vmatprep.subr.mxu0 0.0
  %1980 = vmatpush1.msra.mxu0 0.0
  %1981 = vmatprep.subr.mxu0 0.0
  %1982 = vmatpush1.msra.mxu0 0.0
  %1983 = vmatprep.subr.mxu0 0.0
  %1984 = vmatpush1.msra.mxu0 0.0
  %1985 = vmatprep.subr.mxu0 0.0
  %1986 = vmatpush1.msra.mxu0 0.0
  %1987 = vmatprep.subr.mxu0 0.0
  %1988 = vmatpush1.msra.mxu0 0.0
  %1989 = vmatprep.subr.mxu0 0.0
  %1990 = vmatpush1.msra.mxu0 0.0
  %1991 = vmatprep.subr.mxu0 0.0
  %1992 = vmatpush1.msra.mxu0 0.0
  %1993 = vmatprep.subr.mxu0 0.0
  %1994 = vmatpush1.msra.mxu0 0.0
  %1995 = vmatprep.subr.mxu0 0.0
  %1996 = vmatpush1.msra.mxu0 0.0
  %1997 = vmatprep.subr.mxu0 0.0
  %1998 = vmatpush1.msra.mxu0 0.0
  %1999 = vmatprep.subr.mxu0 0.0
  %2000 = vmatpush1.msra.mxu0 0.0
  %2001 = vmatprep.subr.mxu0 0.0
  %2002 = vmatpush1.msra.mxu0 0.0
  %2003 = vmatprep.subr.mxu0 0.0
  %2004 = vmatpush1.msra.mxu0 0.0
  %2005 = vmatprep.subr.mxu0 %v1956
  %2006 = vmatpush1.msra.mxu0 %v1957
  %2007 = vmatprep.subr.mxu0 0.0
  %2008 = vmatpush2.msra.mxu0 0.0
  %2009 = vmatprep.subr.mxu0 0.0
  %2010 = vmatpush2.msra.mxu0 0.0
  %2011 = vmatprep.subr.mxu0 0.0
  %2012 = vmatpush2.msra.mxu0 0.0
  %2013 = vmatprep.subr.mxu0 0.0
  %2014 = vmatpush2.msra.mxu0 0.0
  %2015 = vmatprep.subr.mxu0 0.0
  %2016 = vmatpush2.msra.mxu0 0.0
  %2017 = vmatprep.subr.mxu0 0.0
  %2018 = vmatpush2.msra.mxu0 0.0
  %2019 = vmatprep.subr.mxu0 0.0
  %2020 = vmatpush2.msra.mxu0 0.0
  %2021 = vmatprep.subr.mxu0 0.0
  %2022 = vmatpush2.msra.mxu0 0.0
  %2023 = vmatprep.subr.mxu0 0.0
  %2024 = vmatpush2.msra.mxu0 0.0
  %2025 = vmatprep.subr.mxu0 0.0
  %2026 = vmatpush2.msra.mxu0 0.0
  %2027 = vmatprep.subr.mxu0 0.0
  %2028 = vmatpush2.msra.mxu0 0.0
  %2029 = vmatprep.subr.mxu0 0.0
  %2030 = vmatpush2.msra.mxu0 0.0
  %2031 = vmatprep.subr.mxu0 0.0
  %2032 = vmatpush2.msra.mxu0 0.0
  %2033 = vmatprep.subr.mxu0 0.0
  %2034 = vmatpush2.msra.mxu0 0.0
  %2035 = vmatprep.subr.mxu0 0.0
  %2036 = vmatpush2.msra.mxu0 0.0
  %2037 = vmatprep.subr.mxu0 0.0
  %2038 = vmatpush2.msra.mxu0 0.0
  %2039 = vmatprep.mubr.f32.mxu0 0.0
  %2040 = vmatmul.mubr.f32.gmra.mxu0 %v1964
  %v2041 = vpop.f32.mrf.mxu0
  %v2042 = vadd.f32 0.0, %v2041
  %v2043 = vpop.f32.mrf.mxu0
  %v2044 = vadd.f32 0.0, %v2043
  %2045 = vmatprep.mubr.f32.mxu0 0.0
  %2046 = vmatmul.mubr.f32.gmra.mxu0 %v1967
  %v2047 = vpop.f32.mrf.mxu0
  %v2048 = vadd.f32 0.0, %v2047
  %v2049 = vpop.f32.mrf.mxu0
  %v2050 = vadd.f32 0.0, %v2049
  %2051 = vmatprep.mubr.f32.mxu0 0.0
  %2052 = vmatmul.mubr.f32.gmra.mxu0 %v1970
  %v2053 = vpop.f32.mrf.mxu0
  %v2054 = vadd.f32 0.0, %v2053
  %v2055 = vpop.f32.mrf.mxu0
  %v2056 = vadd.f32 0.0, %v2055
  %2057 = vmatprep.mubr.f32.mxu0 0.0
  %2058 = vmatmul.mubr.f32.gmra.mxu0 %v1973
  %v2059 = vpop.f32.mrf.mxu0
  %v2060 = vadd.f32 0.0, %v2059
  %v2061 = vpop.f32.mrf.mxu0
  %v2062 = vadd.f32 0.0, %v2061
  %2063 = vdwg.mxu0
  %2064 = vmatprep.subr.mxu0 0.0
  %2065 = vmatpush1.msra.mxu0 0.0
  %2066 = vmatprep.subr.mxu0 0.0
  %2067 = vmatpush1.msra.mxu0 0.0
  %2068 = vmatprep.subr.mxu0 0.0
  %2069 = vmatpush1.msra.mxu0 0.0
  %2070 = vmatprep.subr.mxu0 0.0
  %2071 = vmatpush1.msra.mxu0 0.0
  %2072 = vmatprep.subr.mxu0 0.0
  %2073 = vmatpush1.msra.mxu0 0.0
  %2074 = vmatprep.subr.mxu0 0.0
  %2075 = vmatpush1.msra.mxu0 0.0
  %2076 = vmatprep.subr.mxu0 0.0
  %2077 = vmatpush1.msra.mxu0 0.0
  %2078 = vmatprep.subr.mxu0 0.0
  %2079 = vmatpush1.msra.mxu0 0.0
  %2080 = vmatprep.subr.mxu0 0.0
  %2081 = vmatpush1.msra.mxu0 0.0
  %2082 = vmatprep.subr.mxu0 0.0
  %2083 = vmatpush1.msra.mxu0 0.0
  %2084 = vmatprep.subr.mxu0 0.0
  %2085 = vmatpush1.msra.mxu0 0.0
  %2086 = vmatprep.subr.mxu0 0.0
  %2087 = vmatpush1.msra.mxu0 0.0
  %2088 = vmatprep.subr.mxu0 0.0
  %2089 = vmatpush1.msra.mxu0 0.0
  %2090 = vmatprep.subr.mxu0 0.0
  %2091 = vmatpush1.msra.mxu0 0.0
  %2092 = vmatprep.subr.mxu0 0.0
  %2093 = vmatpush1.msra.mxu0 0.0
  %2094 = vmatprep.subr.mxu0 %v1954
  %2095 = vmatpush1.msra.mxu0 %v1955
  %2096 = vmatprep.subr.mxu0 0.0
  %2097 = vmatpush2.msra.mxu0 0.0
  %2098 = vmatprep.subr.mxu0 0.0
  %2099 = vmatpush2.msra.mxu0 0.0
  %2100 = vmatprep.subr.mxu0 0.0
  %2101 = vmatpush2.msra.mxu0 0.0
  %2102 = vmatprep.subr.mxu0 0.0
  %2103 = vmatpush2.msra.mxu0 0.0
  %2104 = vmatprep.subr.mxu0 0.0
  %2105 = vmatpush2.msra.mxu0 0.0
  %2106 = vmatprep.subr.mxu0 0.0
  %2107 = vmatpush2.msra.mxu0 0.0
  %2108 = vmatprep.subr.mxu0 0.0
  %2109 = vmatpush2.msra.mxu0 0.0
  %2110 = vmatprep.subr.mxu0 0.0
  %2111 = vmatpush2.msra.mxu0 0.0
  %2112 = vmatprep.subr.mxu0 0.0
  %2113 = vmatpush2.msra.mxu0 0.0
  %2114 = vmatprep.subr.mxu0 0.0
  %2115 = vmatpush2.msra.mxu0 0.0
  %2116 = vmatprep.subr.mxu0 0.0
  %2117 = vmatpush2.msra.mxu0 0.0
  %2118 = vmatprep.subr.mxu0 0.0
  %2119 = vmatpush2.msra.mxu0 0.0
  %2120 = vmatprep.subr.mxu0 0.0
  %2121 = vmatpush2.msra.mxu0 0.0
  %2122 = vmatprep.subr.mxu0 0.0
  %2123 = vmatpush2.msra.mxu0 0.0
  %2124 = vmatprep.subr.mxu0 0.0
  %2125 = vmatpush2.msra.mxu0 0.0
  %2126 = vmatprep.subr.mxu0 0.0
  %2127 = vmatpush2.msra.mxu0 0.0
  %2128 = vmatprep.mubr.f32.mxu0 0.0
  %2129 = vmatmul.mubr.f32.gmra.mxu0 %v1964
  %v2130 = vpop.f32.mrf.mxu0
  %v2131 = vadd.f32 0.0, %v2130
  %v2132 = vpop.f32.mrf.mxu0
  %v2133 = vadd.f32 0.0, %v2132
  %2134 = vmatprep.mubr.f32.mxu0 0.0
  %2135 = vmatmul.mubr.f32.gmra.mxu0 %v1967
  %v2136 = vpop.f32.mrf.mxu0
  %v2137 = vadd.f32 0.0, %v2136
  %v2138 = vpop.f32.mrf.mxu0
  %v2139 = vadd.f32 0.0, %v2138
  %2140 = vmatprep.mubr.f32.mxu0 0.0
  %2141 = vmatmul.mubr.f32.gmra.mxu0 %v1970
  %v2142 = vpop.f32.mrf.mxu0
  %v2143 = vadd.f32 0.0, %v2142
  %v2144 = vpop.f32.mrf.mxu0
  %v2145 = vadd.f32 0.0, %v2144
  %2146 = vmatprep.mubr.f32.mxu0 0.0
  %2147 = vmatmul.mubr.f32.gmra.mxu0 %v1973
  %v2148 = vpop.f32.mrf.mxu0
  %v2149 = vadd.f32 0.0, %v2148
  %v2150 = vpop.f32.mrf.mxu0
  %v2151 = vadd.f32 0.0, %v2150
  %2152 = vdwg.mxu0
  %2153 = vmatprep.subr.mxu0 0.0
  %2154 = vmatpush1.msra.mxu0 0.0
  %2155 = vmatprep.subr.mxu0 0.0
  %2156 = vmatpush1.msra.mxu0 0.0
  %2157 = vmatprep.subr.mxu0 0.0
  %2158 = vmatpush1.msra.mxu0 0.0
  %2159 = vmatprep.subr.mxu0 0.0
  %2160 = vmatpush1.msra.mxu0 0.0
  %2161 = vmatprep.subr.mxu0 0.0
  %2162 = vmatpush1.msra.mxu0 0.0
  %2163 = vmatprep.subr.mxu0 0.0
  %2164 = vmatpush1.msra.mxu0 0.0
  %2165 = vmatprep.subr.mxu0 0.0
  %2166 = vmatpush1.msra.mxu0 0.0
  %2167 = vmatprep.subr.mxu0 0.0
  %2168 = vmatpush1.msra.mxu0 0.0
  %2169 = vmatprep.subr.mxu0 0.0
  %2170 = vmatpush1.msra.mxu0 0.0
  %2171 = vmatprep.subr.mxu0 0.0
  %2172 = vmatpush1.msra.mxu0 0.0
  %2173 = vmatprep.subr.mxu0 0.0
  %2174 = vmatpush1.msra.mxu0 0.0
  %2175 = vmatprep.subr.mxu0 0.0
  %2176 = vmatpush1.msra.mxu0 0.0
  %2177 = vmatprep.subr.mxu0 0.0
  %2178 = vmatpush1.msra.mxu0 0.0
  %2179 = vmatprep.subr.mxu0 0.0
  %2180 = vmatpush1.msra.mxu0 0.0
  %2181 = vmatprep.subr.mxu0 0.0
  %2182 = vmatpush1.msra.mxu0 0.0
  %2183 = vmatprep.subr.mxu0 %v1952
  %2184 = vmatpush1.msra.mxu0 %v1953
  %2185 = vmatprep.subr.mxu0 0.0
  %2186 = vmatpush2.msra.mxu0 0.0
  %2187 = vmatprep.subr.mxu0 0.0
  %2188 = vmatpush2.msra.mxu0 0.0
  %2189 = vmatprep.subr.mxu0 0.0
  %2190 = vmatpush2.msra.mxu0 0.0
  %2191 = vmatprep.subr.mxu0 0.0
  %2192 = vmatpush2.msra.mxu0 0.0
  %2193 = vmatprep.subr.mxu0 0.0
  %2194 = vmatpush2.msra.mxu0 0.0
  %2195 = vmatprep.subr.mxu0 0.0
  %2196 = vmatpush2.msra.mxu0 0.0
  %2197 = vmatprep.subr.mxu0 0.0
  %2198 = vmatpush2.msra.mxu0 0.0
  %2199 = vmatprep.subr.mxu0 0.0
  %2200 = vmatpush2.msra.mxu0 0.0
  %2201 = vmatprep.subr.mxu0 0.0
  %2202 = vmatpush2.msra.mxu0 0.0
  %2203 = vmatprep.subr.mxu0 0.0
  %2204 = vmatpush2.msra.mxu0 0.0
  %2205 = vmatprep.subr.mxu0 0.0
  %2206 = vmatpush2.msra.mxu0 0.0
  %2207 = vmatprep.subr.mxu0 0.0
  %2208 = vmatpush2.msra.mxu0 0.0
  %2209 = vmatprep.subr.mxu0 0.0
  %2210 = vmatpush2.msra.mxu0 0.0
  %2211 = vmatprep.subr.mxu0 0.0
  %2212 = vmatpush2.msra.mxu0 0.0
  %2213 = vmatprep.subr.mxu0 0.0
  %2214 = vmatpush2.msra.mxu0 0.0
  %2215 = vmatprep.subr.mxu0 0.0
  %2216 = vmatpush2.msra.mxu0 0.0
  %2217 = vmatprep.mubr.f32.mxu0 0.0
  %2218 = vmatmul.mubr.f32.gmra.mxu0 %v1964
  %v2219 = vpop.f32.mrf.mxu0
  %v2220 = vadd.f32 0.0, %v2219
  %v2221 = vpop.f32.mrf.mxu0
  %v2222 = vadd.f32 0.0, %v2221
  %2223 = vmatprep.mubr.f32.mxu0 0.0
  %2224 = vmatmul.mubr.f32.gmra.mxu0 %v1967
  %v2225 = vpop.f32.mrf.mxu0
  %v2226 = vadd.f32 0.0, %v2225
  %v2227 = vpop.f32.mrf.mxu0
  %v2228 = vadd.f32 0.0, %v2227
  %2229 = vmatprep.mubr.f32.mxu0 0.0
  %2230 = vmatmul.mubr.f32.gmra.mxu0 %v1970
  %v2231 = vpop.f32.mrf.mxu0
  %v2232 = vadd.f32 0.0, %v2231
  %v2233 = vpop.f32.mrf.mxu0
  %v2234 = vadd.f32 0.0, %v2233
  %2235 = vmatprep.mubr.f32.mxu0 0.0
  %2236 = vmatmul.mubr.f32.gmra.mxu0 %v1973
  %v2237 = vpop.f32.mrf.mxu0
  %v2238 = vadd.f32 0.0, %v2237
  %v2239 = vpop.f32.mrf.mxu0
  %v2240 = vadd.f32 0.0, %v2239
  %2241 = vdwg.mxu0
  %v2242 = vadd.f32 %v1913, %v2042
  %v2243 = vadd.f32 %v1914, %v2044
  %v2244 = vadd.f32 %v1915, %v2131
  %v2245 = vadd.f32 %v1916, %v2133
  %v2246 = vadd.f32 %v1917, %v2220
  %v2247 = vadd.f32 %v1918, %v2222
  %v2248 = vadd.f32 %v1919, %v2048
  %v2249 = vadd.f32 %v1920, %v2050
  %v2250 = vadd.f32 %v1921, %v2137
  %v2251 = vadd.f32 %v1922, %v2139
  %v2252 = vadd.f32 %v1923, %v2226
  %v2253 = vadd.f32 %v1924, %v2228
  %v2254 = vadd.f32 %v1925, %v2054
  %v2255 = vadd.f32 %v1926, %v2056
  %v2256 = vadd.f32 %v1927, %v2143
  %v2257 = vadd.f32 %v1928, %v2145
  %v2258 = vadd.f32 %v1929, %v2232
  %v2259 = vadd.f32 %v1930, %v2234
  %v2260 = vadd.f32 %v1931, %v2060
  %v2261 = vadd.f32 %v1932, %v2062
  %v2262 = vadd.f32 %v1933, %v2149
  %v2263 = vadd.f32 %v1934, %v2151
  %v2264 = vadd.f32 %v1935, %v2238
  %v2265 = vadd.f32 %v1936, %v2240
  %2266 = vrot.lane.b32.xlu0 %v23, 91
  %v2267 = vpop.permute.xlu0 %2266
  %2268 = vrot.lane.b32.xlu0 %v24, 91
  %v2269 = vpop.permute.xlu0 %2268
  %2270 = vrot.lane.b32.xlu0 %v25, 91
  %v2271 = vpop.permute.xlu0 %2270
  %2272 = vrot.lane.b32.xlu0 %v26, 91
  %v2273 = vpop.permute.xlu0 %2272
  %2274 = vrot.lane.b32.xlu0 %v27, 91
  %v2275 = vpop.permute.xlu0 %2274
  %2276 = vrot.lane.b32.xlu0 %v28, 91
  %v2277 = vpop.permute.xlu0 %2276
  %2278 = vrot.lane.b32.xlu0 %v29, 91
  %v2279 = vpop.permute.xlu0 %2278
  %vm2280 = vcmp.lt.s32.totalorder %v49, 91
  %v2281 = vsel %vm2280, %v2277, %v2279
  %v2282 = vsel %vm2280, %v2275, %v2277
  %v2283 = vsel %vm2280, %v2273, %v2275
  %v2284 = vsel %vm2280, %v2271, %v2273
  %v2285 = vsel %vm2280, %v2269, %v2271
  %v2286 = vsel %vm2280, %v2267, %v2269
  %s2287 = scalar_lea.vmem %s1, 224
  %v2288 = vld [vmem:[%s2287] sm:$0xff]
  %v2289 = vld [vmem:[%s2287 + $0x8] sm:$0xff]
  %v2290 = vld [vmem:[%s2287 + $0x10] sm:$0xff]
  %v2291 = vld [vmem:[%s2287 + $0x18] sm:$0xff]
  %v2293 = vsel %vm62, %v2288, 0
  %v2296 = vsel %vm62, %v2289, 0
  %v2299 = vsel %vm62, %v2290, 0
  %v2302 = vsel %vm62, %v2291, 0
  %2304 = vmatprep.subr.mxu0 0.0
  %2305 = vmatpush1.msra.mxu0 0.0
  %2306 = vmatprep.subr.mxu0 0.0
  %2307 = vmatpush1.msra.mxu0 0.0
  %2308 = vmatprep.subr.mxu0 0.0
  %2309 = vmatpush1.msra.mxu0 0.0
  %2310 = vmatprep.subr.mxu0 0.0
  %2311 = vmatpush1.msra.mxu0 0.0
  %2312 = vmatprep.subr.mxu0 0.0
  %2313 = vmatpush1.msra.mxu0 0.0
  %2314 = vmatprep.subr.mxu0 0.0
  %2315 = vmatpush1.msra.mxu0 0.0
  %2316 = vmatprep.subr.mxu0 0.0
  %2317 = vmatpush1.msra.mxu0 0.0
  %2318 = vmatprep.subr.mxu0 0.0
  %2319 = vmatpush1.msra.mxu0 0.0
  %2320 = vmatprep.subr.mxu0 0.0
  %2321 = vmatpush1.msra.mxu0 0.0
  %2322 = vmatprep.subr.mxu0 0.0
  %2323 = vmatpush1.msra.mxu0 0.0
  %2324 = vmatprep.subr.mxu0 0.0
  %2325 = vmatpush1.msra.mxu0 0.0
  %2326 = vmatprep.subr.mxu0 0.0
  %2327 = vmatpush1.msra.mxu0 0.0
  %2328 = vmatprep.subr.mxu0 0.0
  %2329 = vmatpush1.msra.mxu0 0.0
  %2330 = vmatprep.subr.mxu0 0.0
  %2331 = vmatpush1.msra.mxu0 0.0
  %2332 = vmatprep.subr.mxu0 0.0
  %2333 = vmatpush1.msra.mxu0 0.0
  %2334 = vmatprep.subr.mxu0 %v2285
  %2335 = vmatpush1.msra.mxu0 %v2286
  %2336 = vmatprep.subr.mxu0 0.0
  %2337 = vmatpush2.msra.mxu0 0.0
  %2338 = vmatprep.subr.mxu0 0.0
  %2339 = vmatpush2.msra.mxu0 0.0
  %2340 = vmatprep.subr.mxu0 0.0
  %2341 = vmatpush2.msra.mxu0 0.0
  %2342 = vmatprep.subr.mxu0 0.0
  %2343 = vmatpush2.msra.mxu0 0.0
  %2344 = vmatprep.subr.mxu0 0.0
  %2345 = vmatpush2.msra.mxu0 0.0
  %2346 = vmatprep.subr.mxu0 0.0
  %2347 = vmatpush2.msra.mxu0 0.0
  %2348 = vmatprep.subr.mxu0 0.0
  %2349 = vmatpush2.msra.mxu0 0.0
  %2350 = vmatprep.subr.mxu0 0.0
  %2351 = vmatpush2.msra.mxu0 0.0
  %2352 = vmatprep.subr.mxu0 0.0
  %2353 = vmatpush2.msra.mxu0 0.0
  %2354 = vmatprep.subr.mxu0 0.0
  %2355 = vmatpush2.msra.mxu0 0.0
  %2356 = vmatprep.subr.mxu0 0.0
  %2357 = vmatpush2.msra.mxu0 0.0
  %2358 = vmatprep.subr.mxu0 0.0
  %2359 = vmatpush2.msra.mxu0 0.0
  %2360 = vmatprep.subr.mxu0 0.0
  %2361 = vmatpush2.msra.mxu0 0.0
  %2362 = vmatprep.subr.mxu0 0.0
  %2363 = vmatpush2.msra.mxu0 0.0
  %2364 = vmatprep.subr.mxu0 0.0
  %2365 = vmatpush2.msra.mxu0 0.0
  %2366 = vmatprep.subr.mxu0 0.0
  %2367 = vmatpush2.msra.mxu0 0.0
  %2368 = vmatprep.mubr.f32.mxu0 0.0
  %2369 = vmatmul.mubr.f32.gmra.mxu0 %v2293
  %v2370 = vpop.f32.mrf.mxu0
  %v2371 = vadd.f32 0.0, %v2370
  %v2372 = vpop.f32.mrf.mxu0
  %v2373 = vadd.f32 0.0, %v2372
  %2374 = vmatprep.mubr.f32.mxu0 0.0
  %2375 = vmatmul.mubr.f32.gmra.mxu0 %v2296
  %v2376 = vpop.f32.mrf.mxu0
  %v2377 = vadd.f32 0.0, %v2376
  %v2378 = vpop.f32.mrf.mxu0
  %v2379 = vadd.f32 0.0, %v2378
  %2380 = vmatprep.mubr.f32.mxu0 0.0
  %2381 = vmatmul.mubr.f32.gmra.mxu0 %v2299
  %v2382 = vpop.f32.mrf.mxu0
  %v2383 = vadd.f32 0.0, %v2382
  %v2384 = vpop.f32.mrf.mxu0
  %v2385 = vadd.f32 0.0, %v2384
  %2386 = vmatprep.mubr.f32.mxu0 0.0
  %2387 = vmatmul.mubr.f32.gmra.mxu0 %v2302
  %v2388 = vpop.f32.mrf.mxu0
  %v2389 = vadd.f32 0.0, %v2388
  %v2390 = vpop.f32.mrf.mxu0
  %v2391 = vadd.f32 0.0, %v2390
  %2392 = vdwg.mxu0
  %2393 = vmatprep.subr.mxu0 0.0
  %2394 = vmatpush1.msra.mxu0 0.0
  %2395 = vmatprep.subr.mxu0 0.0
  %2396 = vmatpush1.msra.mxu0 0.0
  %2397 = vmatprep.subr.mxu0 0.0
  %2398 = vmatpush1.msra.mxu0 0.0
  %2399 = vmatprep.subr.mxu0 0.0
  %2400 = vmatpush1.msra.mxu0 0.0
  %2401 = vmatprep.subr.mxu0 0.0
  %2402 = vmatpush1.msra.mxu0 0.0
  %2403 = vmatprep.subr.mxu0 0.0
  %2404 = vmatpush1.msra.mxu0 0.0
  %2405 = vmatprep.subr.mxu0 0.0
  %2406 = vmatpush1.msra.mxu0 0.0
  %2407 = vmatprep.subr.mxu0 0.0
  %2408 = vmatpush1.msra.mxu0 0.0
  %2409 = vmatprep.subr.mxu0 0.0
  %2410 = vmatpush1.msra.mxu0 0.0
  %2411 = vmatprep.subr.mxu0 0.0
  %2412 = vmatpush1.msra.mxu0 0.0
  %2413 = vmatprep.subr.mxu0 0.0
  %2414 = vmatpush1.msra.mxu0 0.0
  %2415 = vmatprep.subr.mxu0 0.0
  %2416 = vmatpush1.msra.mxu0 0.0
  %2417 = vmatprep.subr.mxu0 0.0
  %2418 = vmatpush1.msra.mxu0 0.0
  %2419 = vmatprep.subr.mxu0 0.0
  %2420 = vmatpush1.msra.mxu0 0.0
  %2421 = vmatprep.subr.mxu0 0.0
  %2422 = vmatpush1.msra.mxu0 0.0
  %2423 = vmatprep.subr.mxu0 %v2283
  %2424 = vmatpush1.msra.mxu0 %v2284
  %2425 = vmatprep.subr.mxu0 0.0
  %2426 = vmatpush2.msra.mxu0 0.0
  %2427 = vmatprep.subr.mxu0 0.0
  %2428 = vmatpush2.msra.mxu0 0.0
  %2429 = vmatprep.subr.mxu0 0.0
  %2430 = vmatpush2.msra.mxu0 0.0
  %2431 = vmatprep.subr.mxu0 0.0
  %2432 = vmatpush2.msra.mxu0 0.0
  %2433 = vmatprep.subr.mxu0 0.0
  %2434 = vmatpush2.msra.mxu0 0.0
  %2435 = vmatprep.subr.mxu0 0.0
  %2436 = vmatpush2.msra.mxu0 0.0
  %2437 = vmatprep.subr.mxu0 0.0
  %2438 = vmatpush2.msra.mxu0 0.0
  %2439 = vmatprep.subr.mxu0 0.0
  %2440 = vmatpush2.msra.mxu0 0.0
  %2441 = vmatprep.subr.mxu0 0.0
  %2442 = vmatpush2.msra.mxu0 0.0
  %2443 = vmatprep.subr.mxu0 0.0
  %2444 = vmatpush2.msra.mxu0 0.0
  %2445 = vmatprep.subr.mxu0 0.0
  %2446 = vmatpush2.msra.mxu0 0.0
  %2447 = vmatprep.subr.mxu0 0.0
  %2448 = vmatpush2.msra.mxu0 0.0
  %2449 = vmatprep.subr.mxu0 0.0
  %2450 = vmatpush2.msra.mxu0 0.0
  %2451 = vmatprep.subr.mxu0 0.0
  %2452 = vmatpush2.msra.mxu0 0.0
  %2453 = vmatprep.subr.mxu0 0.0
  %2454 = vmatpush2.msra.mxu0 0.0
  %2455 = vmatprep.subr.mxu0 0.0
  %2456 = vmatpush2.msra.mxu0 0.0
  %2457 = vmatprep.mubr.f32.mxu0 0.0
  %2458 = vmatmul.mubr.f32.gmra.mxu0 %v2293
  %v2459 = vpop.f32.mrf.mxu0
  %v2460 = vadd.f32 0.0, %v2459
  %v2461 = vpop.f32.mrf.mxu0
  %v2462 = vadd.f32 0.0, %v2461
  %2463 = vmatprep.mubr.f32.mxu0 0.0
  %2464 = vmatmul.mubr.f32.gmra.mxu0 %v2296
  %v2465 = vpop.f32.mrf.mxu0
  %v2466 = vadd.f32 0.0, %v2465
  %v2467 = vpop.f32.mrf.mxu0
  %v2468 = vadd.f32 0.0, %v2467
  %2469 = vmatprep.mubr.f32.mxu0 0.0
  %2470 = vmatmul.mubr.f32.gmra.mxu0 %v2299
  %v2471 = vpop.f32.mrf.mxu0
  %v2472 = vadd.f32 0.0, %v2471
  %v2473 = vpop.f32.mrf.mxu0
  %v2474 = vadd.f32 0.0, %v2473
  %2475 = vmatprep.mubr.f32.mxu0 0.0
  %2476 = vmatmul.mubr.f32.gmra.mxu0 %v2302
  %v2477 = vpop.f32.mrf.mxu0
  %v2478 = vadd.f32 0.0, %v2477
  %v2479 = vpop.f32.mrf.mxu0
  %v2480 = vadd.f32 0.0, %v2479
  %2481 = vdwg.mxu0
  %2482 = vmatprep.subr.mxu0 0.0
  %2483 = vmatpush1.msra.mxu0 0.0
  %2484 = vmatprep.subr.mxu0 0.0
  %2485 = vmatpush1.msra.mxu0 0.0
  %2486 = vmatprep.subr.mxu0 0.0
  %2487 = vmatpush1.msra.mxu0 0.0
  %2488 = vmatprep.subr.mxu0 0.0
  %2489 = vmatpush1.msra.mxu0 0.0
  %2490 = vmatprep.subr.mxu0 0.0
  %2491 = vmatpush1.msra.mxu0 0.0
  %2492 = vmatprep.subr.mxu0 0.0
  %2493 = vmatpush1.msra.mxu0 0.0
  %2494 = vmatprep.subr.mxu0 0.0
  %2495 = vmatpush1.msra.mxu0 0.0
  %2496 = vmatprep.subr.mxu0 0.0
  %2497 = vmatpush1.msra.mxu0 0.0
  %2498 = vmatprep.subr.mxu0 0.0
  %2499 = vmatpush1.msra.mxu0 0.0
  %2500 = vmatprep.subr.mxu0 0.0
  %2501 = vmatpush1.msra.mxu0 0.0
  %2502 = vmatprep.subr.mxu0 0.0
  %2503 = vmatpush1.msra.mxu0 0.0
  %2504 = vmatprep.subr.mxu0 0.0
  %2505 = vmatpush1.msra.mxu0 0.0
  %2506 = vmatprep.subr.mxu0 0.0
  %2507 = vmatpush1.msra.mxu0 0.0
  %2508 = vmatprep.subr.mxu0 0.0
  %2509 = vmatpush1.msra.mxu0 0.0
  %2510 = vmatprep.subr.mxu0 0.0
  %2511 = vmatpush1.msra.mxu0 0.0
  %2512 = vmatprep.subr.mxu0 %v2281
  %2513 = vmatpush1.msra.mxu0 %v2282
  %2514 = vmatprep.subr.mxu0 0.0
  %2515 = vmatpush2.msra.mxu0 0.0
  %2516 = vmatprep.subr.mxu0 0.0
  %2517 = vmatpush2.msra.mxu0 0.0
  %2518 = vmatprep.subr.mxu0 0.0
  %2519 = vmatpush2.msra.mxu0 0.0
  %2520 = vmatprep.subr.mxu0 0.0
  %2521 = vmatpush2.msra.mxu0 0.0
  %2522 = vmatprep.subr.mxu0 0.0
  %2523 = vmatpush2.msra.mxu0 0.0
  %2524 = vmatprep.subr.mxu0 0.0
  %2525 = vmatpush2.msra.mxu0 0.0
  %2526 = vmatprep.subr.mxu0 0.0
  %2527 = vmatpush2.msra.mxu0 0.0
  %2528 = vmatprep.subr.mxu0 0.0
  %2529 = vmatpush2.msra.mxu0 0.0
  %2530 = vmatprep.subr.mxu0 0.0
  %2531 = vmatpush2.msra.mxu0 0.0
  %2532 = vmatprep.subr.mxu0 0.0
  %2533 = vmatpush2.msra.mxu0 0.0
  %2534 = vmatprep.subr.mxu0 0.0
  %2535 = vmatpush2.msra.mxu0 0.0
  %2536 = vmatprep.subr.mxu0 0.0
  %2537 = vmatpush2.msra.mxu0 0.0
  %2538 = vmatprep.subr.mxu0 0.0
  %2539 = vmatpush2.msra.mxu0 0.0
  %2540 = vmatprep.subr.mxu0 0.0
  %2541 = vmatpush2.msra.mxu0 0.0
  %2542 = vmatprep.subr.mxu0 0.0
  %2543 = vmatpush2.msra.mxu0 0.0
  %2544 = vmatprep.subr.mxu0 0.0
  %2545 = vmatpush2.msra.mxu0 0.0
  %2546 = vmatprep.mubr.f32.mxu0 0.0
  %2547 = vmatmul.mubr.f32.gmra.mxu0 %v2293
  %v2548 = vpop.f32.mrf.mxu0
  %v2549 = vadd.f32 0.0, %v2548
  %v2550 = vpop.f32.mrf.mxu0
  %v2551 = vadd.f32 0.0, %v2550
  %2552 = vmatprep.mubr.f32.mxu0 0.0
  %2553 = vmatmul.mubr.f32.gmra.mxu0 %v2296
  %v2554 = vpop.f32.mrf.mxu0
  %v2555 = vadd.f32 0.0, %v2554
  %v2556 = vpop.f32.mrf.mxu0
  %v2557 = vadd.f32 0.0, %v2556
  %2558 = vmatprep.mubr.f32.mxu0 0.0
  %2559 = vmatmul.mubr.f32.gmra.mxu0 %v2299
  %v2560 = vpop.f32.mrf.mxu0
  %v2561 = vadd.f32 0.0, %v2560
  %v2562 = vpop.f32.mrf.mxu0
  %v2563 = vadd.f32 0.0, %v2562
  %2564 = vmatprep.mubr.f32.mxu0 0.0
  %2565 = vmatmul.mubr.f32.gmra.mxu0 %v2302
  %v2566 = vpop.f32.mrf.mxu0
  %v2567 = vadd.f32 0.0, %v2566
  %v2568 = vpop.f32.mrf.mxu0
  %v2569 = vadd.f32 0.0, %v2568
  %2570 = vdwg.mxu0
  %v2571 = vadd.f32 %v2242, %v2371
  %v2572 = vadd.f32 %v2243, %v2373
  %v2573 = vadd.f32 %v2244, %v2460
  %v2574 = vadd.f32 %v2245, %v2462
  %v2575 = vadd.f32 %v2246, %v2549
  %v2576 = vadd.f32 %v2247, %v2551
  %v2577 = vadd.f32 %v2248, %v2377
  %v2578 = vadd.f32 %v2249, %v2379
  %v2579 = vadd.f32 %v2250, %v2466
  %v2580 = vadd.f32 %v2251, %v2468
  %v2581 = vadd.f32 %v2252, %v2555
  %v2582 = vadd.f32 %v2253, %v2557
  %v2583 = vadd.f32 %v2254, %v2383
  %v2584 = vadd.f32 %v2255, %v2385
  %v2585 = vadd.f32 %v2256, %v2472
  %v2586 = vadd.f32 %v2257, %v2474
  %v2587 = vadd.f32 %v2258, %v2561
  %v2588 = vadd.f32 %v2259, %v2563
  %v2589 = vadd.f32 %v2260, %v2389
  %v2590 = vadd.f32 %v2261, %v2391
  %v2591 = vadd.f32 %v2262, %v2478
  %v2592 = vadd.f32 %v2263, %v2480
  %v2593 = vadd.f32 %v2264, %v2567
  %v2594 = vadd.f32 %v2265, %v2569
  %2595 = vrot.lane.b32.xlu0 %v23, 90
  %v2596 = vpop.permute.xlu0 %2595
  %2597 = vrot.lane.b32.xlu0 %v24, 90
  %v2598 = vpop.permute.xlu0 %2597
  %2599 = vrot.lane.b32.xlu0 %v25, 90
  %v2600 = vpop.permute.xlu0 %2599
  %2601 = vrot.lane.b32.xlu0 %v26, 90
  %v2602 = vpop.permute.xlu0 %2601
  %2603 = vrot.lane.b32.xlu0 %v27, 90
  %v2604 = vpop.permute.xlu0 %2603
  %2605 = vrot.lane.b32.xlu0 %v28, 90
  %v2606 = vpop.permute.xlu0 %2605
  %2607 = vrot.lane.b32.xlu0 %v29, 90
  %v2608 = vpop.permute.xlu0 %2607
  %vm2609 = vcmp.lt.s32.totalorder %v49, 90
  %v2610 = vsel %vm2609, %v2606, %v2608
  %v2611 = vsel %vm2609, %v2604, %v2606
  %v2612 = vsel %vm2609, %v2602, %v2604
  %v2613 = vsel %vm2609, %v2600, %v2602
  %v2614 = vsel %vm2609, %v2598, %v2600
  %v2615 = vsel %vm2609, %v2596, %v2598
  %s2616 = scalar_lea.vmem %s1, 256
  %v2617 = vld [vmem:[%s2616] sm:$0xff]
  %v2618 = vld [vmem:[%s2616 + $0x8] sm:$0xff]
  %v2619 = vld [vmem:[%s2616 + $0x10] sm:$0xff]
  %v2620 = vld [vmem:[%s2616 + $0x18] sm:$0xff]
  %v2622 = vsel %vm62, %v2617, 0
  %v2625 = vsel %vm62, %v2618, 0
  %v2628 = vsel %vm62, %v2619, 0
  %v2631 = vsel %vm62, %v2620, 0
  %2633 = vmatprep.subr.mxu0 0.0
  %2634 = vmatpush1.msra.mxu0 0.0
  %2635 = vmatprep.subr.mxu0 0.0
  %2636 = vmatpush1.msra.mxu0 0.0
  %2637 = vmatprep.subr.mxu0 0.0
  %2638 = vmatpush1.msra.mxu0 0.0
  %2639 = vmatprep.subr.mxu0 0.0
  %2640 = vmatpush1.msra.mxu0 0.0
  %2641 = vmatprep.subr.mxu0 0.0
  %2642 = vmatpush1.msra.mxu0 0.0
  %2643 = vmatprep.subr.mxu0 0.0
  %2644 = vmatpush1.msra.mxu0 0.0
  %2645 = vmatprep.subr.mxu0 0.0
  %2646 = vmatpush1.msra.mxu0 0.0
  %2647 = vmatprep.subr.mxu0 0.0
  %2648 = vmatpush1.msra.mxu0 0.0
  %2649 = vmatprep.subr.mxu0 0.0
  %2650 = vmatpush1.msra.mxu0 0.0
  %2651 = vmatprep.subr.mxu0 0.0
  %2652 = vmatpush1.msra.mxu0 0.0
  %2653 = vmatprep.subr.mxu0 0.0
  %2654 = vmatpush1.msra.mxu0 0.0
  %2655 = vmatprep.subr.mxu0 0.0
  %2656 = vmatpush1.msra.mxu0 0.0
  %2657 = vmatprep.subr.mxu0 0.0
  %2658 = vmatpush1.msra.mxu0 0.0
  %2659 = vmatprep.subr.mxu0 0.0
  %2660 = vmatpush1.msra.mxu0 0.0
  %2661 = vmatprep.subr.mxu0 0.0
  %2662 = vmatpush1.msra.mxu0 0.0
  %2663 = vmatprep.subr.mxu0 %v2614
  %2664 = vmatpush1.msra.mxu0 %v2615
  %2665 = vmatprep.subr.mxu0 0.0
  %2666 = vmatpush2.msra.mxu0 0.0
  %2667 = vmatprep.subr.mxu0 0.0
  %2668 = vmatpush2.msra.mxu0 0.0
  %2669 = vmatprep.subr.mxu0 0.0
  %2670 = vmatpush2.msra.mxu0 0.0
  %2671 = vmatprep.subr.mxu0 0.0
  %2672 = vmatpush2.msra.mxu0 0.0
  %2673 = vmatprep.subr.mxu0 0.0
  %2674 = vmatpush2.msra.mxu0 0.0
  %2675 = vmatprep.subr.mxu0 0.0
  %2676 = vmatpush2.msra.mxu0 0.0
  %2677 = vmatprep.subr.mxu0 0.0
  %2678 = vmatpush2.msra.mxu0 0.0
  %2679 = vmatprep.subr.mxu0 0.0
  %2680 = vmatpush2.msra.mxu0 0.0
  %2681 = vmatprep.subr.mxu0 0.0
  %2682 = vmatpush2.msra.mxu0 0.0
  %2683 = vmatprep.subr.mxu0 0.0
  %2684 = vmatpush2.msra.mxu0 0.0
  %2685 = vmatprep.subr.mxu0 0.0
  %2686 = vmatpush2.msra.mxu0 0.0
  %2687 = vmatprep.subr.mxu0 0.0
  %2688 = vmatpush2.msra.mxu0 0.0
  %2689 = vmatprep.subr.mxu0 0.0
  %2690 = vmatpush2.msra.mxu0 0.0
  %2691 = vmatprep.subr.mxu0 0.0
  %2692 = vmatpush2.msra.mxu0 0.0
  %2693 = vmatprep.subr.mxu0 0.0
  %2694 = vmatpush2.msra.mxu0 0.0
  %2695 = vmatprep.subr.mxu0 0.0
  %2696 = vmatpush2.msra.mxu0 0.0
  %2697 = vmatprep.mubr.f32.mxu0 0.0
  %2698 = vmatmul.mubr.f32.gmra.mxu0 %v2622
  %v2699 = vpop.f32.mrf.mxu0
  %v2700 = vadd.f32 0.0, %v2699
  %v2701 = vpop.f32.mrf.mxu0
  %v2702 = vadd.f32 0.0, %v2701
  %2703 = vmatprep.mubr.f32.mxu0 0.0
  %2704 = vmatmul.mubr.f32.gmra.mxu0 %v2625
  %v2705 = vpop.f32.mrf.mxu0
  %v2706 = vadd.f32 0.0, %v2705
  %v2707 = vpop.f32.mrf.mxu0
  %v2708 = vadd.f32 0.0, %v2707
  %2709 = vmatprep.mubr.f32.mxu0 0.0
  %2710 = vmatmul.mubr.f32.gmra.mxu0 %v2628
  %v2711 = vpop.f32.mrf.mxu0
  %v2712 = vadd.f32 0.0, %v2711
  %v2713 = vpop.f32.mrf.mxu0
  %v2714 = vadd.f32 0.0, %v2713
  %2715 = vmatprep.mubr.f32.mxu0 0.0
  %2716 = vmatmul.mubr.f32.gmra.mxu0 %v2631
  %v2717 = vpop.f32.mrf.mxu0
  %v2718 = vadd.f32 0.0, %v2717
  %v2719 = vpop.f32.mrf.mxu0
  %v2720 = vadd.f32 0.0, %v2719
  %2721 = vdwg.mxu0
  %2722 = vmatprep.subr.mxu0 0.0
  %2723 = vmatpush1.msra.mxu0 0.0
  %2724 = vmatprep.subr.mxu0 0.0
  %2725 = vmatpush1.msra.mxu0 0.0
  %2726 = vmatprep.subr.mxu0 0.0
  %2727 = vmatpush1.msra.mxu0 0.0
  %2728 = vmatprep.subr.mxu0 0.0
  %2729 = vmatpush1.msra.mxu0 0.0
  %2730 = vmatprep.subr.mxu0 0.0
  %2731 = vmatpush1.msra.mxu0 0.0
  %2732 = vmatprep.subr.mxu0 0.0
  %2733 = vmatpush1.msra.mxu0 0.0
  %2734 = vmatprep.subr.mxu0 0.0
  %2735 = vmatpush1.msra.mxu0 0.0
  %2736 = vmatprep.subr.mxu0 0.0
  %2737 = vmatpush1.msra.mxu0 0.0
  %2738 = vmatprep.subr.mxu0 0.0
  %2739 = vmatpush1.msra.mxu0 0.0
  %2740 = vmatprep.subr.mxu0 0.0
  %2741 = vmatpush1.msra.mxu0 0.0
  %2742 = vmatprep.subr.mxu0 0.0
  %2743 = vmatpush1.msra.mxu0 0.0
  %2744 = vmatprep.subr.mxu0 0.0
  %2745 = vmatpush1.msra.mxu0 0.0
  %2746 = vmatprep.subr.mxu0 0.0
  %2747 = vmatpush1.msra.mxu0 0.0
  %2748 = vmatprep.subr.mxu0 0.0
  %2749 = vmatpush1.msra.mxu0 0.0
  %2750 = vmatprep.subr.mxu0 0.0
  %2751 = vmatpush1.msra.mxu0 0.0
  %2752 = vmatprep.subr.mxu0 %v2612
  %2753 = vmatpush1.msra.mxu0 %v2613
  %2754 = vmatprep.subr.mxu0 0.0
  %2755 = vmatpush2.msra.mxu0 0.0
  %2756 = vmatprep.subr.mxu0 0.0
  %2757 = vmatpush2.msra.mxu0 0.0
  %2758 = vmatprep.subr.mxu0 0.0
  %2759 = vmatpush2.msra.mxu0 0.0
  %2760 = vmatprep.subr.mxu0 0.0
  %2761 = vmatpush2.msra.mxu0 0.0
  %2762 = vmatprep.subr.mxu0 0.0
  %2763 = vmatpush2.msra.mxu0 0.0
  %2764 = vmatprep.subr.mxu0 0.0
  %2765 = vmatpush2.msra.mxu0 0.0
  %2766 = vmatprep.subr.mxu0 0.0
  %2767 = vmatpush2.msra.mxu0 0.0
  %2768 = vmatprep.subr.mxu0 0.0
  %2769 = vmatpush2.msra.mxu0 0.0
  %2770 = vmatprep.subr.mxu0 0.0
  %2771 = vmatpush2.msra.mxu0 0.0
  %2772 = vmatprep.subr.mxu0 0.0
  %2773 = vmatpush2.msra.mxu0 0.0
  %2774 = vmatprep.subr.mxu0 0.0
  %2775 = vmatpush2.msra.mxu0 0.0
  %2776 = vmatprep.subr.mxu0 0.0
  %2777 = vmatpush2.msra.mxu0 0.0
  %2778 = vmatprep.subr.mxu0 0.0
  %2779 = vmatpush2.msra.mxu0 0.0
  %2780 = vmatprep.subr.mxu0 0.0
  %2781 = vmatpush2.msra.mxu0 0.0
  %2782 = vmatprep.subr.mxu0 0.0
  %2783 = vmatpush2.msra.mxu0 0.0
  %2784 = vmatprep.subr.mxu0 0.0
  %2785 = vmatpush2.msra.mxu0 0.0
  %2786 = vmatprep.mubr.f32.mxu0 0.0
  %2787 = vmatmul.mubr.f32.gmra.mxu0 %v2622
  %v2788 = vpop.f32.mrf.mxu0
  %v2789 = vadd.f32 0.0, %v2788
  %v2790 = vpop.f32.mrf.mxu0
  %v2791 = vadd.f32 0.0, %v2790
  %2792 = vmatprep.mubr.f32.mxu0 0.0
  %2793 = vmatmul.mubr.f32.gmra.mxu0 %v2625
  %v2794 = vpop.f32.mrf.mxu0
  %v2795 = vadd.f32 0.0, %v2794
  %v2796 = vpop.f32.mrf.mxu0
  %v2797 = vadd.f32 0.0, %v2796
  %2798 = vmatprep.mubr.f32.mxu0 0.0
  %2799 = vmatmul.mubr.f32.gmra.mxu0 %v2628
  %v2800 = vpop.f32.mrf.mxu0
  %v2801 = vadd.f32 0.0, %v2800
  %v2802 = vpop.f32.mrf.mxu0
  %v2803 = vadd.f32 0.0, %v2802
  %2804 = vmatprep.mubr.f32.mxu0 0.0
  %2805 = vmatmul.mubr.f32.gmra.mxu0 %v2631
  %v2806 = vpop.f32.mrf.mxu0
  %v2807 = vadd.f32 0.0, %v2806
  %v2808 = vpop.f32.mrf.mxu0
  %v2809 = vadd.f32 0.0, %v2808
  %2810 = vdwg.mxu0
  %2811 = vmatprep.subr.mxu0 0.0
  %2812 = vmatpush1.msra.mxu0 0.0
  %2813 = vmatprep.subr.mxu0 0.0
  %2814 = vmatpush1.msra.mxu0 0.0
  %2815 = vmatprep.subr.mxu0 0.0
  %2816 = vmatpush1.msra.mxu0 0.0
  %2817 = vmatprep.subr.mxu0 0.0
  %2818 = vmatpush1.msra.mxu0 0.0
  %2819 = vmatprep.subr.mxu0 0.0
  %2820 = vmatpush1.msra.mxu0 0.0
  %2821 = vmatprep.subr.mxu0 0.0
  %2822 = vmatpush1.msra.mxu0 0.0
  %2823 = vmatprep.subr.mxu0 0.0
  %2824 = vmatpush1.msra.mxu0 0.0
  %2825 = vmatprep.subr.mxu0 0.0
  %2826 = vmatpush1.msra.mxu0 0.0
  %2827 = vmatprep.subr.mxu0 0.0
  %2828 = vmatpush1.msra.mxu0 0.0
  %2829 = vmatprep.subr.mxu0 0.0
  %2830 = vmatpush1.msra.mxu0 0.0
  %2831 = vmatprep.subr.mxu0 0.0
  %2832 = vmatpush1.msra.mxu0 0.0
  %2833 = vmatprep.subr.mxu0 0.0
  %2834 = vmatpush1.msra.mxu0 0.0
  %2835 = vmatprep.subr.mxu0 0.0
  %2836 = vmatpush1.msra.mxu0 0.0
  %2837 = vmatprep.subr.mxu0 0.0
  %2838 = vmatpush1.msra.mxu0 0.0
  %2839 = vmatprep.subr.mxu0 0.0
  %2840 = vmatpush1.msra.mxu0 0.0
  %2841 = vmatprep.subr.mxu0 %v2610
  %2842 = vmatpush1.msra.mxu0 %v2611
  %2843 = vmatprep.subr.mxu0 0.0
  %2844 = vmatpush2.msra.mxu0 0.0
  %2845 = vmatprep.subr.mxu0 0.0
  %2846 = vmatpush2.msra.mxu0 0.0
  %2847 = vmatprep.subr.mxu0 0.0
  %2848 = vmatpush2.msra.mxu0 0.0
  %2849 = vmatprep.subr.mxu0 0.0
  %2850 = vmatpush2.msra.mxu0 0.0
  %2851 = vmatprep.subr.mxu0 0.0
  %2852 = vmatpush2.msra.mxu0 0.0
  %2853 = vmatprep.subr.mxu0 0.0
  %2854 = vmatpush2.msra.mxu0 0.0
  %2855 = vmatprep.subr.mxu0 0.0
  %2856 = vmatpush2.msra.mxu0 0.0
  %2857 = vmatprep.subr.mxu0 0.0
  %2858 = vmatpush2.msra.mxu0 0.0
  %2859 = vmatprep.subr.mxu0 0.0
  %2860 = vmatpush2.msra.mxu0 0.0
  %2861 = vmatprep.subr.mxu0 0.0
  %2862 = vmatpush2.msra.mxu0 0.0
  %2863 = vmatprep.subr.mxu0 0.0
  %2864 = vmatpush2.msra.mxu0 0.0
  %2865 = vmatprep.subr.mxu0 0.0
  %2866 = vmatpush2.msra.mxu0 0.0
  %2867 = vmatprep.subr.mxu0 0.0
  %2868 = vmatpush2.msra.mxu0 0.0
  %2869 = vmatprep.subr.mxu0 0.0
  %2870 = vmatpush2.msra.mxu0 0.0
  %2871 = vmatprep.subr.mxu0 0.0
  %2872 = vmatpush2.msra.mxu0 0.0
  %2873 = vmatprep.subr.mxu0 0.0
  %2874 = vmatpush2.msra.mxu0 0.0
  %2875 = vmatprep.mubr.f32.mxu0 0.0
  %2876 = vmatmul.mubr.f32.gmra.mxu0 %v2622
  %v2877 = vpop.f32.mrf.mxu0
  %v2878 = vadd.f32 0.0, %v2877
  %v2879 = vpop.f32.mrf.mxu0
  %v2880 = vadd.f32 0.0, %v2879
  %2881 = vmatprep.mubr.f32.mxu0 0.0
  %2882 = vmatmul.mubr.f32.gmra.mxu0 %v2625
  %v2883 = vpop.f32.mrf.mxu0
  %v2884 = vadd.f32 0.0, %v2883
  %v2885 = vpop.f32.mrf.mxu0
  %v2886 = vadd.f32 0.0, %v2885
  %2887 = vmatprep.mubr.f32.mxu0 0.0
  %2888 = vmatmul.mubr.f32.gmra.mxu0 %v2628
  %v2889 = vpop.f32.mrf.mxu0
  %v2890 = vadd.f32 0.0, %v2889
  %v2891 = vpop.f32.mrf.mxu0
  %v2892 = vadd.f32 0.0, %v2891
  %2893 = vmatprep.mubr.f32.mxu0 0.0
  %2894 = vmatmul.mubr.f32.gmra.mxu0 %v2631
  %v2895 = vpop.f32.mrf.mxu0
  %v2896 = vadd.f32 0.0, %v2895
  %v2897 = vpop.f32.mrf.mxu0
  %v2898 = vadd.f32 0.0, %v2897
  %2899 = vdwg.mxu0
  %v2900 = vadd.f32 %v2571, %v2700
  %v2901 = vadd.f32 %v2572, %v2702
  %v2902 = vadd.f32 %v2573, %v2789
  %v2903 = vadd.f32 %v2574, %v2791
  %v2904 = vadd.f32 %v2575, %v2878
  %v2905 = vadd.f32 %v2576, %v2880
  %v2906 = vadd.f32 %v2577, %v2706
  %v2907 = vadd.f32 %v2578, %v2708
  %v2908 = vadd.f32 %v2579, %v2795
  %v2909 = vadd.f32 %v2580, %v2797
  %v2910 = vadd.f32 %v2581, %v2884
  %v2911 = vadd.f32 %v2582, %v2886
  %v2912 = vadd.f32 %v2583, %v2712
  %v2913 = vadd.f32 %v2584, %v2714
  %v2914 = vadd.f32 %v2585, %v2801
  %v2915 = vadd.f32 %v2586, %v2803
  %v2916 = vadd.f32 %v2587, %v2890
  %v2917 = vadd.f32 %v2588, %v2892
  %v2918 = vadd.f32 %v2589, %v2718
  %v2919 = vadd.f32 %v2590, %v2720
  %v2920 = vadd.f32 %v2591, %v2807
  %v2921 = vadd.f32 %v2592, %v2809
  %v2922 = vadd.f32 %v2593, %v2896
  %v2923 = vadd.f32 %v2594, %v2898
  %v2924 = vld [vmem:[%s2] sm:$0xff]
  %v2925 = vld [vmem:[%s2 + $0x8] sm:$0xff]
  %v2926 = vld [vmem:[%s2 + $0x10] sm:$0xff]
  %v2927 = vld [vmem:[%s2 + $0x18] sm:$0xff]
  %2929 = vset.pattern.permute.xlu0 0
  %2930 = vperm.xlu0 %2929, %v2924
  %v2931 = vpop.permute.xlu0 %2930
  %2934 = vset.pattern.permute.xlu0 0
  %2935 = vperm.xlu0 %2934, %v2925
  %v2936 = vpop.permute.xlu0 %2935
  %2939 = vset.pattern.permute.xlu0 0
  %2940 = vperm.xlu0 %2939, %v2926
  %v2941 = vpop.permute.xlu0 %2940
  %2944 = vset.pattern.permute.xlu0 0
  %2945 = vperm.xlu0 %2944, %v2927
  %v2946 = vpop.permute.xlu0 %2945
  %v2948 = vadd.f32 %v2900, %v2931
  %v2949 = vadd.f32 %v2901, %v2931
  %v2950 = vadd.f32 %v2902, %v2931
  %v2951 = vadd.f32 %v2903, %v2931
  %v2952 = vadd.f32 %v2904, %v2931
  %v2953 = vadd.f32 %v2905, %v2931
  %v2954 = vadd.f32 %v2906, %v2936
  %v2955 = vadd.f32 %v2907, %v2936
  %v2956 = vadd.f32 %v2908, %v2936
  %v2957 = vadd.f32 %v2909, %v2936
  %v2958 = vadd.f32 %v2910, %v2936
  %v2959 = vadd.f32 %v2911, %v2936
  %v2960 = vadd.f32 %v2912, %v2941
  %v2961 = vadd.f32 %v2913, %v2941
  %v2962 = vadd.f32 %v2914, %v2941
  %v2963 = vadd.f32 %v2915, %v2941
  %v2964 = vadd.f32 %v2916, %v2941
  %v2965 = vadd.f32 %v2917, %v2941
  %v2966 = vadd.f32 %v2918, %v2946
  %v2967 = vadd.f32 %v2919, %v2946
  %v2968 = vadd.f32 %v2920, %v2946
  %v2969 = vadd.f32 %v2921, %v2946
  %v2970 = vadd.f32 %v2922, %v2946
  %v2971 = vadd.f32 %v2923, %v2946
  %v2972 = vmax.f32 %v2948, 0.0
  %v2973 = vmax.f32 %v2949, 0.0
  %v2974 = vmax.f32 %v2950, 0.0
  %v2975 = vmax.f32 %v2951, 0.0
  %v2976 = vmax.f32 %v2952, 0.0
  %v2977 = vmax.f32 %v2953, 0.0
  %v2978 = vmax.f32 %v2954, 0.0
  %v2979 = vmax.f32 %v2955, 0.0
  %v2980 = vmax.f32 %v2956, 0.0
  %v2981 = vmax.f32 %v2957, 0.0
  %v2982 = vmax.f32 %v2958, 0.0
  %v2983 = vmax.f32 %v2959, 0.0
  %v2984 = vmax.f32 %v2960, 0.0
  %v2985 = vmax.f32 %v2961, 0.0
  %v2986 = vmax.f32 %v2962, 0.0
  %v2987 = vmax.f32 %v2963, 0.0
  %v2988 = vmax.f32 %v2964, 0.0
  %v2989 = vmax.f32 %v2965, 0.0
  %v2990 = vmax.f32 %v2966, 0.0
  %v2991 = vmax.f32 %v2967, 0.0
  %v2992 = vmax.f32 %v2968, 0.0
  %v2993 = vmax.f32 %v2969, 0.0
  %v2994 = vmax.f32 %v2970, 0.0
  %v2995 = vmax.f32 %v2971, 0.0
  %v2996 = vld [vmem:[%s3] sm:$0xff]
  %v2997 = vld [vmem:[%s3 + $0x8] sm:$0xff]
  %v2998 = vld [vmem:[%s3 + $0x10] sm:$0xff]
  %v2999 = vld [vmem:[%s3 + $0x18] sm:$0xff]
  %3001 = vset.pattern.permute.xlu0 0
  %3002 = vperm.xlu0 %3001, %v2996
  %v3003 = vpop.permute.xlu0 %3002
  %3006 = vset.pattern.permute.xlu0 0
  %3007 = vperm.xlu0 %3006, %v2997
  %v3008 = vpop.permute.xlu0 %3007
  %3011 = vset.pattern.permute.xlu0 0
  %3012 = vperm.xlu0 %3011, %v2998
  %v3013 = vpop.permute.xlu0 %3012
  %3016 = vset.pattern.permute.xlu0 0
  %3017 = vperm.xlu0 %3016, %v2999
  %v3018 = vpop.permute.xlu0 %3017
  %v3020 = vmul.f32 %v2972, %v3003
  %v3021 = vmul.f32 %v2973, %v3003
  %v3022 = vmul.f32 %v2974, %v3003
  %v3023 = vmul.f32 %v2975, %v3003
  %v3024 = vmul.f32 %v2976, %v3003
  %v3025 = vmul.f32 %v2977, %v3003
  %v3026 = vmul.f32 %v2978, %v3008
  %v3027 = vmul.f32 %v2979, %v3008
  %v3028 = vmul.f32 %v2980, %v3008
  %v3029 = vmul.f32 %v2981, %v3008
  %v3030 = vmul.f32 %v2982, %v3008
  %v3031 = vmul.f32 %v2983, %v3008
  %v3032 = vmul.f32 %v2984, %v3013
  %v3033 = vmul.f32 %v2985, %v3013
  %v3034 = vmul.f32 %v2986, %v3013
  %v3035 = vmul.f32 %v2987, %v3013
  %v3036 = vmul.f32 %v2988, %v3013
  %v3037 = vmul.f32 %v2989, %v3013
  %v3038 = vmul.f32 %v2990, %v3018
  %v3039 = vmul.f32 %v2991, %v3018
  %v3040 = vmul.f32 %v2992, %v3018
  %v3041 = vmul.f32 %v2993, %v3018
  %v3042 = vmul.f32 %v2994, %v3018
  %v3043 = vmul.f32 %v2995, %v3018
  %v3044 = vadd.f32 %v3020, %v3026
  %v3045 = vadd.f32 %v3044, %v3032
  %v3046 = vadd.f32 %v3045, %v3038
  %v3047 = vrot.slane %v3046, 4
  %v3048 = vadd.f32 %v3046, %v3047
  %v3049 = vrot.slane %v3048, 2
  %v3050 = vadd.f32 %v3048, %v3049
  %v3051 = vrot.slane %v3050, 1
  %v3052 = vadd.f32 %v3050, %v3051
  %v3053 = vadd.f32 %v3021, %v3027
  %v3054 = vadd.f32 %v3053, %v3033
  %v3055 = vadd.f32 %v3054, %v3039
  %v3056 = vrot.slane %v3055, 4
  %v3057 = vadd.f32 %v3055, %v3056
  %v3058 = vrot.slane %v3057, 2
  %v3059 = vadd.f32 %v3057, %v3058
  %v3060 = vrot.slane %v3059, 1
  %v3061 = vadd.f32 %v3059, %v3060
  %v3062 = vadd.f32 %v3022, %v3028
  %v3063 = vadd.f32 %v3062, %v3034
  %v3064 = vadd.f32 %v3063, %v3040
  %v3065 = vrot.slane %v3064, 4
  %v3066 = vadd.f32 %v3064, %v3065
  %v3067 = vrot.slane %v3066, 2
  %v3068 = vadd.f32 %v3066, %v3067
  %v3069 = vrot.slane %v3068, 1
  %v3070 = vadd.f32 %v3068, %v3069
  %v3071 = vadd.f32 %v3023, %v3029
  %v3072 = vadd.f32 %v3071, %v3035
  %v3073 = vadd.f32 %v3072, %v3041
  %v3074 = vrot.slane %v3073, 4
  %v3075 = vadd.f32 %v3073, %v3074
  %v3076 = vrot.slane %v3075, 2
  %v3077 = vadd.f32 %v3075, %v3076
  %v3078 = vrot.slane %v3077, 1
  %v3079 = vadd.f32 %v3077, %v3078
  %v3080 = vadd.f32 %v3024, %v3030
  %v3081 = vadd.f32 %v3080, %v3036
  %v3082 = vadd.f32 %v3081, %v3042
  %v3083 = vrot.slane %v3082, 4
  %v3084 = vadd.f32 %v3082, %v3083
  %v3085 = vrot.slane %v3084, 2
  %v3086 = vadd.f32 %v3084, %v3085
  %v3087 = vrot.slane %v3086, 1
  %v3088 = vadd.f32 %v3086, %v3087
  %v3089 = vadd.f32 %v3025, %v3031
  %v3090 = vadd.f32 %v3089, %v3037
  %v3091 = vadd.f32 %v3090, %v3043
  %v3092 = vrot.slane %v3091, 4
  %v3093 = vadd.f32 %v3091, %v3092
  %v3094 = vrot.slane %v3093, 2
  %v3095 = vadd.f32 %v3093, %v3094
  %v3096 = vrot.slane %v3095, 1
  %v3097 = vadd.f32 %v3095, %v3096
  %s3098 = sld [smem:[#allocation2]]
  %v3099 = vstv %s3098
  %v3100 = vadd.f32 %v3052, %v3099
  %v3101 = vadd.f32 %v3061, %v3099
  %v3102 = vadd.f32 %v3070, %v3099
  %v3103 = vadd.f32 %v3079, %v3099
  %v3104 = vadd.f32 %v3088, %v3099
  %v3105 = vadd.f32 %v3097, %v3099
  %v3106 = vxor.u32 %v3100, 2147483648
  %v3107 = vxor.u32 %v3101, 2147483648
  %v3108 = vxor.u32 %v3102, 2147483648
  %v3109 = vxor.u32 %v3103, 2147483648
  %v3110 = vxor.u32 %v3104, 2147483648
  %v3111 = vxor.u32 %v3105, 2147483648
  %v3112 = vmul.f32 %v3106, 1.442695
  %v3113 = vpow.pop %v3112
  %v3114 = vmul.f32 %v3107, 1.442695
  %v3115 = vpow.pop %v3114
  %v3116 = vmul.f32 %v3108, 1.442695
  %v3117 = vpow.pop %v3116
  %v3118 = vmul.f32 %v3109, 1.442695
  %v3119 = vpow.pop %v3118
  %v3120 = vmul.f32 %v3110, 1.442695
  %v3121 = vpow.pop %v3120
  %v3122 = vmul.f32 %v3111, 1.442695
  %v3123 = vpow.pop %v3122
  %v3124 = vadd.f32 %v3113, 1.0
  %v3125 = vadd.f32 %v3115, 1.0
  %v3126 = vadd.f32 %v3117, 1.0
  %v3127 = vadd.f32 %v3119, 1.0
  %v3128 = vadd.f32 %v3121, 1.0
  %v3129 = vadd.f32 %v3123, 1.0
  %v3130 = vrcp.pop %v3124
  %v3131 = vmul.f32 1.0, %v3130
  %v3132 = vrcp.pop %v3125
  %v3133 = vmul.f32 1.0, %v3132
  %v3134 = vrcp.pop %v3126
  %v3135 = vmul.f32 1.0, %v3134
  %v3136 = vrcp.pop %v3127
  %v3137 = vmul.f32 1.0, %v3136
  %v3138 = vrcp.pop %v3128
  %v3139 = vmul.f32 1.0, %v3138
  %v3140 = vrcp.pop %v3129
  %v3141 = vmul.f32 1.0, %v3140
  %v3148 = vcombine.low %v3131, %v3133
  %v3149 = vcombine.low %v3135, %v3137
  %v3150 = vcombine.low %v3139, %v3141
  %v3152 = vunpack.c.l.s4 1966171168
  %v3153 = vunpack.c.0.s8 %v3152
  %v3154 = vlaneseq
  %v3155 = vshrl.u32 %v3154, 7
  %v3156 = vsub.s32 %v3153, %v3155
  %v3157 = vrot.slane %v3148, %v3156
  %v3159 = vunpack.c.l.s4 1966171168
  %v3160 = vunpack.c.0.s8 %v3159
  %v3161 = vlaneseq
  %v3162 = vshrl.u32 %v3161, 7
  %v3163 = vsub.s32 %v3160, %v3162
  %v3164 = vrot.slane %v3149, %v3163
  %v3166 = vunpack.c.l.s4 1966171168
  %v3167 = vunpack.c.0.s8 %v3166
  %v3168 = vlaneseq
  %v3169 = vshrl.u32 %v3168, 7
  %v3170 = vsub.s32 %v3167, %v3169
  %v3171 = vrot.slane %v3150, %v3170
  %v3172 = vcombine.low %v3157, %v3164
  %v3174 = vunpack.c.l.s4 1966171168
  %v3175 = vunpack.c.0.s8 %v3174
  %v3176 = vlaneseq
  %v3177 = vshrl.u32 %v3176, 7
  %v3178 = vsub.s32 %v3175, %v3177
  %v3179 = vrot.slane %v3172, %v3178
  %v3181 = vunpack.c.l.s4 1966171168
  %v3182 = vunpack.c.0.s8 %v3181
  %v3183 = vlaneseq
  %v3184 = vshrl.u32 %v3183, 7
  %v3185 = vsub.s32 %v3182, %v3184
  %v3186 = vrot.slane %v3171, %v3185
  %v3187 = vcombine.low %v3179, %v3186
  %v3189 = vlaneseq
  %vm3190 = vcmp.ge.s32.totalorder %v3189, 0
  %vm3191 = vcmp.lt.s32.totalorder %v3189, 768
  %vm3192 = vmand %vm3190, %vm3191
  %3193 = vst.msk [vmem:[%s5] sm:$0x3f] %vm3192, %v3187
  %vm3194 = vcmp.ge.f32.partialorder %v3131, 0.3
  %vm3195 = vcmp.ge.f32.partialorder %v3133, 0.3
  %vm3196 = vcmp.ge.f32.partialorder %v3135, 0.3
  %vm3197 = vcmp.ge.f32.partialorder %v3137, 0.3
  %vm3198 = vcmp.ge.f32.partialorder %v3139, 0.3
  %vm3199 = vcmp.ge.f32.partialorder %v3141, 0.3
  %v3200 = vsel %vm3194, 1, 0
  %v3201 = vsel %vm3195, 1, 0
  %v3202 = vsel %vm3196, 1, 0
  %v3203 = vsel %vm3197, 1, 0
  %v3204 = vsel %vm3198, 1, 0
  %v3205 = vsel %vm3199, 1, 0
  %v3206 = vcvt.s32.f32 %v3200
  %v3207 = vcvt.s32.f32 %v3201
  %v3208 = vcvt.s32.f32 %v3202
  %v3209 = vcvt.s32.f32 %v3203
  %v3210 = vcvt.s32.f32 %v3204
  %v3211 = vcvt.s32.f32 %v3205
  %v3218 = vcombine.low %v3206, %v3207
  %v3219 = vcombine.low %v3208, %v3209
  %v3220 = vcombine.low %v3210, %v3211
  %v3222 = vunpack.c.l.s4 1966171168
  %v3223 = vunpack.c.0.s8 %v3222
  %v3224 = vlaneseq
  %v3225 = vshrl.u32 %v3224, 7
  %v3226 = vsub.s32 %v3223, %v3225
  %v3227 = vrot.slane %v3218, %v3226
  %v3229 = vunpack.c.l.s4 1966171168
  %v3230 = vunpack.c.0.s8 %v3229
  %v3231 = vlaneseq
  %v3232 = vshrl.u32 %v3231, 7
  %v3233 = vsub.s32 %v3230, %v3232
  %v3234 = vrot.slane %v3219, %v3233
  %v3236 = vunpack.c.l.s4 1966171168
  %v3237 = vunpack.c.0.s8 %v3236
  %v3238 = vlaneseq
  %v3239 = vshrl.u32 %v3238, 7
  %v3240 = vsub.s32 %v3237, %v3239
  %v3241 = vrot.slane %v3220, %v3240
  %v3242 = vcombine.low %v3227, %v3234
  %v3244 = vunpack.c.l.s4 1966171168
  %v3245 = vunpack.c.0.s8 %v3244
  %v3246 = vlaneseq
  %v3247 = vshrl.u32 %v3246, 7
  %v3248 = vsub.s32 %v3245, %v3247
  %v3249 = vrot.slane %v3242, %v3248
  %v3251 = vunpack.c.l.s4 1966171168
  %v3252 = vunpack.c.0.s8 %v3251
  %v3253 = vlaneseq
  %v3254 = vshrl.u32 %v3253, 7
  %v3255 = vsub.s32 %v3252, %v3254
  %v3256 = vrot.slane %v3241, %v3255
  %v3257 = vcombine.low %v3249, %v3256
  %3259 = vst.msk [vmem:[%s6] sm:$0x3f] %vm3192, %v3257
  // Predicated region
  $region22: #{_detection_model_jit.1} parent=0 // pred_check
    _
  $region23: #{_detection_model_jit.1} parent=0 // pred_check_branch
    %3261 = sbr.rel (0) target = $region25
  $region24: #{_detection_model_jit.1} parent=0 // pred_region
    _
  $region25: #{_detection_model_jit.1} parent=0 // pred_fallthru
    _
  // Predicated region
  $region26: #{_detection_model_jit.1} parent=0 // pred_check
    _
  $region27: #{_detection_model_jit.1} parent=0 // pred_check_branch
    %3263 = sbr.rel (0) target = $region29
  $region28: #{_detection_model_jit.1} parent=0 // pred_region
    _
  $region29: #{_detection_model_jit.1} parent=0 // pred_fallthru
    _
  // Predicated region
  $region30: #{_detection_model_jit.1} parent=0 // pred_check
    _
  $region31: #{_detection_model_jit.1} parent=0 // pred_check_branch
    %3265 = sbr.rel (0) target = $region33
  $region32: #{_detection_model_jit.1} parent=0 // pred_region
    _
  $region33: #{_detection_model_jit.1} parent=0 // pred_fallthru
    _
  // Predicated region
  $region34: #{_detection_model_jit.1} parent=0 // pred_check
    _
  $region35: #{_detection_model_jit.1} parent=0 // pred_check_branch
    %3267 = sbr.rel (0) target = $region37
  $region36: #{_detection_model_jit.1} parent=0 // pred_region
    _
  $region37: #{_detection_model_jit.1} parent=0 // pred_fallthru
    _

</llo_original>
